<compile_context>
chip_gen: v7x
topology: tpu7x:2x2x1
jax: 0.10.0
libtpu: 0.0.40
codegen_flags: <defaults>
</compile_context>

<pallas_src>
import math

import jax
import jax.numpy as jnp
from jax.experimental import pallas as pl
from jax.experimental.pallas import tpu as pltpu

EPS_NORM = 1e-12      # F.normalize eps
EPS_BN = 1e-5         # BatchNorm1d eps
EPS_DIFFPOOL = 1e-15  # torch_geometric dense_diff_pool EPS

_MIB = 1024 * 1024


def _f32_bytes(*shapes):
    return sum(4 * math.prod(s) for s in shapes)


def _vmem_limit(estimate_bytes):
    # generous headroom; floor covers compiler temps, cap stays valid on v7x (64 MiB)
    return int(min(64 * _MIB, max(3 * estimate_bytes + 2 * _MIB, 32 * _MIB)))


def _identity(n, dtype=jnp.float32):
    r = jax.lax.broadcasted_iota(jnp.int32, (n, n), 0)
    c = jax.lax.broadcasted_iota(jnp.int32, (n, n), 1)
    return (r == c).astype(dtype)


# ----------------------------------------------------------------------------
# GCN stack on in-VMEM values (used inside both fused kernels).
#   GraphConv(add_self folded into adj_hat, bias, L2-normalize) for every layer;
#   ReLU + fresh training-mode BatchNorm1d(num_nodes) for every layer but the last.
# ----------------------------------------------------------------------------
def _gcn_stack(x, adj_hat, weights, biases):
    B, N = x.shape[0], x.shape[1]
    num_layers = len(weights)
    for li in range(num_layers):
        w, b = weights[li], biases[li]          # [Fin, Fout], [1, Fout]
        # propagation (self-loop already folded into adj_hat)
        y = jnp.einsum('bnm,bmf->bnf', adj_hat, x,
                       preferred_element_type=jnp.float32)
        # one [B*N, Fin] x [Fin, Fout] MXU matmul over all rows
        fin, fout = y.shape[-1], w.shape[-1]
        y = jnp.dot(y.reshape(B * N, fin), w,
                    preferred_element_type=jnp.float32) + b
        # F.normalize(p=2, dim=2): y / max(||y||, eps) == y * min(rsqrt(ss), 1/eps)
        sumsq = jnp.sum(y * y, axis=-1, keepdims=True)
        inv = jnp.minimum(jax.lax.rsqrt(sumsq), 1.0 / EPS_NORM)
        y = (y * inv).reshape(B, N, fout)
        if li < num_layers - 1:
            # ReLU + fresh BatchNorm1d(num_nodes): training-mode stats over
            # (batch, feature) per node, gamma=1, beta=0, biased variance.
            y = jnp.maximum(y, 0.0)
            mean = jnp.mean(y, axis=(0, 2), keepdims=True)
            var = jnp.mean((y - mean) ** 2, axis=(0, 2), keepdims=True)
            y = (y - mean) * jax.lax.rsqrt(var + EPS_BN)
        x = y
    return x


# ----------------------------------------------------------------------------
# Fused pooling-stage kernel: pool GCN + embed GCN + dense_diff_pool in one call.
# adj is read from HBM once; everything stays in VMEM.
# ----------------------------------------------------------------------------
def _make_stage_kernel(n_pool_layers, n_embed_layers):
    def kernel(*refs):
        x_ref, adj_ref = refs[0], refs[1]
        k = 2
        pool_refs = refs[k:k + 2 * n_pool_layers]; k += 2 * n_pool_layers
        emb_refs = refs[k:k + 2 * n_embed_layers]; k += 2 * n_embed_layers
        xo_ref, ao_ref, loss_ref = refs[k], refs[k + 1], refs[k + 2]

        x = x_ref[...]        # [B, N, Fin]
        adj = adj_ref[...]    # [B, N, N]
        B, N = x.shape[0], x.shape[1]

        # add_self folded into the shared adjacency once
        adj_hat = adj + _identity(N)[None, :, :]

        pw = [pool_refs[2 * i][...] for i in range(n_pool_layers)]
        pb = [pool_refs[2 * i + 1][...] for i in range(n_pool_layers)]
        ew = [emb_refs[2 * i][...] for i in range(n_embed_layers)]
        eb = [emb_refs[2 * i + 1][...] for i in range(n_embed_layers)]

        s = _gcn_stack(x, adj_hat, pw, pb)     # cluster assignments [B, N, C]
        xe = _gcn_stack(x, adj_hat, ew, eb)    # node embeddings     [B, N, Femb]

        # ---- dense_diff_pool -------------------------------------------------
        s = s - jnp.max(s, axis=-1, keepdims=True)
        es = jnp.exp(s)
        s = es / jnp.sum(es, axis=-1, keepdims=True)

        xo_ref[...] = jnp.einsum('bnc,bnf->bcf', s, xe,
                                 preferred_element_type=jnp.float32)
        a_s = jnp.einsum('bnm,bmc->bnc', adj, s,
                         preferred_element_type=jnp.float32)
        ao_ref[...] = jnp.einsum('bnc,bnk->bck', s, a_s,
                                 preferred_element_type=jnp.float32)

        # link loss residual computed directly (exact for non-symmetric adj,
        # no catastrophic cancellation of the expanded Frobenius identity)
        diff = adj - jnp.einsum('bnc,bmc->bnm', s, s,
                                preferred_element_type=jnp.float32)
        link_p = jnp.sum(jnp.sum(diff * diff, axis=2), axis=1, keepdims=True)  # [B,1]
        ent_p = jnp.sum(jnp.sum(-s * jnp.log(s + EPS_DIFFPOOL), axis=2),
                        axis=1, keepdims=True)                                 # [B,1]
        # merged loss output: column 0 = ||A - SS^T||^2 partial, column 1 = entropy
        lane = jax.lax.broadcasted_iota(jnp.int32, (B, 2), 1)
        loss_ref[...] = jnp.where(lane == 0, link_p, ent_p)
    return kernel


def diffpool_stage_fused(pool_params, embed_params, x, adj):
    """One pooling stage (pool GCN, embed GCN, dense_diff_pool) as one pallas_call."""
    B, N, Fin = x.shape
    C = pool_params[-1][0].shape[1]
    Femb = embed_params[-1][0].shape[1]

    inputs = [x, adj]
    for (w, b) in list(pool_params) + list(embed_params):
        inputs.append(w)
        inputs.append(b.reshape(1, -1))

    vmem = pltpu.MemorySpace.VMEM
    in_specs = [pl.BlockSpec(memory_space=vmem) for _ in inputs]
    out_shape = (
        jax.ShapeDtypeStruct((B, C, Femb), jnp.float32),   # pooled features
        jax.ShapeDtypeStruct((B, C, C), jnp.float32),      # pooled adjacency
        jax.ShapeDtypeStruct((B, 2), jnp.float32),          # [link_sq, entropy] partials
    )
    out_specs = tuple(pl.BlockSpec(memory_space=vmem) for _ in range(3))

    # VMEM budget: IO + adj_hat + diff/gram + a handful of live activations
    maxf = max([Fin, C, Femb] + [w.shape[1] for w, _ in list(pool_params) + list(embed_params)])
    est = (_f32_bytes(x.shape, adj.shape, (B, C, Femb), (B, C, C))
           + 3 * _f32_bytes(adj.shape) + 8 * _f32_bytes((B, N, maxf)))

    def _stack_flops(params):
        f, fin = 0, Fin
        for w, _ in params:
            f += 2 * B * N * N * fin + 2 * B * N * fin * w.shape[1]
            fin = w.shape[1]
        return f

    flops = (_stack_flops(pool_params) + _stack_flops(embed_params)
             + 2 * B * N * N * C            # adj @ s
             + 2 * B * N * C * Femb         # s^T x
             + 2 * B * N * C * C            # s^T (adj s)
             + 2 * B * N * N * C)           # s s^T
    transcendentals = 2 * B * N * C + B * N * (len(pool_params) + len(embed_params))
    bytes_accessed = (_f32_bytes(*(a.shape for a in inputs))
                      + _f32_bytes((B, C, Femb), (B, C, C), (B, 2)))
    ce = pl.CostEstimate(flops=int(flops), transcendentals=int(transcendentals),
                         bytes_accessed=int(bytes_accessed))

    xo, ao, losses = pl.pallas_call(
        _make_stage_kernel(len(pool_params), len(embed_params)),
        out_shape=out_shape,
        in_specs=in_specs,
        out_specs=out_specs,
        compiler_params=pltpu.CompilerParams(vmem_limit_bytes=_vmem_limit(est)),
        cost_estimate=ce,
    )(*inputs)

    link_loss = jnp.sqrt(jnp.sum(losses[:, 0])) / jnp.float32(B * N * N)
    ent_loss = jnp.sum(losses[:, 1]) / jnp.float32(B * N)
    return xo, ao, link_loss, ent_loss


# ----------------------------------------------------------------------------
# Final embed-GCN + readout (mean over nodes + log_softmax), fused in one call.
# ----------------------------------------------------------------------------
def _make_readout_kernel(num_layers):
    def kernel(*refs):
        x_ref, adj_ref = refs[0], refs[1]
        wb = refs[2:2 + 2 * num_layers]
        o_ref = refs[2 + 2 * num_layers]

        x = x_ref[...]
        adj = adj_ref[...]
        N = x.shape[1]
        adj_hat = adj + _identity(N)[None, :, :]

        ws = [wb[2 * i][...] for i in range(num_layers)]
        bs = [wb[2 * i + 1][...] for i in range(num_layers)]
        y = _gcn_stack(x, adj_hat, ws, bs)                 # [B, N, Fout]

        m = jnp.mean(y, axis=1)                             # mean over nodes: [B, Fout]
        m = m - jnp.max(m, axis=-1, keepdims=True)
        lse = jnp.log(jnp.sum(jnp.exp(m), axis=-1, keepdims=True))
        o_ref[...] = m - lse                                # log_softmax
    return kernel


def gcn_readout_fused(params, x, adj):
    B, N, Fin = x.shape
    Fout = params[-1][0].shape[1]

    inputs = [x, adj]
    for (w, b) in params:
        inputs.append(w)
        inputs.append(b.reshape(1, -1))

    vmem = pltpu.MemorySpace.VMEM
    maxf = max([Fin, Fout] + [w.shape[1] for w, _ in params])
    est = (_f32_bytes(x.shape, adj.shape, (B, Fout))
           + 2 * _f32_bytes(adj.shape) + 8 * _f32_bytes((B, N, maxf)))

    fin, flops = Fin, 0
    for w, _ in params:
        flops += 2 * B * N * N * fin + 2 * B * N * fin * w.shape[1]
        fin = w.shape[1]
    ce = pl.CostEstimate(
        flops=int(flops),
        transcendentals=int(B * Fout + B * N * len(params)),
        bytes_accessed=int(_f32_bytes(*(a.shape for a in inputs)) + _f32_bytes((B, Fout))))

    return pl.pallas_call(
        _make_readout_kernel(len(params)),
        out_shape=jax.ShapeDtypeStruct((B, Fout), jnp.float32),
        in_specs=[pl.BlockSpec(memory_space=vmem) for _ in inputs],
        out_specs=pl.BlockSpec(memory_space=vmem),
        compiler_params=pltpu.CompilerParams(vmem_limit_bytes=_vmem_limit(est)),
        cost_estimate=ce,
    )(*inputs)


# ----------------------------------------------------------------------------
# Parameter init (deterministic; mirrors kaiming_uniform_ relu gain + zero bias)
# ----------------------------------------------------------------------------
def kaiming_uniform(key, shape):
    fan_in = shape[0]
    bound = (6.0 / fan_in) ** 0.5
    return jax.random.uniform(key, shape, jnp.float32, -bound, bound)


def init_gcn(key, in_dim, hidden_dim, emb_dim, n_layers):
    keys = jax.random.split(key, max(n_layers, 2))
    params = [(kaiming_uniform(keys[0], (in_dim, hidden_dim)),
               jnp.zeros((hidden_dim,), jnp.float32))]
    for i in range(n_layers - 2):
        params.append((kaiming_uniform(keys[1 + i], (hidden_dim, hidden_dim)),
                       jnp.zeros((hidden_dim,), jnp.float32)))
    params.append((kaiming_uniform(keys[-1], (hidden_dim, emb_dim)),
                   jnp.zeros((emb_dim,), jnp.float32)))
    return params


def init_diffpool(key, num_features, num_pools, hidden_dims, embedding_dims, num_layers):
    dims = [num_features] + list(embedding_dims)
    pool_params, embed_params = [], []
    for i in range(num_pools):
        kp, ke, key = jax.random.split(key, 3)
        pool_params.append(init_gcn(kp, dims[i], hidden_dims[i], dims[i + 1], num_layers[i]))
        embed_params.append(init_gcn(ke, dims[i], hidden_dims[i], dims[i + 1], num_layers[i]))
    return pool_params, embed_params


# ----------------------------------------------------------------------------
# DiffPool forward: (num_pools-1) fused stage kernels + one fused readout kernel.
# At num_pools=2 this is 2 pallas_calls total.
# ----------------------------------------------------------------------------
def diffpool_forward(pool_params, embed_params, x, adj):
    lp_loss = jnp.float32(0.0)
    entropy_loss = jnp.float32(0.0)
    num_pools = len(embed_params)
    for i in range(num_pools - 1):
        x, adj, l, e = diffpool_stage_fused(pool_params[i], embed_params[i], x, adj)
        lp_loss = lp_loss + l
        entropy_loss = entropy_loss + e
    out = gcn_readout_fused(embed_params[-1], x, adj)
    return out, lp_loss, entropy_loss


# ----------------------------------------------------------------------------
# Pure-JAX reference (for correctness check only)
# ----------------------------------------------------------------------------
def _ref_gcn(params, x, adj):
    for li, (w, b) in enumerate(params):
        y = jnp.einsum('bnm,bmf->bnf', adj, x) + x
        y = jnp.einsum('bnf,fg->bng', y, w) + b
        n = jnp.sqrt(jnp.sum(y * y, axis=-1, keepdims=True))
        y = y / jnp.maximum(n, EPS_NORM)
        if li < len(params) - 1:
            y = jnp.maximum(y, 0.0)
            mean = jnp.mean(y, axis=(0, 2), keepdims=True)
            var = jnp.mean((y - mean) ** 2, axis=(0, 2), keepdims=True)
            y = (y - mean) / jnp.sqrt(var + EPS_BN)
        x = y
    return x


def _ref_diff_pool(x, adj, s):
    s = jax.nn.softmax(s, axis=-1)
    xo = jnp.einsum('bnc,bnf->bcf', s, x)
    ao = jnp.einsum('bnc,bnm,bmk->bck', s, adj, s)
    diff = adj - jnp.einsum('bnc,bmc->bnm', s, s)
    link = jnp.sqrt(jnp.sum(diff * diff)) / adj.size
    ent = jnp.mean(jnp.sum(-s * jnp.log(s + EPS_DIFFPOOL), axis=-1))
    return xo, ao, link, ent


def _ref_forward(pool_params, embed_params, x, adj):
    lp, ent = jnp.float32(0.0), jnp.float32(0.0)
    for i in range(len(embed_params) - 1):
        s = _ref_gcn(pool_params[i], x, adj)
        xe = _ref_gcn(embed_params[i], x, adj)
        x, adj, l, e = _ref_diff_pool(xe, adj, s)
        lp, ent = lp + l, ent + e
    x = _ref_gcn(embed_params[-1], x, adj)
    m = jnp.mean(x, axis=1)
    return jax.nn.log_softmax(m, axis=-1), lp, ent


# ----------------------------------------------------------------------------
if __name__ == "__main__":
    # small, DiffPool-consistent shapes
    B = 2                 # batch
    N = 16                # nodes
    num_features = 8
    num_pools = 2
    hidden_dims = [16, 16]
    embedding_dims = [8, 4]   # cluster count after pool 0 = 8; final classes = 4
    num_layers = [3, 2]

    key = jax.random.PRNGKey(0)
    kx, ka, kp = jax.random.split(key, 3)
    x = jax.random.normal(kx, (B, N, num_features), jnp.float32)
    adj = jax.random.uniform(ka, (B, N, N), jnp.float32)
    adj = 0.5 * (adj + jnp.transpose(adj, (0, 2, 1)))    # symmetric dense adjacency

    pool_params, embed_params = init_diffpool(
        kp, num_features, num_pools, hidden_dims, embedding_dims, num_layers)

    fwd = jax.jit(diffpool_forward)
    logp, lp_loss, ent_loss = fwd(pool_params, embed_params, x, adj)
    jax.block_until_ready((logp, lp_loss, ent_loss))

    # correctness vs pure-JAX reference of the PyTorch semantics
    ref_logp, ref_lp, ref_ent = _ref_forward(pool_params, embed_params, x, adj)
    assert logp.shape == (B, embedding_dims[-1])
    assert bool(jnp.all(jnp.isfinite(logp)))
    assert bool(jnp.allclose(logp, ref_logp, rtol=2e-3, atol=2e-3))
    assert bool(jnp.allclose(lp_loss, ref_lp, rtol=2e-3, atol=2e-3))
    assert bool(jnp.allclose(ent_loss, ref_ent, rtol=2e-3, atol=2e-3))
    print("KERNEL_OK")
</pallas_src>

<mosaic_0001>
module attributes {stable_mosaic.version = 11 : i64} {
  func.func @kernel(%arg0: memref<2x16x8xf32, #tpu.memory_space<vmem>>, %arg1: memref<2x16x16xf32, #tpu.memory_space<vmem>>, %arg2: memref<8x16xf32, #tpu.memory_space<vmem>>, %arg3: memref<1x16xf32, #tpu.memory_space<vmem>>, %arg4: memref<16x16xf32, #tpu.memory_space<vmem>>, %arg5: memref<1x16xf32, #tpu.memory_space<vmem>>, %arg6: memref<16x8xf32, #tpu.memory_space<vmem>>, %arg7: memref<1x8xf32, #tpu.memory_space<vmem>>, %arg8: memref<8x16xf32, #tpu.memory_space<vmem>>, %arg9: memref<1x16xf32, #tpu.memory_space<vmem>>, %arg10: memref<16x16xf32, #tpu.memory_space<vmem>>, %arg11: memref<1x16xf32, #tpu.memory_space<vmem>>, %arg12: memref<16x8xf32, #tpu.memory_space<vmem>>, %arg13: memref<1x8xf32, #tpu.memory_space<vmem>>, %arg14: memref<2x8x8xf32, #tpu.memory_space<vmem>>, %arg15: memref<2x8x8xf32, #tpu.memory_space<vmem>>, %arg16: memref<2x2xf32, #tpu.memory_space<vmem>>) attributes {dimension_semantics = [], scalar_prefetch = 0 : i64, scratch_operands = 0 : i64, tpu.core_type = #tpu.core_type<tc>} {
    %c0 = arith.constant 0 : index
    %c0_0 = arith.constant 0 : index
    %c0_1 = arith.constant 0 : index
    %0 = vector.load %arg0[%c0, %c0_0, %c0_1] : memref<2x16x8xf32, #tpu.memory_space<vmem>>, vector<2x16x8xf32>
    %c0_2 = arith.constant 0 : index
    %c0_3 = arith.constant 0 : index
    %c0_4 = arith.constant 0 : index
    %1 = vector.load %arg1[%c0_2, %c0_3, %c0_4] : memref<2x16x16xf32, #tpu.memory_space<vmem>>, vector<2x16x16xf32>
    %2 = tpu.iota {dimensions = array<i32: 0>} : vector<16x16xi32>
    %3 = tpu.iota {dimensions = array<i32: 1>} : vector<16x16xi32>
    %4 = arith.cmpi eq, %2, %3 : vector<16x16xi32>
    %5 = arith.extui %4 : vector<16x16xi1> to vector<16x16xi32>
    %6 = arith.sitofp %5 : vector<16x16xi32> to vector<16x16xf32>
    %7 = vector.shape_cast %6 : vector<16x16xf32> to vector<1x16x16xf32>
    %8 = vector.broadcast %7 : vector<1x16x16xf32> to vector<2x16x16xf32>
    %9 = arith.addf %1, %8 : vector<2x16x16xf32>
    %c0_5 = arith.constant 0 : index
    %c0_6 = arith.constant 0 : index
    %10 = vector.load %arg2[%c0_5, %c0_6] : memref<8x16xf32, #tpu.memory_space<vmem>>, vector<8x16xf32>
    %c0_7 = arith.constant 0 : index
    %c0_8 = arith.constant 0 : index
    %11 = vector.load %arg4[%c0_7, %c0_8] : memref<16x16xf32, #tpu.memory_space<vmem>>, vector<16x16xf32>
    %c0_9 = arith.constant 0 : index
    %c0_10 = arith.constant 0 : index
    %12 = vector.load %arg6[%c0_9, %c0_10] : memref<16x8xf32, #tpu.memory_space<vmem>>, vector<16x8xf32>
    %c0_11 = arith.constant 0 : index
    %c0_12 = arith.constant 0 : index
    %13 = vector.load %arg3[%c0_11, %c0_12] : memref<1x16xf32, #tpu.memory_space<vmem>>, vector<1x16xf32>
    %c0_13 = arith.constant 0 : index
    %c0_14 = arith.constant 0 : index
    %14 = vector.load %arg5[%c0_13, %c0_14] : memref<1x16xf32, #tpu.memory_space<vmem>>, vector<1x16xf32>
    %c0_15 = arith.constant 0 : index
    %c0_16 = arith.constant 0 : index
    %15 = vector.load %arg7[%c0_15, %c0_16] : memref<1x8xf32, #tpu.memory_space<vmem>>, vector<1x8xf32>
    %c0_17 = arith.constant 0 : index
    %c0_18 = arith.constant 0 : index
    %16 = vector.load %arg8[%c0_17, %c0_18] : memref<8x16xf32, #tpu.memory_space<vmem>>, vector<8x16xf32>
    %c0_19 = arith.constant 0 : index
    %c0_20 = arith.constant 0 : index
    %17 = vector.load %arg10[%c0_19, %c0_20] : memref<16x16xf32, #tpu.memory_space<vmem>>, vector<16x16xf32>
    %c0_21 = arith.constant 0 : index
    %c0_22 = arith.constant 0 : index
    %18 = vector.load %arg12[%c0_21, %c0_22] : memref<16x8xf32, #tpu.memory_space<vmem>>, vector<16x8xf32>
    %c0_23 = arith.constant 0 : index
    %c0_24 = arith.constant 0 : index
    %19 = vector.load %arg9[%c0_23, %c0_24] : memref<1x16xf32, #tpu.memory_space<vmem>>, vector<1x16xf32>
    %c0_25 = arith.constant 0 : index
    %c0_26 = arith.constant 0 : index
    %20 = vector.load %arg11[%c0_25, %c0_26] : memref<1x16xf32, #tpu.memory_space<vmem>>, vector<1x16xf32>
    %c0_27 = arith.constant 0 : index
    %c0_28 = arith.constant 0 : index
    %21 = vector.load %arg13[%c0_27, %c0_28] : memref<1x8xf32, #tpu.memory_space<vmem>>, vector<1x8xf32>
    "tpu.trace_start"() <{level = 10 : i32, message = "bnm,bmf->bnf"}> : () -> ()
    %cst = arith.constant dense<0.000000e+00> : vector<2x16x8xf32>
    %22 = tpu.matmul %9, %0, %cst {dimension_numbers = #tpu.dot_dimension_numbers<[2], [1], [1], [2], [0, 0, 0, 1, 1, 2], [0], [0]>} : vector<2x16x16xf32>, vector<2x16x8xf32>, vector<2x16x8xf32> -> vector<2x16x8xf32>
    "tpu.trace_stop"() : () -> ()
    %23 = vector.shape_cast %22 : vector<2x16x8xf32> to vector<32x8xf32>
    %cst_29 = arith.constant dense<0.000000e+00> : vector<32x16xf32>
    %24 = tpu.matmul %23, %10, %cst_29 {dimension_numbers = #tpu.dot_dimension_numbers<[1], [0], [0], [1], [0, 0, 1, 1], [], []>} : vector<32x8xf32>, vector<8x16xf32>, vector<32x16xf32> -> vector<32x16xf32>
    %25 = vector.broadcast %13 : vector<1x16xf32> to vector<32x16xf32>
    %26 = arith.addf %24, %25 : vector<32x16xf32>
    %27 = arith.mulf %26, %26 : vector<32x16xf32>
    %cst_30 = arith.constant dense<0.000000e+00> : vector<32xf32>
    %28 = vector.multi_reduction <add>, %27, %cst_30 [1] : vector<32x16xf32> to vector<32xf32>
    %29 = vector.shape_cast %28 : vector<32xf32> to vector<32x1xf32>
    %30 = math.rsqrt %29 : vector<32x1xf32>
    %cst_31 = arith.constant 9.99999995E+11 : f32
    %31 = vector.broadcast %cst_31 : f32 to vector<32x1xf32>
    %32 = arith.minimumf %30, %31 : vector<32x1xf32>
    %33 = vector.broadcast %32 : vector<32x1xf32> to vector<32x16xf32>
    %34 = arith.mulf %26, %33 : vector<32x16xf32>
    %35 = vector.shape_cast %34 : vector<32x16xf32> to vector<2x16x16xf32>
    %cst_32 = arith.constant 0.000000e+00 : f32
    %36 = vector.broadcast %cst_32 : f32 to vector<2x16x16xf32>
    %37 = arith.maximumf %35, %36 : vector<2x16x16xf32>
    %cst_33 = arith.constant dense<0.000000e+00> : vector<16xf32>
    %38 = vector.multi_reduction <add>, %37, %cst_33 [0, 2] : vector<2x16x16xf32> to vector<16xf32>
    %39 = vector.shape_cast %38 : vector<16xf32> to vector<1x16x1xf32>
    %cst_34 = arith.constant 3.200000e+01 : f32
    %40 = vector.broadcast %cst_34 : f32 to vector<1x16x1xf32>
    %41 = arith.divf %39, %40 : vector<1x16x1xf32>
    %42 = vector.broadcast %41 : vector<1x16x1xf32> to vector<2x16x16xf32>
    %43 = arith.subf %37, %42 : vector<2x16x16xf32>
    %44 = arith.mulf %43, %43 : vector<2x16x16xf32>
    %cst_35 = arith.constant dense<0.000000e+00> : vector<16xf32>
    %45 = vector.multi_reduction <add>, %44, %cst_35 [0, 2] : vector<2x16x16xf32> to vector<16xf32>
    %46 = vector.shape_cast %45 : vector<16xf32> to vector<1x16x1xf32>
    %cst_36 = arith.constant 3.200000e+01 : f32
    %47 = vector.broadcast %cst_36 : f32 to vector<1x16x1xf32>
    %48 = arith.divf %46, %47 : vector<1x16x1xf32>
    %49 = vector.broadcast %41 : vector<1x16x1xf32> to vector<2x16x16xf32>
    %50 = arith.subf %37, %49 : vector<2x16x16xf32>
    %cst_37 = arith.constant 9.99999974E-6 : f32
    %51 = vector.broadcast %cst_37 : f32 to vector<1x16x1xf32>
    %52 = arith.addf %48, %51 : vector<1x16x1xf32>
    %53 = math.rsqrt %52 : vector<1x16x1xf32>
    %54 = vector.broadcast %53 : vector<1x16x1xf32> to vector<2x16x16xf32>
    %55 = arith.mulf %50, %54 : vector<2x16x16xf32>
    "tpu.trace_start"() <{level = 10 : i32, message = "bnm,bmf->bnf"}> : () -> ()
    %cst_38 = arith.constant dense<0.000000e+00> : vector<2x16x16xf32>
    %56 = tpu.matmul %9, %55, %cst_38 {dimension_numbers = #tpu.dot_dimension_numbers<[2], [1], [1], [2], [0, 0, 0, 1, 1, 2], [0], [0]>} : vector<2x16x16xf32>, vector<2x16x16xf32>, vector<2x16x16xf32> -> vector<2x16x16xf32>
    "tpu.trace_stop"() : () -> ()
    %57 = vector.shape_cast %56 : vector<2x16x16xf32> to vector<32x16xf32>
    %cst_39 = arith.constant dense<0.000000e+00> : vector<32x16xf32>
    %58 = tpu.matmul %57, %11, %cst_39 {dimension_numbers = #tpu.dot_dimension_numbers<[1], [0], [0], [1], [0, 0, 1, 1], [], []>} : vector<32x16xf32>, vector<16x16xf32>, vector<32x16xf32> -> vector<32x16xf32>
    %59 = vector.broadcast %14 : vector<1x16xf32> to vector<32x16xf32>
    %60 = arith.addf %58, %59 : vector<32x16xf32>
    %61 = arith.mulf %60, %60 : vector<32x16xf32>
    %cst_40 = arith.constant dense<0.000000e+00> : vector<32xf32>
    %62 = vector.multi_reduction <add>, %61, %cst_40 [1] : vector<32x16xf32> to vector<32xf32>
    %63 = vector.shape_cast %62 : vector<32xf32> to vector<32x1xf32>
    %64 = math.rsqrt %63 : vector<32x1xf32>
    %cst_41 = arith.constant 9.99999995E+11 : f32
    %65 = vector.broadcast %cst_41 : f32 to vector<32x1xf32>
    %66 = arith.minimumf %64, %65 : vector<32x1xf32>
    %67 = vector.broadcast %66 : vector<32x1xf32> to vector<32x16xf32>
    %68 = arith.mulf %60, %67 : vector<32x16xf32>
    %69 = vector.shape_cast %68 : vector<32x16xf32> to vector<2x16x16xf32>
    %cst_42 = arith.constant 0.000000e+00 : f32
    %70 = vector.broadcast %cst_42 : f32 to vector<2x16x16xf32>
    %71 = arith.maximumf %69, %70 : vector<2x16x16xf32>
    %cst_43 = arith.constant dense<0.000000e+00> : vector<16xf32>
    %72 = vector.multi_reduction <add>, %71, %cst_43 [0, 2] : vector<2x16x16xf32> to vector<16xf32>
    %73 = vector.shape_cast %72 : vector<16xf32> to vector<1x16x1xf32>
    %cst_44 = arith.constant 3.200000e+01 : f32
    %74 = vector.broadcast %cst_44 : f32 to vector<1x16x1xf32>
    %75 = arith.divf %73, %74 : vector<1x16x1xf32>
    %76 = vector.broadcast %75 : vector<1x16x1xf32> to vector<2x16x16xf32>
    %77 = arith.subf %71, %76 : vector<2x16x16xf32>
    %78 = arith.mulf %77, %77 : vector<2x16x16xf32>
    %cst_45 = arith.constant dense<0.000000e+00> : vector<16xf32>
    %79 = vector.multi_reduction <add>, %78, %cst_45 [0, 2] : vector<2x16x16xf32> to vector<16xf32>
    %80 = vector.shape_cast %79 : vector<16xf32> to vector<1x16x1xf32>
    %cst_46 = arith.constant 3.200000e+01 : f32
    %81 = vector.broadcast %cst_46 : f32 to vector<1x16x1xf32>
    %82 = arith.divf %80, %81 : vector<1x16x1xf32>
    %83 = vector.broadcast %75 : vector<1x16x1xf32> to vector<2x16x16xf32>
    %84 = arith.subf %71, %83 : vector<2x16x16xf32>
    %cst_47 = arith.constant 9.99999974E-6 : f32
    %85 = vector.broadcast %cst_47 : f32 to vector<1x16x1xf32>
    %86 = arith.addf %82, %85 : vector<1x16x1xf32>
    %87 = math.rsqrt %86 : vector<1x16x1xf32>
    %88 = vector.broadcast %87 : vector<1x16x1xf32> to vector<2x16x16xf32>
    %89 = arith.mulf %84, %88 : vector<2x16x16xf32>
    "tpu.trace_start"() <{level = 10 : i32, message = "bnm,bmf->bnf"}> : () -> ()
    %cst_48 = arith.constant dense<0.000000e+00> : vector<2x16x16xf32>
    %90 = tpu.matmul %9, %89, %cst_48 {dimension_numbers = #tpu.dot_dimension_numbers<[2], [1], [1], [2], [0, 0, 0, 1, 1, 2], [0], [0]>} : vector<2x16x16xf32>, vector<2x16x16xf32>, vector<2x16x16xf32> -> vector<2x16x16xf32>
    "tpu.trace_stop"() : () -> ()
    %91 = vector.shape_cast %90 : vector<2x16x16xf32> to vector<32x16xf32>
    %cst_49 = arith.constant dense<0.000000e+00> : vector<32x8xf32>
    %92 = tpu.matmul %91, %12, %cst_49 {dimension_numbers = #tpu.dot_dimension_numbers<[1], [0], [0], [1], [0, 0, 1, 1], [], []>} : vector<32x16xf32>, vector<16x8xf32>, vector<32x8xf32> -> vector<32x8xf32>
    %93 = vector.broadcast %15 : vector<1x8xf32> to vector<32x8xf32>
    %94 = arith.addf %92, %93 : vector<32x8xf32>
    %95 = arith.mulf %94, %94 : vector<32x8xf32>
    %cst_50 = arith.constant dense<0.000000e+00> : vector<32xf32>
    %96 = vector.multi_reduction <add>, %95, %cst_50 [1] : vector<32x8xf32> to vector<32xf32>
    %97 = vector.shape_cast %96 : vector<32xf32> to vector<32x1xf32>
    %98 = math.rsqrt %97 : vector<32x1xf32>
    %cst_51 = arith.constant 9.99999995E+11 : f32
    %99 = vector.broadcast %cst_51 : f32 to vector<32x1xf32>
    %100 = arith.minimumf %98, %99 : vector<32x1xf32>
    %101 = vector.broadcast %100 : vector<32x1xf32> to vector<32x8xf32>
    %102 = arith.mulf %94, %101 : vector<32x8xf32>
    %103 = vector.shape_cast %102 : vector<32x8xf32> to vector<2x16x8xf32>
    "tpu.trace_start"() <{level = 10 : i32, message = "bnm,bmf->bnf"}> : () -> ()
    %cst_52 = arith.constant dense<0.000000e+00> : vector<2x16x8xf32>
    %104 = tpu.matmul %9, %0, %cst_52 {dimension_numbers = #tpu.dot_dimension_numbers<[2], [1], [1], [2], [0, 0, 0, 1, 1, 2], [0], [0]>} : vector<2x16x16xf32>, vector<2x16x8xf32>, vector<2x16x8xf32> -> vector<2x16x8xf32>
    "tpu.trace_stop"() : () -> ()
    %105 = vector.shape_cast %104 : vector<2x16x8xf32> to vector<32x8xf32>
    %cst_53 = arith.constant dense<0.000000e+00> : vector<32x16xf32>
    %106 = tpu.matmul %105, %16, %cst_53 {dimension_numbers = #tpu.dot_dimension_numbers<[1], [0], [0], [1], [0, 0, 1, 1], [], []>} : vector<32x8xf32>, vector<8x16xf32>, vector<32x16xf32> -> vector<32x16xf32>
    %107 = vector.broadcast %19 : vector<1x16xf32> to vector<32x16xf32>
    %108 = arith.addf %106, %107 : vector<32x16xf32>
    %109 = arith.mulf %108, %108 : vector<32x16xf32>
    %cst_54 = arith.constant dense<0.000000e+00> : vector<32xf32>
    %110 = vector.multi_reduction <add>, %109, %cst_54 [1] : vector<32x16xf32> to vector<32xf32>
    %111 = vector.shape_cast %110 : vector<32xf32> to vector<32x1xf32>
    %112 = math.rsqrt %111 : vector<32x1xf32>
    %cst_55 = arith.constant 9.99999995E+11 : f32
    %113 = vector.broadcast %cst_55 : f32 to vector<32x1xf32>
    %114 = arith.minimumf %112, %113 : vector<32x1xf32>
    %115 = vector.broadcast %114 : vector<32x1xf32> to vector<32x16xf32>
    %116 = arith.mulf %108, %115 : vector<32x16xf32>
    %117 = vector.shape_cast %116 : vector<32x16xf32> to vector<2x16x16xf32>
    %cst_56 = arith.constant 0.000000e+00 : f32
    %118 = vector.broadcast %cst_56 : f32 to vector<2x16x16xf32>
    %119 = arith.maximumf %117, %118 : vector<2x16x16xf32>
    %cst_57 = arith.constant dense<0.000000e+00> : vector<16xf32>
    %120 = vector.multi_reduction <add>, %119, %cst_57 [0, 2] : vector<2x16x16xf32> to vector<16xf32>
    %121 = vector.shape_cast %120 : vector<16xf32> to vector<1x16x1xf32>
    %cst_58 = arith.constant 3.200000e+01 : f32
    %122 = vector.broadcast %cst_58 : f32 to vector<1x16x1xf32>
    %123 = arith.divf %121, %122 : vector<1x16x1xf32>
    %124 = vector.broadcast %123 : vector<1x16x1xf32> to vector<2x16x16xf32>
    %125 = arith.subf %119, %124 : vector<2x16x16xf32>
    %126 = arith.mulf %125, %125 : vector<2x16x16xf32>
    %cst_59 = arith.constant dense<0.000000e+00> : vector<16xf32>
    %127 = vector.multi_reduction <add>, %126, %cst_59 [0, 2] : vector<2x16x16xf32> to vector<16xf32>
    %128 = vector.shape_cast %127 : vector<16xf32> to vector<1x16x1xf32>
    %cst_60 = arith.constant 3.200000e+01 : f32
    %129 = vector.broadcast %cst_60 : f32 to vector<1x16x1xf32>
    %130 = arith.divf %128, %129 : vector<1x16x1xf32>
    %131 = vector.broadcast %123 : vector<1x16x1xf32> to vector<2x16x16xf32>
    %132 = arith.subf %119, %131 : vector<2x16x16xf32>
    %cst_61 = arith.constant 9.99999974E-6 : f32
    %133 = vector.broadcast %cst_61 : f32 to vector<1x16x1xf32>
    %134 = arith.addf %130, %133 : vector<1x16x1xf32>
    %135 = math.rsqrt %134 : vector<1x16x1xf32>
    %136 = vector.broadcast %135 : vector<1x16x1xf32> to vector<2x16x16xf32>
    %137 = arith.mulf %132, %136 : vector<2x16x16xf32>
    "tpu.trace_start"() <{level = 10 : i32, message = "bnm,bmf->bnf"}> : () -> ()
    %cst_62 = arith.constant dense<0.000000e+00> : vector<2x16x16xf32>
    %138 = tpu.matmul %9, %137, %cst_62 {dimension_numbers = #tpu.dot_dimension_numbers<[2], [1], [1], [2], [0, 0, 0, 1, 1, 2], [0], [0]>} : vector<2x16x16xf32>, vector<2x16x16xf32>, vector<2x16x16xf32> -> vector<2x16x16xf32>
    "tpu.trace_stop"() : () -> ()
    %139 = vector.shape_cast %138 : vector<2x16x16xf32> to vector<32x16xf32>
    %cst_63 = arith.constant dense<0.000000e+00> : vector<32x16xf32>
    %140 = tpu.matmul %139, %17, %cst_63 {dimension_numbers = #tpu.dot_dimension_numbers<[1], [0], [0], [1], [0, 0, 1, 1], [], []>} : vector<32x16xf32>, vector<16x16xf32>, vector<32x16xf32> -> vector<32x16xf32>
    %141 = vector.broadcast %20 : vector<1x16xf32> to vector<32x16xf32>
    %142 = arith.addf %140, %141 : vector<32x16xf32>
    %143 = arith.mulf %142, %142 : vector<32x16xf32>
    %cst_64 = arith.constant dense<0.000000e+00> : vector<32xf32>
    %144 = vector.multi_reduction <add>, %143, %cst_64 [1] : vector<32x16xf32> to vector<32xf32>
    %145 = vector.shape_cast %144 : vector<32xf32> to vector<32x1xf32>
    %146 = math.rsqrt %145 : vector<32x1xf32>
    %cst_65 = arith.constant 9.99999995E+11 : f32
    %147 = vector.broadcast %cst_65 : f32 to vector<32x1xf32>
    %148 = arith.minimumf %146, %147 : vector<32x1xf32>
    %149 = vector.broadcast %148 : vector<32x1xf32> to vector<32x16xf32>
    %150 = arith.mulf %142, %149 : vector<32x16xf32>
    %151 = vector.shape_cast %150 : vector<32x16xf32> to vector<2x16x16xf32>
    %cst_66 = arith.constant 0.000000e+00 : f32
    %152 = vector.broadcast %cst_66 : f32 to vector<2x16x16xf32>
    %153 = arith.maximumf %151, %152 : vector<2x16x16xf32>
    %cst_67 = arith.constant dense<0.000000e+00> : vector<16xf32>
    %154 = vector.multi_reduction <add>, %153, %cst_67 [0, 2] : vector<2x16x16xf32> to vector<16xf32>
    %155 = vector.shape_cast %154 : vector<16xf32> to vector<1x16x1xf32>
    %cst_68 = arith.constant 3.200000e+01 : f32
    %156 = vector.broadcast %cst_68 : f32 to vector<1x16x1xf32>
    %157 = arith.divf %155, %156 : vector<1x16x1xf32>
    %158 = vector.broadcast %157 : vector<1x16x1xf32> to vector<2x16x16xf32>
    %159 = arith.subf %153, %158 : vector<2x16x16xf32>
    %160 = arith.mulf %159, %159 : vector<2x16x16xf32>
    %cst_69 = arith.constant dense<0.000000e+00> : vector<16xf32>
    %161 = vector.multi_reduction <add>, %160, %cst_69 [0, 2] : vector<2x16x16xf32> to vector<16xf32>
    %162 = vector.shape_cast %161 : vector<16xf32> to vector<1x16x1xf32>
    %cst_70 = arith.constant 3.200000e+01 : f32
    %163 = vector.broadcast %cst_70 : f32 to vector<1x16x1xf32>
    %164 = arith.divf %162, %163 : vector<1x16x1xf32>
    %165 = vector.broadcast %157 : vector<1x16x1xf32> to vector<2x16x16xf32>
    %166 = arith.subf %153, %165 : vector<2x16x16xf32>
    %cst_71 = arith.constant 9.99999974E-6 : f32
    %167 = vector.broadcast %cst_71 : f32 to vector<1x16x1xf32>
    %168 = arith.addf %164, %167 : vector<1x16x1xf32>
    %169 = math.rsqrt %168 : vector<1x16x1xf32>
    %170 = vector.broadcast %169 : vector<1x16x1xf32> to vector<2x16x16xf32>
    %171 = arith.mulf %166, %170 : vector<2x16x16xf32>
    "tpu.trace_start"() <{level = 10 : i32, message = "bnm,bmf->bnf"}> : () -> ()
    %cst_72 = arith.constant dense<0.000000e+00> : vector<2x16x16xf32>
    %172 = tpu.matmul %9, %171, %cst_72 {dimension_numbers = #tpu.dot_dimension_numbers<[2], [1], [1], [2], [0, 0, 0, 1, 1, 2], [0], [0]>} : vector<2x16x16xf32>, vector<2x16x16xf32>, vector<2x16x16xf32> -> vector<2x16x16xf32>
    "tpu.trace_stop"() : () -> ()
    %173 = vector.shape_cast %172 : vector<2x16x16xf32> to vector<32x16xf32>
    %cst_73 = arith.constant dense<0.000000e+00> : vector<32x8xf32>
    %174 = tpu.matmul %173, %18, %cst_73 {dimension_numbers = #tpu.dot_dimension_numbers<[1], [0], [0], [1], [0, 0, 1, 1], [], []>} : vector<32x16xf32>, vector<16x8xf32>, vector<32x8xf32> -> vector<32x8xf32>
    %175 = vector.broadcast %21 : vector<1x8xf32> to vector<32x8xf32>
    %176 = arith.addf %174, %175 : vector<32x8xf32>
    %177 = arith.mulf %176, %176 : vector<32x8xf32>
    %cst_74 = arith.constant dense<0.000000e+00> : vector<32xf32>
    %178 = vector.multi_reduction <add>, %177, %cst_74 [1] : vector<32x8xf32> to vector<32xf32>
    %179 = vector.shape_cast %178 : vector<32xf32> to vector<32x1xf32>
    %180 = math.rsqrt %179 : vector<32x1xf32>
    %cst_75 = arith.constant 9.99999995E+11 : f32
    %181 = vector.broadcast %cst_75 : f32 to vector<32x1xf32>
    %182 = arith.minimumf %180, %181 : vector<32x1xf32>
    %183 = vector.broadcast %182 : vector<32x1xf32> to vector<32x8xf32>
    %184 = arith.mulf %176, %183 : vector<32x8xf32>
    %185 = vector.shape_cast %184 : vector<32x8xf32> to vector<2x16x8xf32>
    %cst_76 = arith.constant dense<0xFF800000> : vector<2x16xf32>
    %186 = vector.multi_reduction <maximumf>, %103, %cst_76 [2] : vector<2x16x8xf32> to vector<2x16xf32>
    %187 = vector.shape_cast %186 : vector<2x16xf32> to vector<2x16x1xf32>
    %188 = vector.broadcast %187 : vector<2x16x1xf32> to vector<2x16x8xf32>
    %189 = arith.subf %103, %188 : vector<2x16x8xf32>
    %190 = math.exp %189 : vector<2x16x8xf32>
    %cst_77 = arith.constant dense<0.000000e+00> : vector<2x16xf32>
    %191 = vector.multi_reduction <add>, %190, %cst_77 [2] : vector<2x16x8xf32> to vector<2x16xf32>
    %192 = vector.shape_cast %191 : vector<2x16xf32> to vector<2x16x1xf32>
    %193 = vector.broadcast %192 : vector<2x16x1xf32> to vector<2x16x8xf32>
    %194 = arith.divf %190, %193 : vector<2x16x8xf32>
    "tpu.trace_start"() <{level = 10 : i32, message = "bnc,bnf->bcf"}> : () -> ()
    %cst_78 = arith.constant dense<0.000000e+00> : vector<2x8x8xf32>
    %195 = tpu.matmul %194, %185, %cst_78 {dimension_numbers = #tpu.dot_dimension_numbers<[1], [1], [2], [2], [0, 0, 0, 2, 1, 2], [0], [0]>} : vector<2x16x8xf32>, vector<2x16x8xf32>, vector<2x8x8xf32> -> vector<2x8x8xf32>
    "tpu.trace_stop"() : () -> ()
    %c0_79 = arith.constant 0 : index
    %c0_80 = arith.constant 0 : index
    %c0_81 = arith.constant 0 : index
    %196 = vector.load %arg14[%c0_79, %c0_80, %c0_81] : memref<2x8x8xf32, #tpu.memory_space<vmem>>, vector<2x8x8xf32>
    tpu.vector_store %arg14[%c0_79, %c0_80, %c0_81], %195 {strides = array<i32>} : memref<2x8x8xf32, #tpu.memory_space<vmem>>, vector<2x8x8xf32>,
    "tpu.trace_start"() <{level = 10 : i32, message = "bnm,bmc->bnc"}> : () -> ()
    %cst_82 = arith.constant dense<0.000000e+00> : vector<2x16x8xf32>
    %197 = tpu.matmul %1, %194, %cst_82 {dimension_numbers = #tpu.dot_dimension_numbers<[2], [1], [1], [2], [0, 0, 0, 1, 1, 2], [0], [0]>} : vector<2x16x16xf32>, vector<2x16x8xf32>, vector<2x16x8xf32> -> vector<2x16x8xf32>
    "tpu.trace_stop"() : () -> ()
    "tpu.trace_start"() <{level = 10 : i32, message = "bnc,bnk->bck"}> : () -> ()
    %cst_83 = arith.constant dense<0.000000e+00> : vector<2x8x8xf32>
    %198 = tpu.matmul %194, %197, %cst_83 {dimension_numbers = #tpu.dot_dimension_numbers<[1], [1], [2], [2], [0, 0, 0, 2, 1, 2], [0], [0]>} : vector<2x16x8xf32>, vector<2x16x8xf32>, vector<2x8x8xf32> -> vector<2x8x8xf32>
    "tpu.trace_stop"() : () -> ()
    %c0_84 = arith.constant 0 : index
    %c0_85 = arith.constant 0 : index
    %c0_86 = arith.constant 0 : index
    %199 = vector.load %arg15[%c0_84, %c0_85, %c0_86] : memref<2x8x8xf32, #tpu.memory_space<vmem>>, vector<2x8x8xf32>
    tpu.vector_store %arg15[%c0_84, %c0_85, %c0_86], %198 {strides = array<i32>} : memref<2x8x8xf32, #tpu.memory_space<vmem>>, vector<2x8x8xf32>,
    "tpu.trace_start"() <{level = 10 : i32, message = "bnc,bmc->bnm"}> : () -> ()
    %cst_87 = arith.constant dense<0.000000e+00> : vector<2x16x16xf32>
    %200 = tpu.matmul %194, %194, %cst_87 {dimension_numbers = #tpu.dot_dimension_numbers<[2], [2], [1], [1], [0, 0, 0, 1, 1, 1], [0], [0]>} : vector<2x16x8xf32>, vector<2x16x8xf32>, vector<2x16x16xf32> -> vector<2x16x16xf32>
    "tpu.trace_stop"() : () -> ()
    %201 = arith.subf %1, %200 : vector<2x16x16xf32>
    %202 = arith.mulf %201, %201 : vector<2x16x16xf32>
    %cst_88 = arith.constant dense<0.000000e+00> : vector<2x16xf32>
    %203 = vector.multi_reduction <add>, %202, %cst_88 [2] : vector<2x16x16xf32> to vector<2x16xf32>
    %cst_89 = arith.constant dense<0.000000e+00> : vector<2xf32>
    %204 = vector.multi_reduction <add>, %203, %cst_89 [1] : vector<2x16xf32> to vector<2xf32>
    %205 = vector.shape_cast %204 : vector<2xf32> to vector<2x1xf32>
    %cst_90 = arith.constant 0.000000e+00 : f32
    %206 = vector.broadcast %cst_90 : f32 to vector<2x16x8xf32>
    %207 = arith.subf %206, %194 : vector<2x16x8xf32>
    %cst_91 = arith.constant 1.000000e-15 : f32
    %208 = vector.broadcast %cst_91 : f32 to vector<2x16x8xf32>
    %209 = arith.addf %194, %208 : vector<2x16x8xf32>
    %210 = math.log %209 : vector<2x16x8xf32>
    %211 = arith.mulf %207, %210 : vector<2x16x8xf32>
    %cst_92 = arith.constant dense<0.000000e+00> : vector<2x16xf32>
    %212 = vector.multi_reduction <add>, %211, %cst_92 [2] : vector<2x16x8xf32> to vector<2x16xf32>
    %cst_93 = arith.constant dense<0.000000e+00> : vector<2xf32>
    %213 = vector.multi_reduction <add>, %212, %cst_93 [1] : vector<2x16xf32> to vector<2xf32>
    %214 = vector.shape_cast %213 : vector<2xf32> to vector<2x1xf32>
    %215 = tpu.iota {dimensions = array<i32: 1>} : vector<2x2xi32>
    %c0_i32 = arith.constant 0 : i32
    %216 = vector.broadcast %c0_i32 : i32 to vector<2x2xi32>
    %217 = arith.cmpi eq, %215, %216 : vector<2x2xi32>
    %218 = vector.shape_cast %205 : vector<2x1xf32> to vector<2x1xf32>
    %219 = vector.broadcast %218 : vector<2x1xf32> to vector<2x2xf32>
    %220 = vector.shape_cast %214 : vector<2x1xf32> to vector<2x1xf32>
    %221 = vector.broadcast %220 : vector<2x1xf32> to vector<2x2xf32>
    %222 = arith.select %217, %219, %221 : vector<2x2xi1>, vector<2x2xf32>
    %c0_94 = arith.constant 0 : index
    %c0_95 = arith.constant 0 : index
    %223 = vector.load %arg16[%c0_94, %c0_95] : memref<2x2xf32, #tpu.memory_space<vmem>>, vector<2x2xf32>
    tpu.vector_store %arg16[%c0_94, %c0_95], %222 {strides = array<i32>} : memref<2x2xf32, #tpu.memory_space<vmem>>, vector<2x2xf32>,
    return
  }
}

module attributes {stable_mosaic.version = 11 : i64} {
  func.func @kernel(%arg0: memref<2x8x8xf32, #tpu.memory_space<vmem>>, %arg1: memref<2x8x8xf32, #tpu.memory_space<vmem>>, %arg2: memref<8x16xf32, #tpu.memory_space<vmem>>, %arg3: memref<1x16xf32, #tpu.memory_space<vmem>>, %arg4: memref<16x4xf32, #tpu.memory_space<vmem>>, %arg5: memref<1x4xf32, #tpu.memory_space<vmem>>, %arg6: memref<2x4xf32, #tpu.memory_space<vmem>>) attributes {dimension_semantics = [], scalar_prefetch = 0 : i64, scratch_operands = 0 : i64, tpu.core_type = #tpu.core_type<tc>} {
    %c0 = arith.constant 0 : index
    %c0_0 = arith.constant 0 : index
    %c0_1 = arith.constant 0 : index
    %0 = vector.load %arg0[%c0, %c0_0, %c0_1] : memref<2x8x8xf32, #tpu.memory_space<vmem>>, vector<2x8x8xf32>
    %c0_2 = arith.constant 0 : index
    %c0_3 = arith.constant 0 : index
    %c0_4 = arith.constant 0 : index
    %1 = vector.load %arg1[%c0_2, %c0_3, %c0_4] : memref<2x8x8xf32, #tpu.memory_space<vmem>>, vector<2x8x8xf32>
    %2 = tpu.iota {dimensions = array<i32: 0>} : vector<8x8xi32>
    %3 = tpu.iota {dimensions = array<i32: 1>} : vector<8x8xi32>
    %4 = arith.cmpi eq, %2, %3 : vector<8x8xi32>
    %5 = arith.extui %4 : vector<8x8xi1> to vector<8x8xi32>
    %6 = arith.sitofp %5 : vector<8x8xi32> to vector<8x8xf32>
    %7 = vector.shape_cast %6 : vector<8x8xf32> to vector<1x8x8xf32>
    %8 = vector.broadcast %7 : vector<1x8x8xf32> to vector<2x8x8xf32>
    %9 = arith.addf %1, %8 : vector<2x8x8xf32>
    %c0_5 = arith.constant 0 : index
    %c0_6 = arith.constant 0 : index
    %10 = vector.load %arg2[%c0_5, %c0_6] : memref<8x16xf32, #tpu.memory_space<vmem>>, vector<8x16xf32>
    %c0_7 = arith.constant 0 : index
    %c0_8 = arith.constant 0 : index
    %11 = vector.load %arg4[%c0_7, %c0_8] : memref<16x4xf32, #tpu.memory_space<vmem>>, vector<16x4xf32>
    %c0_9 = arith.constant 0 : index
    %c0_10 = arith.constant 0 : index
    %12 = vector.load %arg3[%c0_9, %c0_10] : memref<1x16xf32, #tpu.memory_space<vmem>>, vector<1x16xf32>
    %c0_11 = arith.constant 0 : index
    %c0_12 = arith.constant 0 : index
    %13 = vector.load %arg5[%c0_11, %c0_12] : memref<1x4xf32, #tpu.memory_space<vmem>>, vector<1x4xf32>
    "tpu.trace_start"() <{level = 10 : i32, message = "bnm,bmf->bnf"}> : () -> ()
    %cst = arith.constant dense<0.000000e+00> : vector<2x8x8xf32>
    %14 = tpu.matmul %9, %0, %cst {dimension_numbers = #tpu.dot_dimension_numbers<[2], [1], [1], [2], [0, 0, 0, 1, 1, 2], [0], [0]>} : vector<2x8x8xf32>, vector<2x8x8xf32>, vector<2x8x8xf32> -> vector<2x8x8xf32>
    "tpu.trace_stop"() : () -> ()
    %15 = vector.shape_cast %14 : vector<2x8x8xf32> to vector<16x8xf32>
    %cst_13 = arith.constant dense<0.000000e+00> : vector<16x16xf32>
    %16 = tpu.matmul %15, %10, %cst_13 {dimension_numbers = #tpu.dot_dimension_numbers<[1], [0], [0], [1], [0, 0, 1, 1], [], []>} : vector<16x8xf32>, vector<8x16xf32>, vector<16x16xf32> -> vector<16x16xf32>
    %17 = vector.broadcast %12 : vector<1x16xf32> to vector<16x16xf32>
    %18 = arith.addf %16, %17 : vector<16x16xf32>
    %19 = arith.mulf %18, %18 : vector<16x16xf32>
    %cst_14 = arith.constant dense<0.000000e+00> : vector<16xf32>
    %20 = vector.multi_reduction <add>, %19, %cst_14 [1] : vector<16x16xf32> to vector<16xf32>
    %21 = vector.shape_cast %20 : vector<16xf32> to vector<16x1xf32>
    %22 = math.rsqrt %21 : vector<16x1xf32>
    %cst_15 = arith.constant 9.99999995E+11 : f32
    %23 = vector.broadcast %cst_15 : f32 to vector<16x1xf32>
    %24 = arith.minimumf %22, %23 : vector<16x1xf32>
    %25 = vector.broadcast %24 : vector<16x1xf32> to vector<16x16xf32>
    %26 = arith.mulf %18, %25 : vector<16x16xf32>
    %27 = vector.shape_cast %26 : vector<16x16xf32> to vector<2x8x16xf32>
    %cst_16 = arith.constant 0.000000e+00 : f32
    %28 = vector.broadcast %cst_16 : f32 to vector<2x8x16xf32>
    %29 = arith.maximumf %27, %28 : vector<2x8x16xf32>
    %cst_17 = arith.constant dense<0.000000e+00> : vector<8xf32>
    %30 = vector.multi_reduction <add>, %29, %cst_17 [0, 2] : vector<2x8x16xf32> to vector<8xf32>
    %31 = vector.shape_cast %30 : vector<8xf32> to vector<1x8x1xf32>
    %cst_18 = arith.constant 3.200000e+01 : f32
    %32 = vector.broadcast %cst_18 : f32 to vector<1x8x1xf32>
    %33 = arith.divf %31, %32 : vector<1x8x1xf32>
    %34 = vector.broadcast %33 : vector<1x8x1xf32> to vector<2x8x16xf32>
    %35 = arith.subf %29, %34 : vector<2x8x16xf32>
    %36 = arith.mulf %35, %35 : vector<2x8x16xf32>
    %cst_19 = arith.constant dense<0.000000e+00> : vector<8xf32>
    %37 = vector.multi_reduction <add>, %36, %cst_19 [0, 2] : vector<2x8x16xf32> to vector<8xf32>
    %38 = vector.shape_cast %37 : vector<8xf32> to vector<1x8x1xf32>
    %cst_20 = arith.constant 3.200000e+01 : f32
    %39 = vector.broadcast %cst_20 : f32 to vector<1x8x1xf32>
    %40 = arith.divf %38, %39 : vector<1x8x1xf32>
    %41 = vector.broadcast %33 : vector<1x8x1xf32> to vector<2x8x16xf32>
    %42 = arith.subf %29, %41 : vector<2x8x16xf32>
    %cst_21 = arith.constant 9.99999974E-6 : f32
    %43 = vector.broadcast %cst_21 : f32 to vector<1x8x1xf32>
    %44 = arith.addf %40, %43 : vector<1x8x1xf32>
    %45 = math.rsqrt %44 : vector<1x8x1xf32>
    %46 = vector.broadcast %45 : vector<1x8x1xf32> to vector<2x8x16xf32>
    %47 = arith.mulf %42, %46 : vector<2x8x16xf32>
    "tpu.trace_start"() <{level = 10 : i32, message = "bnm,bmf->bnf"}> : () -> ()
    %cst_22 = arith.constant dense<0.000000e+00> : vector<2x8x16xf32>
    %48 = tpu.matmul %9, %47, %cst_22 {dimension_numbers = #tpu.dot_dimension_numbers<[2], [1], [1], [2], [0, 0, 0, 1, 1, 2], [0], [0]>} : vector<2x8x8xf32>, vector<2x8x16xf32>, vector<2x8x16xf32> -> vector<2x8x16xf32>
    "tpu.trace_stop"() : () -> ()
    %49 = vector.shape_cast %48 : vector<2x8x16xf32> to vector<16x16xf32>
    %cst_23 = arith.constant dense<0.000000e+00> : vector<16x4xf32>
    %50 = tpu.matmul %49, %11, %cst_23 {dimension_numbers = #tpu.dot_dimension_numbers<[1], [0], [0], [1], [0, 0, 1, 1], [], []>} : vector<16x16xf32>, vector<16x4xf32>, vector<16x4xf32> -> vector<16x4xf32>
    %51 = vector.broadcast %13 : vector<1x4xf32> to vector<16x4xf32>
    %52 = arith.addf %50, %51 : vector<16x4xf32>
    %53 = arith.mulf %52, %52 : vector<16x4xf32>
    %cst_24 = arith.constant dense<0.000000e+00> : vector<16xf32>
    %54 = vector.multi_reduction <add>, %53, %cst_24 [1] : vector<16x4xf32> to vector<16xf32>
    %55 = vector.shape_cast %54 : vector<16xf32> to vector<16x1xf32>
    %56 = math.rsqrt %55 : vector<16x1xf32>
    %cst_25 = arith.constant 9.99999995E+11 : f32
    %57 = vector.broadcast %cst_25 : f32 to vector<16x1xf32>
    %58 = arith.minimumf %56, %57 : vector<16x1xf32>
    %59 = vector.broadcast %58 : vector<16x1xf32> to vector<16x4xf32>
    %60 = arith.mulf %52, %59 : vector<16x4xf32>
    %61 = vector.shape_cast %60 : vector<16x4xf32> to vector<2x8x4xf32>
    %cst_26 = arith.constant dense<0.000000e+00> : vector<2x4xf32>
    %62 = vector.multi_reduction <add>, %61, %cst_26 [1] : vector<2x8x4xf32> to vector<2x4xf32>
    %cst_27 = arith.constant 8.000000e+00 : f32
    %63 = vector.broadcast %cst_27 : f32 to vector<2x4xf32>
    %64 = arith.divf %62, %63 : vector<2x4xf32>
    %cst_28 = arith.constant dense<0xFF800000> : vector<2xf32>
    %65 = vector.multi_reduction <maximumf>, %64, %cst_28 [1] : vector<2x4xf32> to vector<2xf32>
    %66 = vector.shape_cast %65 : vector<2xf32> to vector<2x1xf32>
    %67 = vector.broadcast %66 : vector<2x1xf32> to vector<2x4xf32>
    %68 = arith.subf %64, %67 : vector<2x4xf32>
    %69 = math.exp %68 : vector<2x4xf32>
    %cst_29 = arith.constant dense<0.000000e+00> : vector<2xf32>
    %70 = vector.multi_reduction <add>, %69, %cst_29 [1] : vector<2x4xf32> to vector<2xf32>
    %71 = vector.shape_cast %70 : vector<2xf32> to vector<2x1xf32>
    %72 = math.log %71 : vector<2x1xf32>
    %73 = vector.broadcast %72 : vector<2x1xf32> to vector<2x4xf32>
    %74 = arith.subf %68, %73 : vector<2x4xf32>
    %c0_30 = arith.constant 0 : index
    %c0_31 = arith.constant 0 : index
    %75 = vector.load %arg6[%c0_30, %c0_31] : memref<2x4xf32, #tpu.memory_space<vmem>>, vector<2x4xf32>
    tpu.vector_store %arg6[%c0_30, %c0_31], %74 {strides = array<i32>} : memref<2x4xf32, #tpu.memory_space<vmem>>, vector<2x4xf32>,
    return
  }
}

</mosaic_0001>

<llo_original>
// kernel: diffpool_forward.3
$region0: #{diffpool_forward.3}
  #allocation0 [shape = 'u32[]', space=smem, size = 0x4, offset = 0x4, fixed_abs, tag = 'smem constant byte address 0x4 - core index']
  #allocation1 [shape = 'u32[144,128]{1,0:T(1,128)}', space=vmem, size = 0x12000, scoped, tag = 'internal scratch']
  %s0 = inlined_call_operand.vmem [shape: f32[2,8,8], index: 0, kind: input, shape index: {}]
  %s1 = inlined_call_operand.vmem [shape: f32[2,8,8], index: 1, kind: input, shape index: {}]
  %s2 = inlined_call_operand.vmem [shape: f32[8,16], index: 2, kind: input, shape index: {}]
  %s3 = inlined_call_operand.vmem [shape: f32[1,16], index: 3, kind: input, shape index: {}]
  %s4 = inlined_call_operand.vmem [shape: f32[16,4], index: 4, kind: input, shape index: {}]
  %s5 = inlined_call_operand.vmem [shape: f32[1,4], index: 5, kind: input, shape index: {}]
  %s6 = inlined_call_operand.hbm [shape: f32[2,4], index: 6, kind: output, shape index: {}]
  %s7 = sld [smem:[#allocation0]]
  $region34: #{diffpool_forward.3} parent=0
    _
  %s9 = ssub.s32 1, %s7
  %s10 = scalar_select 0, %s9, %s7
  $region1: #{diffpool_forward.3} parent=0
    #allocation2 [shape = 'u8[1024]{0}', space=vmem, size = 0x400, scoped, tag = 'output window, operand 0, single buffered']
    #allocation3 [shape = 's32[1]{0}', space=sflag, size = 0x4, scoped, tag = 'scoped memory for diffpool_forward.3']
    %11 = vsyncpa [#allocation3], 0
    // Predicated region
    $region2: #{diffpool_forward.3} parent=1 // pred_check
      _
    $region3: #{diffpool_forward.3} parent=1 // pred_check_branch
      %13 = sbr.rel (0) target = $region5
    $region4: #{diffpool_forward.3} parent=1 // pred_region
      _
    $region5: #{diffpool_forward.3} parent=1 // pred_fallthru
      _
    // Predicated region
    $region6: #{diffpool_forward.3} parent=1 // pred_check
      _
    $region7: #{diffpool_forward.3} parent=1 // pred_check_branch
      %15 = sbr.rel (0) target = $region9
    $region8: #{diffpool_forward.3} parent=1 // pred_region
      _
    $region9: #{diffpool_forward.3} parent=1 // pred_fallthru
      _
    // Predicated region
    $region10: #{diffpool_forward.3} parent=1 // pred_check
      _
    $region11: #{diffpool_forward.3} parent=1 // pred_check_branch
      %17 = sbr.rel (0) target = $region13
    $region12: #{diffpool_forward.3} parent=1 // pred_region
      _
    $region13: #{diffpool_forward.3} parent=1 // pred_fallthru
      _
    // Predicated region
    $region14: #{diffpool_forward.3} parent=1 // pred_check
      _
    $region15: #{diffpool_forward.3} parent=1 // pred_check_branch
      %19 = sbr.rel (0) target = $region17
    $region16: #{diffpool_forward.3} parent=1 // pred_region
      _
    $region17: #{diffpool_forward.3} parent=1 // pred_fallthru
      _
    // Predicated region
    $region18: #{diffpool_forward.3} parent=1 // pred_check
      _
    $region19: #{diffpool_forward.3} parent=1 // pred_check_branch
      %21 = sbr.rel (0) target = $region21
    $region20: #{diffpool_forward.3} parent=1 // pred_region
      _
    $region21: #{diffpool_forward.3} parent=1 // pred_fallthru
      _
    // Predicated region
    $region22: #{diffpool_forward.3} parent=1 // pred_check
      _
    $region23: #{diffpool_forward.3} parent=1 // pred_check_branch
      %23 = sbr.rel (0) target = $region25
    $region24: #{diffpool_forward.3} parent=1 // pred_region
      _
    $region25: #{diffpool_forward.3} parent=1 // pred_fallthru
      _
    %v24 = vld [vmem:[%s0] sm:$0xff]
    %v25 = vld [vmem:[%s0 + $0x8] sm:$0xff]
    %v26 = vld [vmem:[%s1] sm:$0xff]
    %v27 = vld [vmem:[%s1 + $0x8] sm:$0xff]
    %v28 = vlaneseq
    %v29 = vshrl.u32 %v28, 7
    %v30 = vlaneseq
    %v31 = vand.u32 %v30, 127
    %vm32 = vcmp.eq.s32.totalorder %v29, %v31
    %v33 = vsel %vm32, 1, 0
    %v34 = vcvt.s32.f32 %v33
    %v35 = vadd.f32 %v26, %v34
    %v36 = vadd.f32 %v27, %v34
    %v37 = vld [vmem:[%s2] sm:$0xff]
    %v38 = vld [vmem:[%s4] sm:$0xff]
    %v39 = vld [vmem:[%s4 + $0x8] sm:$0xff]
    %v40 = vld [vmem:[%s3] sm:$0x1]
    %v41 = vld [vmem:[%s5] sm:$0x1]
    %vm42 = vcmask 64512
    %v44 = vsel %vm42, %v35, 0
    %46 = vmatprep.subr.mxu0 0.0
    %47 = vmatpush1.msra.mxu0 %v24
    %48 = vmatprep.subr.mxu0 0.0
    %49 = vmatpush1.msra.mxu0 0.0
    %50 = vmatprep.subr.mxu0 0.0
    %51 = vmatpush1.msra.mxu0 0.0
    %52 = vmatprep.subr.mxu0 0.0
    %53 = vmatpush1.msra.mxu0 0.0
    %54 = vmatprep.subr.mxu0 0.0
    %55 = vmatpush1.msra.mxu0 0.0
    %56 = vmatprep.subr.mxu0 0.0
    %57 = vmatpush1.msra.mxu0 0.0
    %58 = vmatprep.subr.mxu0 0.0
    %59 = vmatpush1.msra.mxu0 0.0
    %60 = vmatprep.subr.mxu0 0.0
    %61 = vmatpush1.msra.mxu0 0.0
    %62 = vmatprep.subr.mxu0 0.0
    %63 = vmatpush1.msra.mxu0 0.0
    %64 = vmatprep.subr.mxu0 0.0
    %65 = vmatpush1.msra.mxu0 0.0
    %66 = vmatprep.subr.mxu0 0.0
    %67 = vmatpush1.msra.mxu0 0.0
    %68 = vmatprep.subr.mxu0 0.0
    %69 = vmatpush1.msra.mxu0 0.0
    %70 = vmatprep.subr.mxu0 0.0
    %71 = vmatpush1.msra.mxu0 0.0
    %72 = vmatprep.subr.mxu0 0.0
    %73 = vmatpush1.msra.mxu0 0.0
    %74 = vmatprep.subr.mxu0 0.0
    %75 = vmatpush1.msra.mxu0 0.0
    %76 = vmatprep.subr.mxu0 0.0
    %77 = vmatpush1.msra.mxu0 0.0
    %78 = vmatprep.subr.mxu0 0.0
    %79 = vmatpush1.msra.mxu0 0.0
    %80 = vmatprep.subr.mxu0 0.0
    %81 = vmatpush1.msra.mxu0 0.0
    %82 = vmatprep.subr.mxu0 0.0
    %83 = vmatpush1.msra.mxu0 0.0
    %84 = vmatprep.subr.mxu0 0.0
    %85 = vmatpush1.msra.mxu0 0.0
    %86 = vmatprep.subr.mxu0 0.0
    %87 = vmatpush1.msra.mxu0 0.0
    %88 = vmatprep.subr.mxu0 0.0
    %89 = vmatpush1.msra.mxu0 0.0
    %90 = vmatprep.subr.mxu0 0.0
    %91 = vmatpush1.msra.mxu0 0.0
    %92 = vmatprep.subr.mxu0 0.0
    %93 = vmatpush1.msra.mxu0 0.0
    %94 = vmatprep.subr.mxu0 0.0
    %95 = vmatpush1.msra.mxu0 0.0
    %96 = vmatprep.subr.mxu0 0.0
    %97 = vmatpush1.msra.mxu0 0.0
    %98 = vmatprep.subr.mxu0 0.0
    %99 = vmatpush1.msra.mxu0 0.0
    %100 = vmatprep.subr.mxu0 0.0
    %101 = vmatpush1.msra.mxu0 0.0
    %102 = vmatprep.subr.mxu0 0.0
    %103 = vmatpush1.msra.mxu0 0.0
    %104 = vmatprep.subr.mxu0 0.0
    %105 = vmatpush1.msra.mxu0 0.0
    %106 = vmatprep.subr.mxu0 0.0
    %107 = vmatpush1.msra.mxu0 0.0
    %108 = vmatprep.subr.mxu0 0.0
    %109 = vmatpush1.msra.mxu0 0.0
    %110 = vmatprep.mubr.f32.mxu0 0.0
    %111 = vmatmul.mubr.f32.gmra.mrb[0].mxu0 %v44
    %v112 = vpop.f32.mrb[0].mxu0
    %v113 = vadd.f32 0.0, %v112
    %v114 = vpop.f32.mrb[0].mxu0
    %115 = vdwg.mxu0
    %v117 = vsel %vm42, %v36, 0
    %119 = vmatprep.subr.mxu0 0.0
    %120 = vmatpush1.msra.mxu0 %v25
    %121 = vmatprep.subr.mxu0 0.0
    %122 = vmatpush1.msra.mxu0 0.0
    %123 = vmatprep.subr.mxu0 0.0
    %124 = vmatpush1.msra.mxu0 0.0
    %125 = vmatprep.subr.mxu0 0.0
    %126 = vmatpush1.msra.mxu0 0.0
    %127 = vmatprep.subr.mxu0 0.0
    %128 = vmatpush1.msra.mxu0 0.0
    %129 = vmatprep.subr.mxu0 0.0
    %130 = vmatpush1.msra.mxu0 0.0
    %131 = vmatprep.subr.mxu0 0.0
    %132 = vmatpush1.msra.mxu0 0.0
    %133 = vmatprep.subr.mxu0 0.0
    %134 = vmatpush1.msra.mxu0 0.0
    %135 = vmatprep.subr.mxu0 0.0
    %136 = vmatpush1.msra.mxu0 0.0
    %137 = vmatprep.subr.mxu0 0.0
    %138 = vmatpush1.msra.mxu0 0.0
    %139 = vmatprep.subr.mxu0 0.0
    %140 = vmatpush1.msra.mxu0 0.0
    %141 = vmatprep.subr.mxu0 0.0
    %142 = vmatpush1.msra.mxu0 0.0
    %143 = vmatprep.subr.mxu0 0.0
    %144 = vmatpush1.msra.mxu0 0.0
    %145 = vmatprep.subr.mxu0 0.0
    %146 = vmatpush1.msra.mxu0 0.0
    %147 = vmatprep.subr.mxu0 0.0
    %148 = vmatpush1.msra.mxu0 0.0
    %149 = vmatprep.subr.mxu0 0.0
    %150 = vmatpush1.msra.mxu0 0.0
    %151 = vmatprep.subr.mxu0 0.0
    %152 = vmatpush1.msra.mxu0 0.0
    %153 = vmatprep.subr.mxu0 0.0
    %154 = vmatpush1.msra.mxu0 0.0
    %155 = vmatprep.subr.mxu0 0.0
    %156 = vmatpush1.msra.mxu0 0.0
    %157 = vmatprep.subr.mxu0 0.0
    %158 = vmatpush1.msra.mxu0 0.0
    %159 = vmatprep.subr.mxu0 0.0
    %160 = vmatpush1.msra.mxu0 0.0
    %161 = vmatprep.subr.mxu0 0.0
    %162 = vmatpush1.msra.mxu0 0.0
    %163 = vmatprep.subr.mxu0 0.0
    %164 = vmatpush1.msra.mxu0 0.0
    %165 = vmatprep.subr.mxu0 0.0
    %166 = vmatpush1.msra.mxu0 0.0
    %167 = vmatprep.subr.mxu0 0.0
    %168 = vmatpush1.msra.mxu0 0.0
    %169 = vmatprep.subr.mxu0 0.0
    %170 = vmatpush1.msra.mxu0 0.0
    %171 = vmatprep.subr.mxu0 0.0
    %172 = vmatpush1.msra.mxu0 0.0
    %173 = vmatprep.subr.mxu0 0.0
    %174 = vmatpush1.msra.mxu0 0.0
    %175 = vmatprep.subr.mxu0 0.0
    %176 = vmatpush1.msra.mxu0 0.0
    %177 = vmatprep.subr.mxu0 0.0
    %178 = vmatpush1.msra.mxu0 0.0
    %179 = vmatprep.subr.mxu0 0.0
    %180 = vmatpush1.msra.mxu0 0.0
    %181 = vmatprep.subr.mxu0 0.0
    %182 = vmatpush1.msra.mxu0 0.0
    %183 = vmatprep.mubr.f32.mxu0 0.0
    %184 = vmatmul.mubr.f32.gmra.mrb[0].mxu0 %v117
    %v185 = vpop.f32.mrb[0].mxu0
    %v186 = vadd.f32 0.0, %v185
    %v187 = vpop.f32.mrb[0].mxu0
    %188 = vdwg.mxu0
    %v190 = vlaneseq
    %v191 = vshrl.u32 %v190, 7
    %v192 = vsub.s32 0, %v191
    %v193 = vrot.slane %v40, %v192
    %v196 = vsel %vm42, %v113, 0
    %v199 = vsel %vm42, %v186, 0
    %201 = vmatprep.subr.mxu0 0.0
    %202 = vmatpush1.msra.mxu0 %v37
    %203 = vmatprep.subr.mxu0 0.0
    %204 = vmatpush1.msra.mxu0 0.0
    %205 = vmatprep.subr.mxu0 0.0
    %206 = vmatpush1.msra.mxu0 0.0
    %207 = vmatprep.subr.mxu0 0.0
    %208 = vmatpush1.msra.mxu0 0.0
    %209 = vmatprep.subr.mxu0 0.0
    %210 = vmatpush1.msra.mxu0 0.0
    %211 = vmatprep.subr.mxu0 0.0
    %212 = vmatpush1.msra.mxu0 0.0
    %213 = vmatprep.subr.mxu0 0.0
    %214 = vmatpush1.msra.mxu0 0.0
    %215 = vmatprep.subr.mxu0 0.0
    %216 = vmatpush1.msra.mxu0 0.0
    %217 = vmatprep.subr.mxu0 0.0
    %218 = vmatpush1.msra.mxu0 0.0
    %219 = vmatprep.subr.mxu0 0.0
    %220 = vmatpush1.msra.mxu0 0.0
    %221 = vmatprep.subr.mxu0 0.0
    %222 = vmatpush1.msra.mxu0 0.0
    %223 = vmatprep.subr.mxu0 0.0
    %224 = vmatpush1.msra.mxu0 0.0
    %225 = vmatprep.subr.mxu0 0.0
    %226 = vmatpush1.msra.mxu0 0.0
    %227 = vmatprep.subr.mxu0 0.0
    %228 = vmatpush1.msra.mxu0 0.0
    %229 = vmatprep.subr.mxu0 0.0
    %230 = vmatpush1.msra.mxu0 0.0
    %231 = vmatprep.subr.mxu0 0.0
    %232 = vmatpush1.msra.mxu0 0.0
    %233 = vmatprep.subr.mxu0 0.0
    %234 = vmatpush1.msra.mxu0 0.0
    %235 = vmatprep.subr.mxu0 0.0
    %236 = vmatpush1.msra.mxu0 0.0
    %237 = vmatprep.subr.mxu0 0.0
    %238 = vmatpush1.msra.mxu0 0.0
    %239 = vmatprep.subr.mxu0 0.0
    %240 = vmatpush1.msra.mxu0 0.0
    %241 = vmatprep.subr.mxu0 0.0
    %242 = vmatpush1.msra.mxu0 0.0
    %243 = vmatprep.subr.mxu0 0.0
    %244 = vmatpush1.msra.mxu0 0.0
    %245 = vmatprep.subr.mxu0 0.0
    %246 = vmatpush1.msra.mxu0 0.0
    %247 = vmatprep.subr.mxu0 0.0
    %248 = vmatpush1.msra.mxu0 0.0
    %249 = vmatprep.subr.mxu0 0.0
    %250 = vmatpush1.msra.mxu0 0.0
    %251 = vmatprep.subr.mxu0 0.0
    %252 = vmatpush1.msra.mxu0 0.0
    %253 = vmatprep.subr.mxu0 0.0
    %254 = vmatpush1.msra.mxu0 0.0
    %255 = vmatprep.subr.mxu0 0.0
    %256 = vmatpush1.msra.mxu0 0.0
    %257 = vmatprep.subr.mxu0 0.0
    %258 = vmatpush1.msra.mxu0 0.0
    %259 = vmatprep.subr.mxu0 0.0
    %260 = vmatpush1.msra.mxu0 0.0
    %261 = vmatprep.subr.mxu0 0.0
    %262 = vmatpush1.msra.mxu0 0.0
    %263 = vmatprep.subr.mxu0 0.0
    %264 = vmatpush1.msra.mxu0 0.0
    %265 = vmatprep.mubr.f32.mxu0 0.0
    %266 = vmatmul.mubr.f32.gmra.mrb[0].mxu0 %v196
    %v267 = vpop.f32.mrb[0].mxu0
    %v268 = vadd.f32 %v193, %v267
    %v269 = vpop.f32.mrb[0].mxu0
    %270 = vmatprep.mubr.f32.mxu0 0.0
    %271 = vmatmul.mubr.f32.gmra.mrb[0].mxu0 %v199
    %v272 = vpop.f32.mrb[0].mxu0
    %v273 = vadd.f32 %v193, %v272
    %v274 = vpop.f32.mrb[0].mxu0
    %275 = vdwg.mxu0
    %v276 = vmul.f32 %v268, %v268
    %v277 = vmul.f32 %v273, %v273
    %vm278 = vcmask 130048
    %v279 = vsel %vm278, %v276, 0.0
    %280 = vadd.xlane.f32.xlu0 %v279
    %v281 = vpop.xlane.xlu0 %280
    %v282 = vsel %vm278, %v277, 0.0
    %283 = vadd.xlane.f32.xlu0 %v282
    %v284 = vpop.xlane.xlu0 %283
    %v285 = vrsqrt.pop %v281
    %v286 = vrsqrt.pop %v284
    %v287 = vmin.f32 %v285, 1e+12
    %v288 = vmin.f32 %v286, 1e+12
    %v289 = vmul.f32 %v268, %v287
    %v290 = vmul.f32 %v273, %v288
    %v291 = vmax.f32 %v289, 0.0
    %v292 = vmax.f32 %v290, 0.0
    %v293 = vsel %vm278, %v291, 0.0
    %v294 = vsel %vm278, %v292, 0.0
    %v295 = vadd.f32 %v293, %v294
    %296 = vadd.xlane.f32.xlu0 %v295
    %v297 = vpop.xlane.xlu0 %296
    %v298 = vrcp.pop 32.0
    %v299 = vmul.f32 %v297, %v298
    %v300 = vsub.f32 %v291, %v299
    %v301 = vsub.f32 %v292, %v299
    %v302 = vmul.f32 %v300, %v300
    %v303 = vmul.f32 %v301, %v301
    %v304 = vsel %vm278, %v302, 0.0
    %v305 = vsel %vm278, %v303, 0.0
    %v306 = vadd.f32 %v304, %v305
    %307 = vadd.xlane.f32.xlu0 %v306
    %v308 = vpop.xlane.xlu0 %307
    %v309 = vmul.f32 %v308, %v298
    %v310 = vadd.f32 %v309, 1e-05
    %v311 = vrsqrt.pop %v310
    %v312 = vmul.f32 %v300, %v311
    %v313 = vmul.f32 %v301, %v311
    %314 = vmatprep.subr.mxu0 0.0
    %315 = vmatpush1.msra.mxu0 %v312
    %316 = vmatprep.subr.mxu0 0.0
    %317 = vmatpush1.msra.mxu0 0.0
    %318 = vmatprep.subr.mxu0 0.0
    %319 = vmatpush1.msra.mxu0 0.0
    %320 = vmatprep.subr.mxu0 0.0
    %321 = vmatpush1.msra.mxu0 0.0
    %322 = vmatprep.subr.mxu0 0.0
    %323 = vmatpush1.msra.mxu0 0.0
    %324 = vmatprep.subr.mxu0 0.0
    %325 = vmatpush1.msra.mxu0 0.0
    %326 = vmatprep.subr.mxu0 0.0
    %327 = vmatpush1.msra.mxu0 0.0
    %328 = vmatprep.subr.mxu0 0.0
    %329 = vmatpush1.msra.mxu0 0.0
    %330 = vmatprep.subr.mxu0 0.0
    %331 = vmatpush1.msra.mxu0 0.0
    %332 = vmatprep.subr.mxu0 0.0
    %333 = vmatpush1.msra.mxu0 0.0
    %334 = vmatprep.subr.mxu0 0.0
    %335 = vmatpush1.msra.mxu0 0.0
    %336 = vmatprep.subr.mxu0 0.0
    %337 = vmatpush1.msra.mxu0 0.0
    %338 = vmatprep.subr.mxu0 0.0
    %339 = vmatpush1.msra.mxu0 0.0
    %340 = vmatprep.subr.mxu0 0.0
    %341 = vmatpush1.msra.mxu0 0.0
    %342 = vmatprep.subr.mxu0 0.0
    %343 = vmatpush1.msra.mxu0 0.0
    %344 = vmatprep.subr.mxu0 0.0
    %345 = vmatpush1.msra.mxu0 0.0
    %346 = vmatprep.subr.mxu0 0.0
    %347 = vmatpush1.msra.mxu0 0.0
    %348 = vmatprep.subr.mxu0 0.0
    %349 = vmatpush1.msra.mxu0 0.0
    %350 = vmatprep.subr.mxu0 0.0
    %351 = vmatpush1.msra.mxu0 0.0
    %352 = vmatprep.subr.mxu0 0.0
    %353 = vmatpush1.msra.mxu0 0.0
    %354 = vmatprep.subr.mxu0 0.0
    %355 = vmatpush1.msra.mxu0 0.0
    %356 = vmatprep.subr.mxu0 0.0
    %357 = vmatpush1.msra.mxu0 0.0
    %358 = vmatprep.subr.mxu0 0.0
    %359 = vmatpush1.msra.mxu0 0.0
    %360 = vmatprep.subr.mxu0 0.0
    %361 = vmatpush1.msra.mxu0 0.0
    %362 = vmatprep.subr.mxu0 0.0
    %363 = vmatpush1.msra.mxu0 0.0
    %364 = vmatprep.subr.mxu0 0.0
    %365 = vmatpush1.msra.mxu0 0.0
    %366 = vmatprep.subr.mxu0 0.0
    %367 = vmatpush1.msra.mxu0 0.0
    %368 = vmatprep.subr.mxu0 0.0
    %369 = vmatpush1.msra.mxu0 0.0
    %370 = vmatprep.subr.mxu0 0.0
    %371 = vmatpush1.msra.mxu0 0.0
    %372 = vmatprep.subr.mxu0 0.0
    %373 = vmatpush1.msra.mxu0 0.0
    %374 = vmatprep.subr.mxu0 0.0
    %375 = vmatpush1.msra.mxu0 0.0
    %376 = vmatprep.subr.mxu0 0.0
    %377 = vmatpush1.msra.mxu0 0.0
    %378 = vmatprep.mubr.f32.mxu0 0.0
    %379 = vmatmul.mubr.f32.gmra.mrb[0].mxu0 %v44
    %v380 = vpop.f32.mrb[0].mxu0
    %v381 = vadd.f32 0.0, %v380
    %v382 = vpop.f32.mrb[0].mxu0
    %383 = vdwg.mxu0
    %384 = vmatprep.subr.mxu0 0.0
    %385 = vmatpush1.msra.mxu0 %v313
    %386 = vmatprep.subr.mxu0 0.0
    %387 = vmatpush1.msra.mxu0 0.0
    %388 = vmatprep.subr.mxu0 0.0
    %389 = vmatpush1.msra.mxu0 0.0
    %390 = vmatprep.subr.mxu0 0.0
    %391 = vmatpush1.msra.mxu0 0.0
    %392 = vmatprep.subr.mxu0 0.0
    %393 = vmatpush1.msra.mxu0 0.0
    %394 = vmatprep.subr.mxu0 0.0
    %395 = vmatpush1.msra.mxu0 0.0
    %396 = vmatprep.subr.mxu0 0.0
    %397 = vmatpush1.msra.mxu0 0.0
    %398 = vmatprep.subr.mxu0 0.0
    %399 = vmatpush1.msra.mxu0 0.0
    %400 = vmatprep.subr.mxu0 0.0
    %401 = vmatpush1.msra.mxu0 0.0
    %402 = vmatprep.subr.mxu0 0.0
    %403 = vmatpush1.msra.mxu0 0.0
    %404 = vmatprep.subr.mxu0 0.0
    %405 = vmatpush1.msra.mxu0 0.0
    %406 = vmatprep.subr.mxu0 0.0
    %407 = vmatpush1.msra.mxu0 0.0
    %408 = vmatprep.subr.mxu0 0.0
    %409 = vmatpush1.msra.mxu0 0.0
    %410 = vmatprep.subr.mxu0 0.0
    %411 = vmatpush1.msra.mxu0 0.0
    %412 = vmatprep.subr.mxu0 0.0
    %413 = vmatpush1.msra.mxu0 0.0
    %414 = vmatprep.subr.mxu0 0.0
    %415 = vmatpush1.msra.mxu0 0.0
    %416 = vmatprep.subr.mxu0 0.0
    %417 = vmatpush1.msra.mxu0 0.0
    %418 = vmatprep.subr.mxu0 0.0
    %419 = vmatpush1.msra.mxu0 0.0
    %420 = vmatprep.subr.mxu0 0.0
    %421 = vmatpush1.msra.mxu0 0.0
    %422 = vmatprep.subr.mxu0 0.0
    %423 = vmatpush1.msra.mxu0 0.0
    %424 = vmatprep.subr.mxu0 0.0
    %425 = vmatpush1.msra.mxu0 0.0
    %426 = vmatprep.subr.mxu0 0.0
    %427 = vmatpush1.msra.mxu0 0.0
    %428 = vmatprep.subr.mxu0 0.0
    %429 = vmatpush1.msra.mxu0 0.0
    %430 = vmatprep.subr.mxu0 0.0
    %431 = vmatpush1.msra.mxu0 0.0
    %432 = vmatprep.subr.mxu0 0.0
    %433 = vmatpush1.msra.mxu0 0.0
    %434 = vmatprep.subr.mxu0 0.0
    %435 = vmatpush1.msra.mxu0 0.0
    %436 = vmatprep.subr.mxu0 0.0
    %437 = vmatpush1.msra.mxu0 0.0
    %438 = vmatprep.subr.mxu0 0.0
    %439 = vmatpush1.msra.mxu0 0.0
    %440 = vmatprep.subr.mxu0 0.0
    %441 = vmatpush1.msra.mxu0 0.0
    %442 = vmatprep.subr.mxu0 0.0
    %443 = vmatpush1.msra.mxu0 0.0
    %444 = vmatprep.subr.mxu0 0.0
    %445 = vmatpush1.msra.mxu0 0.0
    %446 = vmatprep.subr.mxu0 0.0
    %447 = vmatpush1.msra.mxu0 0.0
    %448 = vmatprep.mubr.f32.mxu0 0.0
    %449 = vmatmul.mubr.f32.gmra.mrb[0].mxu0 %v117
    %v450 = vpop.f32.mrb[0].mxu0
    %v451 = vadd.f32 0.0, %v450
    %v452 = vpop.f32.mrb[0].mxu0
    %453 = vdwg.mxu0
    %v455 = vlaneseq
    %v456 = vshrl.u32 %v455, 7
    %v457 = vsub.s32 0, %v456
    %v458 = vrot.slane %v41, %v457
    %v461 = vsel %vm278, %v381, 0
    %v464 = vsel %vm278, %v451, 0
    %466 = vmatprep.subr.mxu0 0.0
    %467 = vmatpush1.msra.mxu0 %v38
    %468 = vmatprep.subr.mxu0 0.0
    %469 = vmatpush1.msra.mxu0 %v39
    %470 = vmatprep.subr.mxu0 0.0
    %471 = vmatpush1.msra.mxu0 0.0
    %472 = vmatprep.subr.mxu0 0.0
    %473 = vmatpush1.msra.mxu0 0.0
    %474 = vmatprep.subr.mxu0 0.0
    %475 = vmatpush1.msra.mxu0 0.0
    %476 = vmatprep.subr.mxu0 0.0
    %477 = vmatpush1.msra.mxu0 0.0
    %478 = vmatprep.subr.mxu0 0.0
    %479 = vmatpush1.msra.mxu0 0.0
    %480 = vmatprep.subr.mxu0 0.0
    %481 = vmatpush1.msra.mxu0 0.0
    %482 = vmatprep.subr.mxu0 0.0
    %483 = vmatpush1.msra.mxu0 0.0
    %484 = vmatprep.subr.mxu0 0.0
    %485 = vmatpush1.msra.mxu0 0.0
    %486 = vmatprep.subr.mxu0 0.0
    %487 = vmatpush1.msra.mxu0 0.0
    %488 = vmatprep.subr.mxu0 0.0
    %489 = vmatpush1.msra.mxu0 0.0
    %490 = vmatprep.subr.mxu0 0.0
    %491 = vmatpush1.msra.mxu0 0.0
    %492 = vmatprep.subr.mxu0 0.0
    %493 = vmatpush1.msra.mxu0 0.0
    %494 = vmatprep.subr.mxu0 0.0
    %495 = vmatpush1.msra.mxu0 0.0
    %496 = vmatprep.subr.mxu0 0.0
    %497 = vmatpush1.msra.mxu0 0.0
    %498 = vmatprep.subr.mxu0 0.0
    %499 = vmatpush1.msra.mxu0 0.0
    %500 = vmatprep.subr.mxu0 0.0
    %501 = vmatpush1.msra.mxu0 0.0
    %502 = vmatprep.subr.mxu0 0.0
    %503 = vmatpush1.msra.mxu0 0.0
    %504 = vmatprep.subr.mxu0 0.0
    %505 = vmatpush1.msra.mxu0 0.0
    %506 = vmatprep.subr.mxu0 0.0
    %507 = vmatpush1.msra.mxu0 0.0
    %508 = vmatprep.subr.mxu0 0.0
    %509 = vmatpush1.msra.mxu0 0.0
    %510 = vmatprep.subr.mxu0 0.0
    %511 = vmatpush1.msra.mxu0 0.0
    %512 = vmatprep.subr.mxu0 0.0
    %513 = vmatpush1.msra.mxu0 0.0
    %514 = vmatprep.subr.mxu0 0.0
    %515 = vmatpush1.msra.mxu0 0.0
    %516 = vmatprep.subr.mxu0 0.0
    %517 = vmatpush1.msra.mxu0 0.0
    %518 = vmatprep.subr.mxu0 0.0
    %519 = vmatpush1.msra.mxu0 0.0
    %520 = vmatprep.subr.mxu0 0.0
    %521 = vmatpush1.msra.mxu0 0.0
    %522 = vmatprep.subr.mxu0 0.0
    %523 = vmatpush1.msra.mxu0 0.0
    %524 = vmatprep.subr.mxu0 0.0
    %525 = vmatpush1.msra.mxu0 0.0
    %526 = vmatprep.subr.mxu0 0.0
    %527 = vmatpush1.msra.mxu0 0.0
    %528 = vmatprep.subr.mxu0 0.0
    %529 = vmatpush1.msra.mxu0 0.0
    %530 = vmatprep.mubr.f32.mxu0 0.0
    %531 = vmatmul.mubr.f32.gmra.mrb[0].mxu0 %v461
    %v532 = vpop.f32.mrb[0].mxu0
    %v533 = vadd.f32 %v458, %v532
    %v534 = vpop.f32.mrb[0].mxu0
    %535 = vmatprep.mubr.f32.mxu0 0.0
    %536 = vmatmul.mubr.f32.gmra.mrb[0].mxu0 %v464
    %v537 = vpop.f32.mrb[0].mxu0
    %v538 = vadd.f32 %v458, %v537
    %v539 = vpop.f32.mrb[0].mxu0
    %540 = vdwg.mxu0
    %v541 = vmul.f32 %v533, %v533
    %v542 = vmul.f32 %v538, %v538
    %vm543 = vcmask 31744
    %v544 = vsel %vm543, %v541, 0.0
    %545 = vadd.xlane.f32.xlu0 %v544
    %v546 = vpop.xlane.xlu0 %545
    %v547 = vsel %vm543, %v542, 0.0
    %548 = vadd.xlane.f32.xlu0 %v547
    %v549 = vpop.xlane.xlu0 %548
    %v550 = vrsqrt.pop %v546
    %v551 = vrsqrt.pop %v549
    %v552 = vmin.f32 %v550, 1e+12
    %v553 = vmin.f32 %v551, 1e+12
    %v554 = vmul.f32 %v533, %v552
    %v555 = vmul.f32 %v538, %v553
    %v556 = vsel %vm543, %v554, 0.0
    %v557 = vrot.slane %v556, 4
    %v558 = vadd.f32 %v556, %v557
    %v559 = vrot.slane %v558, 2
    %v560 = vadd.f32 %v558, %v559
    %v561 = vrot.slane %v560, 1
    %v562 = vadd.f32 %v560, %v561
    %v563 = vsel %vm543, %v555, 0.0
    %v564 = vrot.slane %v563, 4
    %v565 = vadd.f32 %v563, %v564
    %v566 = vrot.slane %v565, 2
    %v567 = vadd.f32 %v565, %v566
    %v568 = vrot.slane %v567, 1
    %v569 = vadd.f32 %v567, %v568
    %v570 = vrcp.pop 8.0
    %v571 = vmul.f32 %v562, %v570
    %v572 = vmul.f32 %v569, %v570
    %vm575 = vcmask 1041409
    %v576 = vsel %vm575, %v572, %v571
    %vm578 = vcmask 25600
    %v579 = vsel %vm578, %v576, -inf
    %580 = vmax.xlane.f32.xlu0 %v579
    %v581 = vpop.xlane.xlu0 %580
    %v583 = vrot.slane %v581, 1
    %v586 = vsub.f32 %v571, %v581
    %v587 = vsub.f32 %v572, %v583
    %v588 = vmul.f32 %v586, 1.442695
    %v589 = vpow.pop %v588
    %v590 = vmul.f32 %v587, 1.442695
    %v591 = vpow.pop %v590
    %v594 = vrot.slane %v591, 7
    %v595 = vsel %vm575, %v594, %v589
    %v597 = vsel %vm578, %v595, 0.0
    %598 = vadd.xlane.f32.xlu0 %v597
    %v599 = vpop.xlane.xlu0 %598
    %v600 = vlog2.pop %v599
    %v601 = vmul.f32 %v600, 0.6931472
    %v603 = vrot.slane %v601, 1
    %v606 = vsub.f32 %v586, %v601
    %v607 = vsub.f32 %v587, %v603
    %v610 = vrot.slane %v607, 7
    %v611 = vsel %vm575, %v610, %v606
    %613 = vst.msk [vmem:[#allocation2] sm:$0x3] %vm578, %v611
    // Predicated region
    $region26: #{diffpool_forward.3} parent=1 // pred_check
      _
    $region27: #{diffpool_forward.3} parent=1 // pred_check_branch
      %615 = sbr.rel (0) target = $region29
    $region28: #{diffpool_forward.3} parent=1 // pred_region
      %s617 = ssub.s32 32, 32
      %618 = vsyncadd [#allocation3], %s617
      %s620 = sshll.u32 [#allocation2], 4
      %s621 = int_to_ptr.vmem [resolvable:$true] %s620
      %623 = dma.vmem_to_hbm [thread:$0]  %s621, 32, %s6, [#allocation3]
    $region29: #{diffpool_forward.3} parent=1 // pred_fallthru
      _
    // Predicated region
    $region30: #{diffpool_forward.3} parent=1 // pred_check
      _
    $region31: #{diffpool_forward.3} parent=1 // pred_check_branch
      %625 = sbr.rel (0) target = $region33
    $region32: #{diffpool_forward.3} parent=1 // pred_region
      %626 = dma.done [#allocation3], 32
    $region33: #{diffpool_forward.3} parent=1 // pred_fallthru
      _
    %627 = vsyncpa [#allocation3], 1

// kernel: diffpool_forward.2
$region0: #{diffpool_forward.2}
  #allocation0 [shape = 'u32[]', space=smem, size = 0x4, offset = 0x4, fixed_abs, tag = 'smem constant byte address 0x4 - core index']
  #allocation1 [shape = 'u32[144,128]{1,0:T(1,128)}', space=vmem, size = 0x12000, scoped, tag = 'internal scratch']
  %s0 = inlined_call_operand.vmem [shape: f32[2,16,8], index: 0, kind: input, shape index: {}]
  %s1 = inlined_call_operand.vmem [shape: f32[2,16,16], index: 1, kind: input, shape index: {}]
  %s2 = inlined_call_operand.vmem [shape: f32[8,16], index: 2, kind: input, shape index: {}]
  %s3 = inlined_call_operand.vmem [shape: f32[1,16], index: 3, kind: input, shape index: {}]
  %s4 = inlined_call_operand.vmem [shape: f32[16,16], index: 4, kind: input, shape index: {}]
  %s5 = inlined_call_operand.vmem [shape: f32[1,16], index: 5, kind: input, shape index: {}]
  %s6 = inlined_call_operand.vmem [shape: f32[16,8], index: 6, kind: input, shape index: {}]
  %s7 = inlined_call_operand.vmem [shape: f32[1,8], index: 7, kind: input, shape index: {}]
  %s8 = inlined_call_operand.vmem [shape: f32[8,16], index: 8, kind: input, shape index: {}]
  %s9 = inlined_call_operand.vmem [shape: f32[1,16], index: 9, kind: input, shape index: {}]
  %s10 = inlined_call_operand.vmem [shape: f32[16,16], index: 10, kind: input, shape index: {}]
  %s11 = inlined_call_operand.vmem [shape: f32[1,16], index: 11, kind: input, shape index: {}]
  %s12 = inlined_call_operand.vmem [shape: f32[16,8], index: 12, kind: input, shape index: {}]
  %s13 = inlined_call_operand.vmem [shape: f32[1,8], index: 13, kind: input, shape index: {}]
  %s14 = inlined_call_operand.vmem [shape: f32[2,8,8], index: 14, kind: output, shape index: {0}]
  %s15 = inlined_call_operand.vmem [shape: f32[2,8,8], index: 15, kind: output, shape index: {1}]
  %s16 = inlined_call_operand.vmem [shape: f32[2,2], index: 16, kind: output, shape index: {2}]
  %17 = xla_tuple %s14, %s15, %s16
  %s18 = sld [smem:[#allocation0]]
  $region82: #{diffpool_forward.2} parent=0
    _
  %s20 = ssub.s32 1, %s18
  %s21 = scalar_select 0, %s20, %s18
  // Predicated region
  $region2: #{diffpool_forward.2} parent=0 // pred_check
    _
  $region3: #{diffpool_forward.2} parent=0 // pred_check_branch
    %23 = sbr.rel (0) target = $region5
  $region4: #{diffpool_forward.2} parent=0 // pred_region
    _
  $region5: #{diffpool_forward.2} parent=0 // pred_fallthru
    _
  // Predicated region
  $region6: #{diffpool_forward.2} parent=0 // pred_check
    _
  $region7: #{diffpool_forward.2} parent=0 // pred_check_branch
    %25 = sbr.rel (0) target = $region9
  $region8: #{diffpool_forward.2} parent=0 // pred_region
    _
  $region9: #{diffpool_forward.2} parent=0 // pred_fallthru
    _
  // Predicated region
  $region10: #{diffpool_forward.2} parent=0 // pred_check
    _
  $region11: #{diffpool_forward.2} parent=0 // pred_check_branch
    %27 = sbr.rel (0) target = $region13
  $region12: #{diffpool_forward.2} parent=0 // pred_region
    _
  $region13: #{diffpool_forward.2} parent=0 // pred_fallthru
    _
  // Predicated region
  $region14: #{diffpool_forward.2} parent=0 // pred_check
    _
  $region15: #{diffpool_forward.2} parent=0 // pred_check_branch
    %29 = sbr.rel (0) target = $region17
  $region16: #{diffpool_forward.2} parent=0 // pred_region
    _
  $region17: #{diffpool_forward.2} parent=0 // pred_fallthru
    _
  // Predicated region
  $region18: #{diffpool_forward.2} parent=0 // pred_check
    _
  $region19: #{diffpool_forward.2} parent=0 // pred_check_branch
    %31 = sbr.rel (0) target = $region21
  $region20: #{diffpool_forward.2} parent=0 // pred_region
    _
  $region21: #{diffpool_forward.2} parent=0 // pred_fallthru
    _
  // Predicated region
  $region22: #{diffpool_forward.2} parent=0 // pred_check
    _
  $region23: #{diffpool_forward.2} parent=0 // pred_check_branch
    %33 = sbr.rel (0) target = $region25
  $region24: #{diffpool_forward.2} parent=0 // pred_region
    _
  $region25: #{diffpool_forward.2} parent=0 // pred_fallthru
    _
  // Predicated region
  $region26: #{diffpool_forward.2} parent=0 // pred_check
    _
  $region27: #{diffpool_forward.2} parent=0 // pred_check_branch
    %35 = sbr.rel (0) target = $region29
  $region28: #{diffpool_forward.2} parent=0 // pred_region
    _
  $region29: #{diffpool_forward.2} parent=0 // pred_fallthru
    _
  // Predicated region
  $region30: #{diffpool_forward.2} parent=0 // pred_check
    _
  $region31: #{diffpool_forward.2} parent=0 // pred_check_branch
    %37 = sbr.rel (0) target = $region33
  $region32: #{diffpool_forward.2} parent=0 // pred_region
    _
  $region33: #{diffpool_forward.2} parent=0 // pred_fallthru
    _
  // Predicated region
  $region34: #{diffpool_forward.2} parent=0 // pred_check
    _
  $region35: #{diffpool_forward.2} parent=0 // pred_check_branch
    %39 = sbr.rel (0) target = $region37
  $region36: #{diffpool_forward.2} parent=0 // pred_region
    _
  $region37: #{diffpool_forward.2} parent=0 // pred_fallthru
    _
  // Predicated region
  $region38: #{diffpool_forward.2} parent=0 // pred_check
    _
  $region39: #{diffpool_forward.2} parent=0 // pred_check_branch
    %41 = sbr.rel (0) target = $region41
  $region40: #{diffpool_forward.2} parent=0 // pred_region
    _
  $region41: #{diffpool_forward.2} parent=0 // pred_fallthru
    _
  // Predicated region
  $region42: #{diffpool_forward.2} parent=0 // pred_check
    _
  $region43: #{diffpool_forward.2} parent=0 // pred_check_branch
    %43 = sbr.rel (0) target = $region45
  $region44: #{diffpool_forward.2} parent=0 // pred_region
    _
  $region45: #{diffpool_forward.2} parent=0 // pred_fallthru
    _
  // Predicated region
  $region46: #{diffpool_forward.2} parent=0 // pred_check
    _
  $region47: #{diffpool_forward.2} parent=0 // pred_check_branch
    %45 = sbr.rel (0) target = $region49
  $region48: #{diffpool_forward.2} parent=0 // pred_region
    _
  $region49: #{diffpool_forward.2} parent=0 // pred_fallthru
    _
  // Predicated region
  $region50: #{diffpool_forward.2} parent=0 // pred_check
    _
  $region51: #{diffpool_forward.2} parent=0 // pred_check_branch
    %47 = sbr.rel (0) target = $region53
  $region52: #{diffpool_forward.2} parent=0 // pred_region
    _
  $region53: #{diffpool_forward.2} parent=0 // pred_fallthru
    _
  // Predicated region
  $region54: #{diffpool_forward.2} parent=0 // pred_check
    _
  $region55: #{diffpool_forward.2} parent=0 // pred_check_branch
    %49 = sbr.rel (0) target = $region57
  $region56: #{diffpool_forward.2} parent=0 // pred_region
    _
  $region57: #{diffpool_forward.2} parent=0 // pred_fallthru
    _
  %v50 = vld [vmem:[%s0] sm:$0xff]
  %v51 = vld [vmem:[%s0 + $0x8] sm:$0xff]
  %v52 = vld [vmem:[%s0 + $0x10] sm:$0xff]
  %v53 = vld [vmem:[%s0 + $0x18] sm:$0xff]
  %v54 = vld [vmem:[%s1] sm:$0xff]
  %v55 = vld [vmem:[%s1 + $0x8] sm:$0xff]
  %v56 = vld [vmem:[%s1 + $0x10] sm:$0xff]
  %v57 = vld [vmem:[%s1 + $0x18] sm:$0xff]
  %v58 = vlaneseq
  %v59 = vshrl.u32 %v58, 7
  %v60 = vadd.s32 %v59, 8
  %v61 = vlaneseq
  %v62 = vand.u32 %v61, 127
  %vm63 = vcmp.eq.s32.totalorder %v59, %v62
  %vm64 = vcmp.eq.s32.totalorder %v60, %v62
  %v65 = vsel %vm63, 1, 0
  %v66 = vsel %vm64, 1, 0
  %v67 = vcvt.s32.f32 %v65
  %v68 = vcvt.s32.f32 %v66
  %v69 = vadd.f32 %v54, %v67
  %v70 = vadd.f32 %v55, %v68
  %v71 = vadd.f32 %v56, %v67
  %v72 = vadd.f32 %v57, %v68
  %v73 = vld [vmem:[%s2] sm:$0xff]
  %v74 = vld [vmem:[%s4] sm:$0xff]
  %v75 = vld [vmem:[%s4 + $0x8] sm:$0xff]
  %v76 = vld [vmem:[%s6] sm:$0xff]
  %v77 = vld [vmem:[%s6 + $0x8] sm:$0xff]
  %v78 = vld [vmem:[%s3] sm:$0x1]
  %v79 = vld [vmem:[%s5] sm:$0x1]
  %v80 = vld [vmem:[%s7] sm:$0x1]
  %v81 = vld [vmem:[%s8] sm:$0xff]
  %v82 = vld [vmem:[%s10] sm:$0xff]
  %v83 = vld [vmem:[%s10 + $0x8] sm:$0xff]
  %v84 = vld [vmem:[%s12] sm:$0xff]
  %v85 = vld [vmem:[%s12 + $0x8] sm:$0xff]
  %v86 = vld [vmem:[%s9] sm:$0x1]
  %v87 = vld [vmem:[%s11] sm:$0x1]
  %v88 = vld [vmem:[%s13] sm:$0x1]
  %vm89 = vcmask 130048
  %v91 = vsel %vm89, %v69, 0
  %v94 = vsel %vm89, %v70, 0
  %96 = vmatprep.subr.mxu0 0.0
  %97 = vmatpush1.msra.mxu0 %v50
  %98 = vmatprep.subr.mxu0 0.0
  %99 = vmatpush1.msra.mxu0 %v51
  %100 = vmatprep.subr.mxu0 0.0
  %101 = vmatpush1.msra.mxu0 0.0
  %102 = vmatprep.subr.mxu0 0.0
  %103 = vmatpush1.msra.mxu0 0.0
  %104 = vmatprep.subr.mxu0 0.0
  %105 = vmatpush1.msra.mxu0 0.0
  %106 = vmatprep.subr.mxu0 0.0
  %107 = vmatpush1.msra.mxu0 0.0
  %108 = vmatprep.subr.mxu0 0.0
  %109 = vmatpush1.msra.mxu0 0.0
  %110 = vmatprep.subr.mxu0 0.0
  %111 = vmatpush1.msra.mxu0 0.0
  %112 = vmatprep.subr.mxu0 0.0
  %113 = vmatpush1.msra.mxu0 0.0
  %114 = vmatprep.subr.mxu0 0.0
  %115 = vmatpush1.msra.mxu0 0.0
  %116 = vmatprep.subr.mxu0 0.0
  %117 = vmatpush1.msra.mxu0 0.0
  %118 = vmatprep.subr.mxu0 0.0
  %119 = vmatpush1.msra.mxu0 0.0
  %120 = vmatprep.subr.mxu0 0.0
  %121 = vmatpush1.msra.mxu0 0.0
  %122 = vmatprep.subr.mxu0 0.0
  %123 = vmatpush1.msra.mxu0 0.0
  %124 = vmatprep.subr.mxu0 0.0
  %125 = vmatpush1.msra.mxu0 0.0
  %126 = vmatprep.subr.mxu0 0.0
  %127 = vmatpush1.msra.mxu0 0.0
  %128 = vmatprep.subr.mxu0 0.0
  %129 = vmatpush1.msra.mxu0 0.0
  %130 = vmatprep.subr.mxu0 0.0
  %131 = vmatpush1.msra.mxu0 0.0
  %132 = vmatprep.subr.mxu0 0.0
  %133 = vmatpush1.msra.mxu0 0.0
  %134 = vmatprep.subr.mxu0 0.0
  %135 = vmatpush1.msra.mxu0 0.0
  %136 = vmatprep.subr.mxu0 0.0
  %137 = vmatpush1.msra.mxu0 0.0
  %138 = vmatprep.subr.mxu0 0.0
  %139 = vmatpush1.msra.mxu0 0.0
  %140 = vmatprep.subr.mxu0 0.0
  %141 = vmatpush1.msra.mxu0 0.0
  %142 = vmatprep.subr.mxu0 0.0
  %143 = vmatpush1.msra.mxu0 0.0
  %144 = vmatprep.subr.mxu0 0.0
  %145 = vmatpush1.msra.mxu0 0.0
  %146 = vmatprep.subr.mxu0 0.0
  %147 = vmatpush1.msra.mxu0 0.0
  %148 = vmatprep.subr.mxu0 0.0
  %149 = vmatpush1.msra.mxu0 0.0
  %150 = vmatprep.subr.mxu0 0.0
  %151 = vmatpush1.msra.mxu0 0.0
  %152 = vmatprep.subr.mxu0 0.0
  %153 = vmatpush1.msra.mxu0 0.0
  %154 = vmatprep.subr.mxu0 0.0
  %155 = vmatpush1.msra.mxu0 0.0
  %156 = vmatprep.subr.mxu0 0.0
  %157 = vmatpush1.msra.mxu0 0.0
  %158 = vmatprep.subr.mxu0 0.0
  %159 = vmatpush1.msra.mxu0 0.0
  %160 = vmatprep.mubr.f32.mxu0 0.0
  %161 = vmatmul.mubr.f32.gmra.mrb[0].mxu0 %v91
  %v162 = vpop.f32.mrb[0].mxu0
  %v163 = vadd.f32 0.0, %v162
  %v164 = vpop.f32.mrb[0].mxu0
  %165 = vmatprep.mubr.f32.mxu0 0.0
  %166 = vmatmul.mubr.f32.gmra.mrb[0].mxu0 %v94
  %v167 = vpop.f32.mrb[0].mxu0
  %v168 = vadd.f32 0.0, %v167
  %v169 = vpop.f32.mrb[0].mxu0
  %170 = vdwg.mxu0
  %v172 = vsel %vm89, %v71, 0
  %v175 = vsel %vm89, %v72, 0
  %177 = vmatprep.subr.mxu0 0.0
  %178 = vmatpush1.msra.mxu0 %v52
  %179 = vmatprep.subr.mxu0 0.0
  %180 = vmatpush1.msra.mxu0 %v53
  %181 = vmatprep.subr.mxu0 0.0
  %182 = vmatpush1.msra.mxu0 0.0
  %183 = vmatprep.subr.mxu0 0.0
  %184 = vmatpush1.msra.mxu0 0.0
  %185 = vmatprep.subr.mxu0 0.0
  %186 = vmatpush1.msra.mxu0 0.0
  %187 = vmatprep.subr.mxu0 0.0
  %188 = vmatpush1.msra.mxu0 0.0
  %189 = vmatprep.subr.mxu0 0.0
  %190 = vmatpush1.msra.mxu0 0.0
  %191 = vmatprep.subr.mxu0 0.0
  %192 = vmatpush1.msra.mxu0 0.0
  %193 = vmatprep.subr.mxu0 0.0
  %194 = vmatpush1.msra.mxu0 0.0
  %195 = vmatprep.subr.mxu0 0.0
  %196 = vmatpush1.msra.mxu0 0.0
  %197 = vmatprep.subr.mxu0 0.0
  %198 = vmatpush1.msra.mxu0 0.0
  %199 = vmatprep.subr.mxu0 0.0
  %200 = vmatpush1.msra.mxu0 0.0
  %201 = vmatprep.subr.mxu0 0.0
  %202 = vmatpush1.msra.mxu0 0.0
  %203 = vmatprep.subr.mxu0 0.0
  %204 = vmatpush1.msra.mxu0 0.0
  %205 = vmatprep.subr.mxu0 0.0
  %206 = vmatpush1.msra.mxu0 0.0
  %207 = vmatprep.subr.mxu0 0.0
  %208 = vmatpush1.msra.mxu0 0.0
  %209 = vmatprep.subr.mxu0 0.0
  %210 = vmatpush1.msra.mxu0 0.0
  %211 = vmatprep.subr.mxu0 0.0
  %212 = vmatpush1.msra.mxu0 0.0
  %213 = vmatprep.subr.mxu0 0.0
  %214 = vmatpush1.msra.mxu0 0.0
  %215 = vmatprep.subr.mxu0 0.0
  %216 = vmatpush1.msra.mxu0 0.0
  %217 = vmatprep.subr.mxu0 0.0
  %218 = vmatpush1.msra.mxu0 0.0
  %219 = vmatprep.subr.mxu0 0.0
  %220 = vmatpush1.msra.mxu0 0.0
  %221 = vmatprep.subr.mxu0 0.0
  %222 = vmatpush1.msra.mxu0 0.0
  %223 = vmatprep.subr.mxu0 0.0
  %224 = vmatpush1.msra.mxu0 0.0
  %225 = vmatprep.subr.mxu0 0.0
  %226 = vmatpush1.msra.mxu0 0.0
  %227 = vmatprep.subr.mxu0 0.0
  %228 = vmatpush1.msra.mxu0 0.0
  %229 = vmatprep.subr.mxu0 0.0
  %230 = vmatpush1.msra.mxu0 0.0
  %231 = vmatprep.subr.mxu0 0.0
  %232 = vmatpush1.msra.mxu0 0.0
  %233 = vmatprep.subr.mxu0 0.0
  %234 = vmatpush1.msra.mxu0 0.0
  %235 = vmatprep.subr.mxu0 0.0
  %236 = vmatpush1.msra.mxu0 0.0
  %237 = vmatprep.subr.mxu0 0.0
  %238 = vmatpush1.msra.mxu0 0.0
  %239 = vmatprep.subr.mxu0 0.0
  %240 = vmatpush1.msra.mxu0 0.0
  %241 = vmatprep.mubr.f32.mxu0 0.0
  %242 = vmatmul.mubr.f32.gmra.mrb[0].mxu0 %v172
  %v243 = vpop.f32.mrb[0].mxu0
  %v244 = vadd.f32 0.0, %v243
  %v245 = vpop.f32.mrb[0].mxu0
  %246 = vmatprep.mubr.f32.mxu0 0.0
  %247 = vmatmul.mubr.f32.gmra.mrb[0].mxu0 %v175
  %v248 = vpop.f32.mrb[0].mxu0
  %v249 = vadd.f32 0.0, %v248
  %v250 = vpop.f32.mrb[0].mxu0
  %251 = vdwg.mxu0
  %v253 = vlaneseq
  %v254 = vshrl.u32 %v253, 7
  %v255 = vsub.s32 0, %v254
  %v256 = vrot.slane %v78, %v255
  %vm258 = vcmask 64512
  %v260 = vsel %vm258, %v163, 0
  %v263 = vsel %vm258, %v168, 0
  %v266 = vsel %vm258, %v244, 0
  %v269 = vsel %vm258, %v249, 0
  %271 = vmatprep.subr.mxu0 0.0
  %272 = vmatpush1.msra.mxu0 %v73
  %273 = vmatprep.subr.mxu0 0.0
  %274 = vmatpush1.msra.mxu0 0.0
  %275 = vmatprep.subr.mxu0 0.0
  %276 = vmatpush1.msra.mxu0 0.0
  %277 = vmatprep.subr.mxu0 0.0
  %278 = vmatpush1.msra.mxu0 0.0
  %279 = vmatprep.subr.mxu0 0.0
  %280 = vmatpush1.msra.mxu0 0.0
  %281 = vmatprep.subr.mxu0 0.0
  %282 = vmatpush1.msra.mxu0 0.0
  %283 = vmatprep.subr.mxu0 0.0
  %284 = vmatpush1.msra.mxu0 0.0
  %285 = vmatprep.subr.mxu0 0.0
  %286 = vmatpush1.msra.mxu0 0.0
  %287 = vmatprep.subr.mxu0 0.0
  %288 = vmatpush1.msra.mxu0 0.0
  %289 = vmatprep.subr.mxu0 0.0
  %290 = vmatpush1.msra.mxu0 0.0
  %291 = vmatprep.subr.mxu0 0.0
  %292 = vmatpush1.msra.mxu0 0.0
  %293 = vmatprep.subr.mxu0 0.0
  %294 = vmatpush1.msra.mxu0 0.0
  %295 = vmatprep.subr.mxu0 0.0
  %296 = vmatpush1.msra.mxu0 0.0
  %297 = vmatprep.subr.mxu0 0.0
  %298 = vmatpush1.msra.mxu0 0.0
  %299 = vmatprep.subr.mxu0 0.0
  %300 = vmatpush1.msra.mxu0 0.0
  %301 = vmatprep.subr.mxu0 0.0
  %302 = vmatpush1.msra.mxu0 0.0
  %303 = vmatprep.subr.mxu0 0.0
  %304 = vmatpush1.msra.mxu0 0.0
  %305 = vmatprep.subr.mxu0 0.0
  %306 = vmatpush1.msra.mxu0 0.0
  %307 = vmatprep.subr.mxu0 0.0
  %308 = vmatpush1.msra.mxu0 0.0
  %309 = vmatprep.subr.mxu0 0.0
  %310 = vmatpush1.msra.mxu0 0.0
  %311 = vmatprep.subr.mxu0 0.0
  %312 = vmatpush1.msra.mxu0 0.0
  %313 = vmatprep.subr.mxu0 0.0
  %314 = vmatpush1.msra.mxu0 0.0
  %315 = vmatprep.subr.mxu0 0.0
  %316 = vmatpush1.msra.mxu0 0.0
  %317 = vmatprep.subr.mxu0 0.0
  %318 = vmatpush1.msra.mxu0 0.0
  %319 = vmatprep.subr.mxu0 0.0
  %320 = vmatpush1.msra.mxu0 0.0
  %321 = vmatprep.subr.mxu0 0.0
  %322 = vmatpush1.msra.mxu0 0.0
  %323 = vmatprep.subr.mxu0 0.0
  %324 = vmatpush1.msra.mxu0 0.0
  %325 = vmatprep.subr.mxu0 0.0
  %326 = vmatpush1.msra.mxu0 0.0
  %327 = vmatprep.subr.mxu0 0.0
  %328 = vmatpush1.msra.mxu0 0.0
  %329 = vmatprep.subr.mxu0 0.0
  %330 = vmatpush1.msra.mxu0 0.0
  %331 = vmatprep.subr.mxu0 0.0
  %332 = vmatpush1.msra.mxu0 0.0
  %333 = vmatprep.subr.mxu0 0.0
  %334 = vmatpush1.msra.mxu0 0.0
  %335 = vmatprep.mubr.f32.mxu0 0.0
  %336 = vmatmul.mubr.f32.gmra.mrb[0].mxu0 %v260
  %v337 = vpop.f32.mrb[0].mxu0
  %v338 = vadd.f32 %v256, %v337
  %v339 = vpop.f32.mrb[0].mxu0
  %340 = vmatprep.mubr.f32.mxu0 0.0
  %341 = vmatmul.mubr.f32.gmra.mrb[0].mxu0 %v263
  %v342 = vpop.f32.mrb[0].mxu0
  %v343 = vadd.f32 %v256, %v342
  %v344 = vpop.f32.mrb[0].mxu0
  %345 = vmatprep.mubr.f32.mxu0 0.0
  %346 = vmatmul.mubr.f32.gmra.mrb[0].mxu0 %v266
  %v347 = vpop.f32.mrb[0].mxu0
  %v348 = vadd.f32 %v256, %v347
  %v349 = vpop.f32.mrb[0].mxu0
  %350 = vmatprep.mubr.f32.mxu0 0.0
  %351 = vmatmul.mubr.f32.gmra.mrb[0].mxu0 %v269
  %v352 = vpop.f32.mrb[0].mxu0
  %v353 = vadd.f32 %v256, %v352
  %v354 = vpop.f32.mrb[0].mxu0
  %355 = vdwg.mxu0
  %v356 = vmul.f32 %v338, %v338
  %v357 = vmul.f32 %v343, %v343
  %v358 = vmul.f32 %v348, %v348
  %v359 = vmul.f32 %v353, %v353
  %v360 = vsel %vm89, %v356, 0.0
  %361 = vadd.xlane.f32.xlu0 %v360
  %v362 = vpop.xlane.xlu0 %361
  %v363 = vsel %vm89, %v357, 0.0
  %364 = vadd.xlane.f32.xlu0 %v363
  %v365 = vpop.xlane.xlu0 %364
  %v366 = vsel %vm89, %v358, 0.0
  %367 = vadd.xlane.f32.xlu0 %v366
  %v368 = vpop.xlane.xlu0 %367
  %v369 = vsel %vm89, %v359, 0.0
  %370 = vadd.xlane.f32.xlu0 %v369
  %v371 = vpop.xlane.xlu0 %370
  %v372 = vrsqrt.pop %v362
  %v373 = vrsqrt.pop %v365
  %v374 = vrsqrt.pop %v368
  %v375 = vrsqrt.pop %v371
  %v376 = vmin.f32 %v372, 1e+12
  %v377 = vmin.f32 %v373, 1e+12
  %v378 = vmin.f32 %v374, 1e+12
  %v379 = vmin.f32 %v375, 1e+12
  %v380 = vmul.f32 %v338, %v376
  %v381 = vmul.f32 %v343, %v377
  %v382 = vmul.f32 %v348, %v378
  %v383 = vmul.f32 %v353, %v379
  %v384 = vmax.f32 %v380, 0.0
  %v385 = vmax.f32 %v381, 0.0
  %v386 = vmax.f32 %v382, 0.0
  %v387 = vmax.f32 %v383, 0.0
  %v388 = vsel %vm89, %v384, 0.0
  %v389 = vsel %vm89, %v386, 0.0
  %v390 = vadd.f32 %v388, %v389
  %391 = vadd.xlane.f32.xlu0 %v390
  %v392 = vpop.xlane.xlu0 %391
  %v393 = vsel %vm89, %v385, 0.0
  %v394 = vsel %vm89, %v387, 0.0
  %v395 = vadd.f32 %v393, %v394
  %396 = vadd.xlane.f32.xlu0 %v395
  %v397 = vpop.xlane.xlu0 %396
  %v398 = vrcp.pop 32.0
  %v399 = vmul.f32 %v392, %v398
  %v400 = vmul.f32 %v397, %v398
  %v401 = vsub.f32 %v384, %v399
  %v402 = vsub.f32 %v385, %v400
  %v403 = vsub.f32 %v386, %v399
  %v404 = vsub.f32 %v387, %v400
  %v405 = vmul.f32 %v401, %v401
  %v406 = vmul.f32 %v402, %v402
  %v407 = vmul.f32 %v403, %v403
  %v408 = vmul.f32 %v404, %v404
  %v409 = vsel %vm89, %v405, 0.0
  %v410 = vsel %vm89, %v407, 0.0
  %v411 = vadd.f32 %v409, %v410
  %412 = vadd.xlane.f32.xlu0 %v411
  %v413 = vpop.xlane.xlu0 %412
  %v414 = vsel %vm89, %v406, 0.0
  %v415 = vsel %vm89, %v408, 0.0
  %v416 = vadd.f32 %v414, %v415
  %417 = vadd.xlane.f32.xlu0 %v416
  %v418 = vpop.xlane.xlu0 %417
  %v419 = vmul.f32 %v413, %v398
  %v420 = vmul.f32 %v418, %v398
  %v421 = vadd.f32 %v419, 1e-05
  %v422 = vadd.f32 %v420, 1e-05
  %v423 = vrsqrt.pop %v421
  %v424 = vrsqrt.pop %v422
  %v425 = vmul.f32 %v401, %v423
  %v426 = vmul.f32 %v402, %v424
  %v427 = vmul.f32 %v403, %v423
  %v428 = vmul.f32 %v404, %v424
  %429 = vmatprep.subr.mxu0 0.0
  %430 = vmatpush1.msra.mxu0 %v425
  %431 = vmatprep.subr.mxu0 0.0
  %432 = vmatpush1.msra.mxu0 %v426
  %433 = vmatprep.subr.mxu0 0.0
  %434 = vmatpush1.msra.mxu0 0.0
  %435 = vmatprep.subr.mxu0 0.0
  %436 = vmatpush1.msra.mxu0 0.0
  %437 = vmatprep.subr.mxu0 0.0
  %438 = vmatpush1.msra.mxu0 0.0
  %439 = vmatprep.subr.mxu0 0.0
  %440 = vmatpush1.msra.mxu0 0.0
  %441 = vmatprep.subr.mxu0 0.0
  %442 = vmatpush1.msra.mxu0 0.0
  %443 = vmatprep.subr.mxu0 0.0
  %444 = vmatpush1.msra.mxu0 0.0
  %445 = vmatprep.subr.mxu0 0.0
  %446 = vmatpush1.msra.mxu0 0.0
  %447 = vmatprep.subr.mxu0 0.0
  %448 = vmatpush1.msra.mxu0 0.0
  %449 = vmatprep.subr.mxu0 0.0
  %450 = vmatpush1.msra.mxu0 0.0
  %451 = vmatprep.subr.mxu0 0.0
  %452 = vmatpush1.msra.mxu0 0.0
  %453 = vmatprep.subr.mxu0 0.0
  %454 = vmatpush1.msra.mxu0 0.0
  %455 = vmatprep.subr.mxu0 0.0
  %456 = vmatpush1.msra.mxu0 0.0
  %457 = vmatprep.subr.mxu0 0.0
  %458 = vmatpush1.msra.mxu0 0.0
  %459 = vmatprep.subr.mxu0 0.0
  %460 = vmatpush1.msra.mxu0 0.0
  %461 = vmatprep.subr.mxu0 0.0
  %462 = vmatpush1.msra.mxu0 0.0
  %463 = vmatprep.subr.mxu0 0.0
  %464 = vmatpush1.msra.mxu0 0.0
  %465 = vmatprep.subr.mxu0 0.0
  %466 = vmatpush1.msra.mxu0 0.0
  %467 = vmatprep.subr.mxu0 0.0
  %468 = vmatpush1.msra.mxu0 0.0
  %469 = vmatprep.subr.mxu0 0.0
  %470 = vmatpush1.msra.mxu0 0.0
  %471 = vmatprep.subr.mxu0 0.0
  %472 = vmatpush1.msra.mxu0 0.0
  %473 = vmatprep.subr.mxu0 0.0
  %474 = vmatpush1.msra.mxu0 0.0
  %475 = vmatprep.subr.mxu0 0.0
  %476 = vmatpush1.msra.mxu0 0.0
  %477 = vmatprep.subr.mxu0 0.0
  %478 = vmatpush1.msra.mxu0 0.0
  %479 = vmatprep.subr.mxu0 0.0
  %480 = vmatpush1.msra.mxu0 0.0
  %481 = vmatprep.subr.mxu0 0.0
  %482 = vmatpush1.msra.mxu0 0.0
  %483 = vmatprep.subr.mxu0 0.0
  %484 = vmatpush1.msra.mxu0 0.0
  %485 = vmatprep.subr.mxu0 0.0
  %486 = vmatpush1.msra.mxu0 0.0
  %487 = vmatprep.subr.mxu0 0.0
  %488 = vmatpush1.msra.mxu0 0.0
  %489 = vmatprep.subr.mxu0 0.0
  %490 = vmatpush1.msra.mxu0 0.0
  %491 = vmatprep.subr.mxu0 0.0
  %492 = vmatpush1.msra.mxu0 0.0
  %493 = vmatprep.mubr.f32.mxu0 0.0
  %494 = vmatmul.mubr.f32.gmra.mrb[0].mxu0 %v91
  %v495 = vpop.f32.mrb[0].mxu0
  %v496 = vadd.f32 0.0, %v495
  %v497 = vpop.f32.mrb[0].mxu0
  %498 = vmatprep.mubr.f32.mxu0 0.0
  %499 = vmatmul.mubr.f32.gmra.mrb[0].mxu0 %v94
  %v500 = vpop.f32.mrb[0].mxu0
  %v501 = vadd.f32 0.0, %v500
  %v502 = vpop.f32.mrb[0].mxu0
  %503 = vdwg.mxu0
  %504 = vmatprep.subr.mxu0 0.0
  %505 = vmatpush1.msra.mxu0 %v427
  %506 = vmatprep.subr.mxu0 0.0
  %507 = vmatpush1.msra.mxu0 %v428
  %508 = vmatprep.subr.mxu0 0.0
  %509 = vmatpush1.msra.mxu0 0.0
  %510 = vmatprep.subr.mxu0 0.0
  %511 = vmatpush1.msra.mxu0 0.0
  %512 = vmatprep.subr.mxu0 0.0
  %513 = vmatpush1.msra.mxu0 0.0
  %514 = vmatprep.subr.mxu0 0.0
  %515 = vmatpush1.msra.mxu0 0.0
  %516 = vmatprep.subr.mxu0 0.0
  %517 = vmatpush1.msra.mxu0 0.0
  %518 = vmatprep.subr.mxu0 0.0
  %519 = vmatpush1.msra.mxu0 0.0
  %520 = vmatprep.subr.mxu0 0.0
  %521 = vmatpush1.msra.mxu0 0.0
  %522 = vmatprep.subr.mxu0 0.0
  %523 = vmatpush1.msra.mxu0 0.0
  %524 = vmatprep.subr.mxu0 0.0
  %525 = vmatpush1.msra.mxu0 0.0
  %526 = vmatprep.subr.mxu0 0.0
  %527 = vmatpush1.msra.mxu0 0.0
  %528 = vmatprep.subr.mxu0 0.0
  %529 = vmatpush1.msra.mxu0 0.0
  %530 = vmatprep.subr.mxu0 0.0
  %531 = vmatpush1.msra.mxu0 0.0
  %532 = vmatprep.subr.mxu0 0.0
  %533 = vmatpush1.msra.mxu0 0.0
  %534 = vmatprep.subr.mxu0 0.0
  %535 = vmatpush1.msra.mxu0 0.0
  %536 = vmatprep.subr.mxu0 0.0
  %537 = vmatpush1.msra.mxu0 0.0
  %538 = vmatprep.subr.mxu0 0.0
  %539 = vmatpush1.msra.mxu0 0.0
  %540 = vmatprep.subr.mxu0 0.0
  %541 = vmatpush1.msra.mxu0 0.0
  %542 = vmatprep.subr.mxu0 0.0
  %543 = vmatpush1.msra.mxu0 0.0
  %544 = vmatprep.subr.mxu0 0.0
  %545 = vmatpush1.msra.mxu0 0.0
  %546 = vmatprep.subr.mxu0 0.0
  %547 = vmatpush1.msra.mxu0 0.0
  %548 = vmatprep.subr.mxu0 0.0
  %549 = vmatpush1.msra.mxu0 0.0
  %550 = vmatprep.subr.mxu0 0.0
  %551 = vmatpush1.msra.mxu0 0.0
  %552 = vmatprep.subr.mxu0 0.0
  %553 = vmatpush1.msra.mxu0 0.0
  %554 = vmatprep.subr.mxu0 0.0
  %555 = vmatpush1.msra.mxu0 0.0
  %556 = vmatprep.subr.mxu0 0.0
  %557 = vmatpush1.msra.mxu0 0.0
  %558 = vmatprep.subr.mxu0 0.0
  %559 = vmatpush1.msra.mxu0 0.0
  %560 = vmatprep.subr.mxu0 0.0
  %561 = vmatpush1.msra.mxu0 0.0
  %562 = vmatprep.subr.mxu0 0.0
  %563 = vmatpush1.msra.mxu0 0.0
  %564 = vmatprep.subr.mxu0 0.0
  %565 = vmatpush1.msra.mxu0 0.0
  %566 = vmatprep.subr.mxu0 0.0
  %567 = vmatpush1.msra.mxu0 0.0
  %568 = vmatprep.mubr.f32.mxu0 0.0
  %569 = vmatmul.mubr.f32.gmra.mrb[0].mxu0 %v172
  %v570 = vpop.f32.mrb[0].mxu0
  %v571 = vadd.f32 0.0, %v570
  %v572 = vpop.f32.mrb[0].mxu0
  %573 = vmatprep.mubr.f32.mxu0 0.0
  %574 = vmatmul.mubr.f32.gmra.mrb[0].mxu0 %v175
  %v575 = vpop.f32.mrb[0].mxu0
  %v576 = vadd.f32 0.0, %v575
  %v577 = vpop.f32.mrb[0].mxu0
  %578 = vdwg.mxu0
  %v580 = vlaneseq
  %v581 = vshrl.u32 %v580, 7
  %v582 = vsub.s32 0, %v581
  %v583 = vrot.slane %v79, %v582
  %v586 = vsel %vm89, %v496, 0
  %v589 = vsel %vm89, %v501, 0
  %v592 = vsel %vm89, %v571, 0
  %v595 = vsel %vm89, %v576, 0
  %597 = vmatprep.subr.mxu0 0.0
  %598 = vmatpush1.msra.mxu0 %v74
  %599 = vmatprep.subr.mxu0 0.0
  %600 = vmatpush1.msra.mxu0 %v75
  %601 = vmatprep.subr.mxu0 0.0
  %602 = vmatpush1.msra.mxu0 0.0
  %603 = vmatprep.subr.mxu0 0.0
  %604 = vmatpush1.msra.mxu0 0.0
  %605 = vmatprep.subr.mxu0 0.0
  %606 = vmatpush1.msra.mxu0 0.0
  %607 = vmatprep.subr.mxu0 0.0
  %608 = vmatpush1.msra.mxu0 0.0
  %609 = vmatprep.subr.mxu0 0.0
  %610 = vmatpush1.msra.mxu0 0.0
  %611 = vmatprep.subr.mxu0 0.0
  %612 = vmatpush1.msra.mxu0 0.0
  %613 = vmatprep.subr.mxu0 0.0
  %614 = vmatpush1.msra.mxu0 0.0
  %615 = vmatprep.subr.mxu0 0.0
  %616 = vmatpush1.msra.mxu0 0.0
  %617 = vmatprep.subr.mxu0 0.0
  %618 = vmatpush1.msra.mxu0 0.0
  %619 = vmatprep.subr.mxu0 0.0
  %620 = vmatpush1.msra.mxu0 0.0
  %621 = vmatprep.subr.mxu0 0.0
  %622 = vmatpush1.msra.mxu0 0.0
  %623 = vmatprep.subr.mxu0 0.0
  %624 = vmatpush1.msra.mxu0 0.0
  %625 = vmatprep.subr.mxu0 0.0
  %626 = vmatpush1.msra.mxu0 0.0
  %627 = vmatprep.subr.mxu0 0.0
  %628 = vmatpush1.msra.mxu0 0.0
  %629 = vmatprep.subr.mxu0 0.0
  %630 = vmatpush1.msra.mxu0 0.0
  %631 = vmatprep.subr.mxu0 0.0
  %632 = vmatpush1.msra.mxu0 0.0
  %633 = vmatprep.subr.mxu0 0.0
  %634 = vmatpush1.msra.mxu0 0.0
  %635 = vmatprep.subr.mxu0 0.0
  %636 = vmatpush1.msra.mxu0 0.0
  %637 = vmatprep.subr.mxu0 0.0
  %638 = vmatpush1.msra.mxu0 0.0
  %639 = vmatprep.subr.mxu0 0.0
  %640 = vmatpush1.msra.mxu0 0.0
  %641 = vmatprep.subr.mxu0 0.0
  %642 = vmatpush1.msra.mxu0 0.0
  %643 = vmatprep.subr.mxu0 0.0
  %644 = vmatpush1.msra.mxu0 0.0
  %645 = vmatprep.subr.mxu0 0.0
  %646 = vmatpush1.msra.mxu0 0.0
  %647 = vmatprep.subr.mxu0 0.0
  %648 = vmatpush1.msra.mxu0 0.0
  %649 = vmatprep.subr.mxu0 0.0
  %650 = vmatpush1.msra.mxu0 0.0
  %651 = vmatprep.subr.mxu0 0.0
  %652 = vmatpush1.msra.mxu0 0.0
  %653 = vmatprep.subr.mxu0 0.0
  %654 = vmatpush1.msra.mxu0 0.0
  %655 = vmatprep.subr.mxu0 0.0
  %656 = vmatpush1.msra.mxu0 0.0
  %657 = vmatprep.subr.mxu0 0.0
  %658 = vmatpush1.msra.mxu0 0.0
  %659 = vmatprep.subr.mxu0 0.0
  %660 = vmatpush1.msra.mxu0 0.0
  %661 = vmatprep.mubr.f32.mxu0 0.0
  %662 = vmatmul.mubr.f32.gmra.mrb[0].mxu0 %v586
  %v663 = vpop.f32.mrb[0].mxu0
  %v664 = vadd.f32 %v583, %v663
  %v665 = vpop.f32.mrb[0].mxu0
  %666 = vmatprep.mubr.f32.mxu0 0.0
  %667 = vmatmul.mubr.f32.gmra.mrb[0].mxu0 %v589
  %v668 = vpop.f32.mrb[0].mxu0
  %v669 = vadd.f32 %v583, %v668
  %v670 = vpop.f32.mrb[0].mxu0
  %671 = vmatprep.mubr.f32.mxu0 0.0
  %672 = vmatmul.mubr.f32.gmra.mrb[0].mxu0 %v592
  %v673 = vpop.f32.mrb[0].mxu0
  %v674 = vadd.f32 %v583, %v673
  %v675 = vpop.f32.mrb[0].mxu0
  %676 = vmatprep.mubr.f32.mxu0 0.0
  %677 = vmatmul.mubr.f32.gmra.mrb[0].mxu0 %v595
  %v678 = vpop.f32.mrb[0].mxu0
  %v679 = vadd.f32 %v583, %v678
  %v680 = vpop.f32.mrb[0].mxu0
  %681 = vdwg.mxu0
  %v682 = vmul.f32 %v664, %v664
  %v683 = vmul.f32 %v669, %v669
  %v684 = vmul.f32 %v674, %v674
  %v685 = vmul.f32 %v679, %v679
  %v686 = vsel %vm89, %v682, 0.0
  %687 = vadd.xlane.f32.xlu0 %v686
  %v688 = vpop.xlane.xlu0 %687
  %v689 = vsel %vm89, %v683, 0.0
  %690 = vadd.xlane.f32.xlu0 %v689
  %v691 = vpop.xlane.xlu0 %690
  %v692 = vsel %vm89, %v684, 0.0
  %693 = vadd.xlane.f32.xlu0 %v692
  %v694 = vpop.xlane.xlu0 %693
  %v695 = vsel %vm89, %v685, 0.0
  %696 = vadd.xlane.f32.xlu0 %v695
  %v697 = vpop.xlane.xlu0 %696
  %v698 = vrsqrt.pop %v688
  %v699 = vrsqrt.pop %v691
  %v700 = vrsqrt.pop %v694
  %v701 = vrsqrt.pop %v697
  %v702 = vmin.f32 %v698, 1e+12
  %v703 = vmin.f32 %v699, 1e+12
  %v704 = vmin.f32 %v700, 1e+12
  %v705 = vmin.f32 %v701, 1e+12
  %v706 = vmul.f32 %v664, %v702
  %v707 = vmul.f32 %v669, %v703
  %v708 = vmul.f32 %v674, %v704
  %v709 = vmul.f32 %v679, %v705
  %v710 = vmax.f32 %v706, 0.0
  %v711 = vmax.f32 %v707, 0.0
  %v712 = vmax.f32 %v708, 0.0
  %v713 = vmax.f32 %v709, 0.0
  %v714 = vsel %vm89, %v710, 0.0
  %v715 = vsel %vm89, %v712, 0.0
  %v716 = vadd.f32 %v714, %v715
  %717 = vadd.xlane.f32.xlu0 %v716
  %v718 = vpop.xlane.xlu0 %717
  %v719 = vsel %vm89, %v711, 0.0
  %v720 = vsel %vm89, %v713, 0.0
  %v721 = vadd.f32 %v719, %v720
  %722 = vadd.xlane.f32.xlu0 %v721
  %v723 = vpop.xlane.xlu0 %722
  %v724 = vmul.f32 %v718, %v398
  %v725 = vmul.f32 %v723, %v398
  %v726 = vsub.f32 %v710, %v724
  %v727 = vsub.f32 %v711, %v725
  %v728 = vsub.f32 %v712, %v724
  %v729 = vsub.f32 %v713, %v725
  %v730 = vmul.f32 %v726, %v726
  %v731 = vmul.f32 %v727, %v727
  %v732 = vmul.f32 %v728, %v728
  %v733 = vmul.f32 %v729, %v729
  %v734 = vsel %vm89, %v730, 0.0
  %v735 = vsel %vm89, %v732, 0.0
  %v736 = vadd.f32 %v734, %v735
  %737 = vadd.xlane.f32.xlu0 %v736
  %v738 = vpop.xlane.xlu0 %737
  %v739 = vsel %vm89, %v731, 0.0
  %v740 = vsel %vm89, %v733, 0.0
  %v741 = vadd.f32 %v739, %v740
  %742 = vadd.xlane.f32.xlu0 %v741
  %v743 = vpop.xlane.xlu0 %742
  %v744 = vmul.f32 %v738, %v398
  %v745 = vmul.f32 %v743, %v398
  %v746 = vadd.f32 %v744, 1e-05
  %v747 = vadd.f32 %v745, 1e-05
  %v748 = vrsqrt.pop %v746
  %v749 = vrsqrt.pop %v747
  %v750 = vmul.f32 %v726, %v748
  %v751 = vmul.f32 %v727, %v749
  %v752 = vmul.f32 %v728, %v748
  %v753 = vmul.f32 %v729, %v749
  %754 = vmatprep.subr.mxu0 0.0
  %755 = vmatpush1.msra.mxu0 %v750
  %756 = vmatprep.subr.mxu0 0.0
  %757 = vmatpush1.msra.mxu0 %v751
  %758 = vmatprep.subr.mxu0 0.0
  %759 = vmatpush1.msra.mxu0 0.0
  %760 = vmatprep.subr.mxu0 0.0
  %761 = vmatpush1.msra.mxu0 0.0
  %762 = vmatprep.subr.mxu0 0.0
  %763 = vmatpush1.msra.mxu0 0.0
  %764 = vmatprep.subr.mxu0 0.0
  %765 = vmatpush1.msra.mxu0 0.0
  %766 = vmatprep.subr.mxu0 0.0
  %767 = vmatpush1.msra.mxu0 0.0
  %768 = vmatprep.subr.mxu0 0.0
  %769 = vmatpush1.msra.mxu0 0.0
  %770 = vmatprep.subr.mxu0 0.0
  %771 = vmatpush1.msra.mxu0 0.0
  %772 = vmatprep.subr.mxu0 0.0
  %773 = vmatpush1.msra.mxu0 0.0
  %774 = vmatprep.subr.mxu0 0.0
  %775 = vmatpush1.msra.mxu0 0.0
  %776 = vmatprep.subr.mxu0 0.0
  %777 = vmatpush1.msra.mxu0 0.0
  %778 = vmatprep.subr.mxu0 0.0
  %779 = vmatpush1.msra.mxu0 0.0
  %780 = vmatprep.subr.mxu0 0.0
  %781 = vmatpush1.msra.mxu0 0.0
  %782 = vmatprep.subr.mxu0 0.0
  %783 = vmatpush1.msra.mxu0 0.0
  %784 = vmatprep.subr.mxu0 0.0
  %785 = vmatpush1.msra.mxu0 0.0
  %786 = vmatprep.subr.mxu0 0.0
  %787 = vmatpush1.msra.mxu0 0.0
  %788 = vmatprep.subr.mxu0 0.0
  %789 = vmatpush1.msra.mxu0 0.0
  %790 = vmatprep.subr.mxu0 0.0
  %791 = vmatpush1.msra.mxu0 0.0
  %792 = vmatprep.subr.mxu0 0.0
  %793 = vmatpush1.msra.mxu0 0.0
  %794 = vmatprep.subr.mxu0 0.0
  %795 = vmatpush1.msra.mxu0 0.0
  %796 = vmatprep.subr.mxu0 0.0
  %797 = vmatpush1.msra.mxu0 0.0
  %798 = vmatprep.subr.mxu0 0.0
  %799 = vmatpush1.msra.mxu0 0.0
  %800 = vmatprep.subr.mxu0 0.0
  %801 = vmatpush1.msra.mxu0 0.0
  %802 = vmatprep.subr.mxu0 0.0
  %803 = vmatpush1.msra.mxu0 0.0
  %804 = vmatprep.subr.mxu0 0.0
  %805 = vmatpush1.msra.mxu0 0.0
  %806 = vmatprep.subr.mxu0 0.0
  %807 = vmatpush1.msra.mxu0 0.0
  %808 = vmatprep.subr.mxu0 0.0
  %809 = vmatpush1.msra.mxu0 0.0
  %810 = vmatprep.subr.mxu0 0.0
  %811 = vmatpush1.msra.mxu0 0.0
  %812 = vmatprep.subr.mxu0 0.0
  %813 = vmatpush1.msra.mxu0 0.0
  %814 = vmatprep.subr.mxu0 0.0
  %815 = vmatpush1.msra.mxu0 0.0
  %816 = vmatprep.subr.mxu0 0.0
  %817 = vmatpush1.msra.mxu0 0.0
  %818 = vmatprep.mubr.f32.mxu0 0.0
  %819 = vmatmul.mubr.f32.gmra.mrb[0].mxu0 %v91
  %v820 = vpop.f32.mrb[0].mxu0
  %v821 = vadd.f32 0.0, %v820
  %v822 = vpop.f32.mrb[0].mxu0
  %823 = vmatprep.mubr.f32.mxu0 0.0
  %824 = vmatmul.mubr.f32.gmra.mrb[0].mxu0 %v94
  %v825 = vpop.f32.mrb[0].mxu0
  %v826 = vadd.f32 0.0, %v825
  %v827 = vpop.f32.mrb[0].mxu0
  %828 = vdwg.mxu0
  %829 = vmatprep.subr.mxu0 0.0
  %830 = vmatpush1.msra.mxu0 %v752
  %831 = vmatprep.subr.mxu0 0.0
  %832 = vmatpush1.msra.mxu0 %v753
  %833 = vmatprep.subr.mxu0 0.0
  %834 = vmatpush1.msra.mxu0 0.0
  %835 = vmatprep.subr.mxu0 0.0
  %836 = vmatpush1.msra.mxu0 0.0
  %837 = vmatprep.subr.mxu0 0.0
  %838 = vmatpush1.msra.mxu0 0.0
  %839 = vmatprep.subr.mxu0 0.0
  %840 = vmatpush1.msra.mxu0 0.0
  %841 = vmatprep.subr.mxu0 0.0
  %842 = vmatpush1.msra.mxu0 0.0
  %843 = vmatprep.subr.mxu0 0.0
  %844 = vmatpush1.msra.mxu0 0.0
  %845 = vmatprep.subr.mxu0 0.0
  %846 = vmatpush1.msra.mxu0 0.0
  %847 = vmatprep.subr.mxu0 0.0
  %848 = vmatpush1.msra.mxu0 0.0
  %849 = vmatprep.subr.mxu0 0.0
  %850 = vmatpush1.msra.mxu0 0.0
  %851 = vmatprep.subr.mxu0 0.0
  %852 = vmatpush1.msra.mxu0 0.0
  %853 = vmatprep.subr.mxu0 0.0
  %854 = vmatpush1.msra.mxu0 0.0
  %855 = vmatprep.subr.mxu0 0.0
  %856 = vmatpush1.msra.mxu0 0.0
  %857 = vmatprep.subr.mxu0 0.0
  %858 = vmatpush1.msra.mxu0 0.0
  %859 = vmatprep.subr.mxu0 0.0
  %860 = vmatpush1.msra.mxu0 0.0
  %861 = vmatprep.subr.mxu0 0.0
  %862 = vmatpush1.msra.mxu0 0.0
  %863 = vmatprep.subr.mxu0 0.0
  %864 = vmatpush1.msra.mxu0 0.0
  %865 = vmatprep.subr.mxu0 0.0
  %866 = vmatpush1.msra.mxu0 0.0
  %867 = vmatprep.subr.mxu0 0.0
  %868 = vmatpush1.msra.mxu0 0.0
  %869 = vmatprep.subr.mxu0 0.0
  %870 = vmatpush1.msra.mxu0 0.0
  %871 = vmatprep.subr.mxu0 0.0
  %872 = vmatpush1.msra.mxu0 0.0
  %873 = vmatprep.subr.mxu0 0.0
  %874 = vmatpush1.msra.mxu0 0.0
  %875 = vmatprep.subr.mxu0 0.0
  %876 = vmatpush1.msra.mxu0 0.0
  %877 = vmatprep.subr.mxu0 0.0
  %878 = vmatpush1.msra.mxu0 0.0
  %879 = vmatprep.subr.mxu0 0.0
  %880 = vmatpush1.msra.mxu0 0.0
  %881 = vmatprep.subr.mxu0 0.0
  %882 = vmatpush1.msra.mxu0 0.0
  %883 = vmatprep.subr.mxu0 0.0
  %884 = vmatpush1.msra.mxu0 0.0
  %885 = vmatprep.subr.mxu0 0.0
  %886 = vmatpush1.msra.mxu0 0.0
  %887 = vmatprep.subr.mxu0 0.0
  %888 = vmatpush1.msra.mxu0 0.0
  %889 = vmatprep.subr.mxu0 0.0
  %890 = vmatpush1.msra.mxu0 0.0
  %891 = vmatprep.subr.mxu0 0.0
  %892 = vmatpush1.msra.mxu0 0.0
  %893 = vmatprep.mubr.f32.mxu0 0.0
  %894 = vmatmul.mubr.f32.gmra.mrb[0].mxu0 %v172
  %v895 = vpop.f32.mrb[0].mxu0
  %v896 = vadd.f32 0.0, %v895
  %v897 = vpop.f32.mrb[0].mxu0
  %898 = vmatprep.mubr.f32.mxu0 0.0
  %899 = vmatmul.mubr.f32.gmra.mrb[0].mxu0 %v175
  %v900 = vpop.f32.mrb[0].mxu0
  %v901 = vadd.f32 0.0, %v900
  %v902 = vpop.f32.mrb[0].mxu0
  %903 = vdwg.mxu0
  %v905 = vlaneseq
  %v906 = vshrl.u32 %v905, 7
  %v907 = vsub.s32 0, %v906
  %v908 = vrot.slane %v80, %v907
  %v911 = vsel %vm89, %v821, 0
  %v914 = vsel %vm89, %v826, 0
  %v917 = vsel %vm89, %v896, 0
  %v920 = vsel %vm89, %v901, 0
  %922 = vmatprep.subr.mxu0 0.0
  %923 = vmatpush1.msra.mxu0 %v76
  %924 = vmatprep.subr.mxu0 0.0
  %925 = vmatpush1.msra.mxu0 %v77
  %926 = vmatprep.subr.mxu0 0.0
  %927 = vmatpush1.msra.mxu0 0.0
  %928 = vmatprep.subr.mxu0 0.0
  %929 = vmatpush1.msra.mxu0 0.0
  %930 = vmatprep.subr.mxu0 0.0
  %931 = vmatpush1.msra.mxu0 0.0
  %932 = vmatprep.subr.mxu0 0.0
  %933 = vmatpush1.msra.mxu0 0.0
  %934 = vmatprep.subr.mxu0 0.0
  %935 = vmatpush1.msra.mxu0 0.0
  %936 = vmatprep.subr.mxu0 0.0
  %937 = vmatpush1.msra.mxu0 0.0
  %938 = vmatprep.subr.mxu0 0.0
  %939 = vmatpush1.msra.mxu0 0.0
  %940 = vmatprep.subr.mxu0 0.0
  %941 = vmatpush1.msra.mxu0 0.0
  %942 = vmatprep.subr.mxu0 0.0
  %943 = vmatpush1.msra.mxu0 0.0
  %944 = vmatprep.subr.mxu0 0.0
  %945 = vmatpush1.msra.mxu0 0.0
  %946 = vmatprep.subr.mxu0 0.0
  %947 = vmatpush1.msra.mxu0 0.0
  %948 = vmatprep.subr.mxu0 0.0
  %949 = vmatpush1.msra.mxu0 0.0
  %950 = vmatprep.subr.mxu0 0.0
  %951 = vmatpush1.msra.mxu0 0.0
  %952 = vmatprep.subr.mxu0 0.0
  %953 = vmatpush1.msra.mxu0 0.0
  %954 = vmatprep.subr.mxu0 0.0
  %955 = vmatpush1.msra.mxu0 0.0
  %956 = vmatprep.subr.mxu0 0.0
  %957 = vmatpush1.msra.mxu0 0.0
  %958 = vmatprep.subr.mxu0 0.0
  %959 = vmatpush1.msra.mxu0 0.0
  %960 = vmatprep.subr.mxu0 0.0
  %961 = vmatpush1.msra.mxu0 0.0
  %962 = vmatprep.subr.mxu0 0.0
  %963 = vmatpush1.msra.mxu0 0.0
  %964 = vmatprep.subr.mxu0 0.0
  %965 = vmatpush1.msra.mxu0 0.0
  %966 = vmatprep.subr.mxu0 0.0
  %967 = vmatpush1.msra.mxu0 0.0
  %968 = vmatprep.subr.mxu0 0.0
  %969 = vmatpush1.msra.mxu0 0.0
  %970 = vmatprep.subr.mxu0 0.0
  %971 = vmatpush1.msra.mxu0 0.0
  %972 = vmatprep.subr.mxu0 0.0
  %973 = vmatpush1.msra.mxu0 0.0
  %974 = vmatprep.subr.mxu0 0.0
  %975 = vmatpush1.msra.mxu0 0.0
  %976 = vmatprep.subr.mxu0 0.0
  %977 = vmatpush1.msra.mxu0 0.0
  %978 = vmatprep.subr.mxu0 0.0
  %979 = vmatpush1.msra.mxu0 0.0
  %980 = vmatprep.subr.mxu0 0.0
  %981 = vmatpush1.msra.mxu0 0.0
  %982 = vmatprep.subr.mxu0 0.0
  %983 = vmatpush1.msra.mxu0 0.0
  %984 = vmatprep.subr.mxu0 0.0
  %985 = vmatpush1.msra.mxu0 0.0
  %986 = vmatprep.mubr.f32.mxu0 0.0
  %987 = vmatmul.mubr.f32.gmra.mrb[0].mxu0 %v911
  %v988 = vpop.f32.mrb[0].mxu0
  %v989 = vadd.f32 %v908, %v988
  %v990 = vpop.f32.mrb[0].mxu0
  %991 = vmatprep.mubr.f32.mxu0 0.0
  %992 = vmatmul.mubr.f32.gmra.mrb[0].mxu0 %v914
  %v993 = vpop.f32.mrb[0].mxu0
  %v994 = vadd.f32 %v908, %v993
  %v995 = vpop.f32.mrb[0].mxu0
  %996 = vmatprep.mubr.f32.mxu0 0.0
  %997 = vmatmul.mubr.f32.gmra.mrb[0].mxu0 %v917
  %v998 = vpop.f32.mrb[0].mxu0
  %v999 = vadd.f32 %v908, %v998
  %v1000 = vpop.f32.mrb[0].mxu0
  %1001 = vmatprep.mubr.f32.mxu0 0.0
  %1002 = vmatmul.mubr.f32.gmra.mrb[0].mxu0 %v920
  %v1003 = vpop.f32.mrb[0].mxu0
  %v1004 = vadd.f32 %v908, %v1003
  %v1005 = vpop.f32.mrb[0].mxu0
  %1006 = vdwg.mxu0
  %v1007 = vmul.f32 %v989, %v989
  %v1008 = vmul.f32 %v994, %v994
  %v1009 = vmul.f32 %v999, %v999
  %v1010 = vmul.f32 %v1004, %v1004
  %v1011 = vsel %vm258, %v1007, 0.0
  %1012 = vadd.xlane.f32.xlu0 %v1011
  %v1013 = vpop.xlane.xlu0 %1012
  %v1014 = vsel %vm258, %v1008, 0.0
  %1015 = vadd.xlane.f32.xlu0 %v1014
  %v1016 = vpop.xlane.xlu0 %1015
  %v1017 = vsel %vm258, %v1009, 0.0
  %1018 = vadd.xlane.f32.xlu0 %v1017
  %v1019 = vpop.xlane.xlu0 %1018
  %v1020 = vsel %vm258, %v1010, 0.0
  %1021 = vadd.xlane.f32.xlu0 %v1020
  %v1022 = vpop.xlane.xlu0 %1021
  %v1023 = vrsqrt.pop %v1013
  %v1024 = vrsqrt.pop %v1016
  %v1025 = vrsqrt.pop %v1019
  %v1026 = vrsqrt.pop %v1022
  %v1027 = vmin.f32 %v1023, 1e+12
  %v1028 = vmin.f32 %v1024, 1e+12
  %v1029 = vmin.f32 %v1025, 1e+12
  %v1030 = vmin.f32 %v1026, 1e+12
  %v1031 = vmul.f32 %v989, %v1027
  %v1032 = vmul.f32 %v994, %v1028
  %v1033 = vmul.f32 %v999, %v1029
  %v1034 = vmul.f32 %v1004, %v1030
  %v1036 = vlaneseq
  %v1037 = vshrl.u32 %v1036, 7
  %v1038 = vsub.s32 0, %v1037
  %v1039 = vrot.slane %v86, %v1038
  %1041 = vmatprep.subr.mxu0 0.0
  %1042 = vmatpush1.msra.mxu0 %v81
  %1043 = vmatprep.subr.mxu0 0.0
  %1044 = vmatpush1.msra.mxu0 0.0
  %1045 = vmatprep.subr.mxu0 0.0
  %1046 = vmatpush1.msra.mxu0 0.0
  %1047 = vmatprep.subr.mxu0 0.0
  %1048 = vmatpush1.msra.mxu0 0.0
  %1049 = vmatprep.subr.mxu0 0.0
  %1050 = vmatpush1.msra.mxu0 0.0
  %1051 = vmatprep.subr.mxu0 0.0
  %1052 = vmatpush1.msra.mxu0 0.0
  %1053 = vmatprep.subr.mxu0 0.0
  %1054 = vmatpush1.msra.mxu0 0.0
  %1055 = vmatprep.subr.mxu0 0.0
  %1056 = vmatpush1.msra.mxu0 0.0
  %1057 = vmatprep.subr.mxu0 0.0
  %1058 = vmatpush1.msra.mxu0 0.0
  %1059 = vmatprep.subr.mxu0 0.0
  %1060 = vmatpush1.msra.mxu0 0.0
  %1061 = vmatprep.subr.mxu0 0.0
  %1062 = vmatpush1.msra.mxu0 0.0
  %1063 = vmatprep.subr.mxu0 0.0
  %1064 = vmatpush1.msra.mxu0 0.0
  %1065 = vmatprep.subr.mxu0 0.0
  %1066 = vmatpush1.msra.mxu0 0.0
  %1067 = vmatprep.subr.mxu0 0.0
  %1068 = vmatpush1.msra.mxu0 0.0
  %1069 = vmatprep.subr.mxu0 0.0
  %1070 = vmatpush1.msra.mxu0 0.0
  %1071 = vmatprep.subr.mxu0 0.0
  %1072 = vmatpush1.msra.mxu0 0.0
  %1073 = vmatprep.subr.mxu0 0.0
  %1074 = vmatpush1.msra.mxu0 0.0
  %1075 = vmatprep.subr.mxu0 0.0
  %1076 = vmatpush1.msra.mxu0 0.0
  %1077 = vmatprep.subr.mxu0 0.0
  %1078 = vmatpush1.msra.mxu0 0.0
  %1079 = vmatprep.subr.mxu0 0.0
  %1080 = vmatpush1.msra.mxu0 0.0
  %1081 = vmatprep.subr.mxu0 0.0
  %1082 = vmatpush1.msra.mxu0 0.0
  %1083 = vmatprep.subr.mxu0 0.0
  %1084 = vmatpush1.msra.mxu0 0.0
  %1085 = vmatprep.subr.mxu0 0.0
  %1086 = vmatpush1.msra.mxu0 0.0
  %1087 = vmatprep.subr.mxu0 0.0
  %1088 = vmatpush1.msra.mxu0 0.0
  %1089 = vmatprep.subr.mxu0 0.0
  %1090 = vmatpush1.msra.mxu0 0.0
  %1091 = vmatprep.subr.mxu0 0.0
  %1092 = vmatpush1.msra.mxu0 0.0
  %1093 = vmatprep.subr.mxu0 0.0
  %1094 = vmatpush1.msra.mxu0 0.0
  %1095 = vmatprep.subr.mxu0 0.0
  %1096 = vmatpush1.msra.mxu0 0.0
  %1097 = vmatprep.subr.mxu0 0.0
  %1098 = vmatpush1.msra.mxu0 0.0
  %1099 = vmatprep.subr.mxu0 0.0
  %1100 = vmatpush1.msra.mxu0 0.0
  %1101 = vmatprep.subr.mxu0 0.0
  %1102 = vmatpush1.msra.mxu0 0.0
  %1103 = vmatprep.subr.mxu0 0.0
  %1104 = vmatpush1.msra.mxu0 0.0
  %1105 = vmatprep.mubr.f32.mxu0 0.0
  %1106 = vmatmul.mubr.f32.gmra.mrb[0].mxu0 %v260
  %v1107 = vpop.f32.mrb[0].mxu0
  %v1108 = vadd.f32 %v1039, %v1107
  %v1109 = vpop.f32.mrb[0].mxu0
  %1110 = vmatprep.mubr.f32.mxu0 0.0
  %1111 = vmatmul.mubr.f32.gmra.mrb[0].mxu0 %v263
  %v1112 = vpop.f32.mrb[0].mxu0
  %v1113 = vadd.f32 %v1039, %v1112
  %v1114 = vpop.f32.mrb[0].mxu0
  %1115 = vmatprep.mubr.f32.mxu0 0.0
  %1116 = vmatmul.mubr.f32.gmra.mrb[0].mxu0 %v266
  %v1117 = vpop.f32.mrb[0].mxu0
  %v1118 = vadd.f32 %v1039, %v1117
  %v1119 = vpop.f32.mrb[0].mxu0
  %1120 = vmatprep.mubr.f32.mxu0 0.0
  %1121 = vmatmul.mubr.f32.gmra.mrb[0].mxu0 %v269
  %v1122 = vpop.f32.mrb[0].mxu0
  %v1123 = vadd.f32 %v1039, %v1122
  %v1124 = vpop.f32.mrb[0].mxu0
  %1125 = vdwg.mxu0
  %v1126 = vmul.f32 %v1108, %v1108
  %v1127 = vmul.f32 %v1113, %v1113
  %v1128 = vmul.f32 %v1118, %v1118
  %v1129 = vmul.f32 %v1123, %v1123
  %v1130 = vsel %vm89, %v1126, 0.0
  %1131 = vadd.xlane.f32.xlu0 %v1130
  %v1132 = vpop.xlane.xlu0 %1131
  %v1133 = vsel %vm89, %v1127, 0.0
  %1134 = vadd.xlane.f32.xlu0 %v1133
  %v1135 = vpop.xlane.xlu0 %1134
  %v1136 = vsel %vm89, %v1128, 0.0
  %1137 = vadd.xlane.f32.xlu0 %v1136
  %v1138 = vpop.xlane.xlu0 %1137
  %v1139 = vsel %vm89, %v1129, 0.0
  %1140 = vadd.xlane.f32.xlu0 %v1139
  %v1141 = vpop.xlane.xlu0 %1140
  %v1142 = vrsqrt.pop %v1132
  %v1143 = vrsqrt.pop %v1135
  %v1144 = vrsqrt.pop %v1138
  %v1145 = vrsqrt.pop %v1141
  %v1146 = vmin.f32 %v1142, 1e+12
  %v1147 = vmin.f32 %v1143, 1e+12
  %v1148 = vmin.f32 %v1144, 1e+12
  %v1149 = vmin.f32 %v1145, 1e+12
  %v1150 = vmul.f32 %v1108, %v1146
  %v1151 = vmul.f32 %v1113, %v1147
  %v1152 = vmul.f32 %v1118, %v1148
  %v1153 = vmul.f32 %v1123, %v1149
  %v1154 = vmax.f32 %v1150, 0.0
  %v1155 = vmax.f32 %v1151, 0.0
  %v1156 = vmax.f32 %v1152, 0.0
  %v1157 = vmax.f32 %v1153, 0.0
  %v1158 = vsel %vm89, %v1154, 0.0
  %v1159 = vsel %vm89, %v1156, 0.0
  %v1160 = vadd.f32 %v1158, %v1159
  %1161 = vadd.xlane.f32.xlu0 %v1160
  %v1162 = vpop.xlane.xlu0 %1161
  %v1163 = vsel %vm89, %v1155, 0.0
  %v1164 = vsel %vm89, %v1157, 0.0
  %v1165 = vadd.f32 %v1163, %v1164
  %1166 = vadd.xlane.f32.xlu0 %v1165
  %v1167 = vpop.xlane.xlu0 %1166
  %v1168 = vmul.f32 %v1162, %v398
  %v1169 = vmul.f32 %v1167, %v398
  %v1170 = vsub.f32 %v1154, %v1168
  %v1171 = vsub.f32 %v1155, %v1169
  %v1172 = vsub.f32 %v1156, %v1168
  %v1173 = vsub.f32 %v1157, %v1169
  %v1174 = vmul.f32 %v1170, %v1170
  %v1175 = vmul.f32 %v1171, %v1171
  %v1176 = vmul.f32 %v1172, %v1172
  %v1177 = vmul.f32 %v1173, %v1173
  %v1178 = vsel %vm89, %v1174, 0.0
  %v1179 = vsel %vm89, %v1176, 0.0
  %v1180 = vadd.f32 %v1178, %v1179
  %1181 = vadd.xlane.f32.xlu0 %v1180
  %v1182 = vpop.xlane.xlu0 %1181
  %v1183 = vsel %vm89, %v1175, 0.0
  %v1184 = vsel %vm89, %v1177, 0.0
  %v1185 = vadd.f32 %v1183, %v1184
  %1186 = vadd.xlane.f32.xlu0 %v1185
  %v1187 = vpop.xlane.xlu0 %1186
  %v1188 = vmul.f32 %v1182, %v398
  %v1189 = vmul.f32 %v1187, %v398
  %v1190 = vadd.f32 %v1188, 1e-05
  %v1191 = vadd.f32 %v1189, 1e-05
  %v1192 = vrsqrt.pop %v1190
  %v1193 = vrsqrt.pop %v1191
  %v1194 = vmul.f32 %v1170, %v1192
  %v1195 = vmul.f32 %v1171, %v1193
  %v1196 = vmul.f32 %v1172, %v1192
  %v1197 = vmul.f32 %v1173, %v1193
  %1198 = vmatprep.subr.mxu0 0.0
  %1199 = vmatpush1.msra.mxu0 %v1194
  %1200 = vmatprep.subr.mxu0 0.0
  %1201 = vmatpush1.msra.mxu0 %v1195
  %1202 = vmatprep.subr.mxu0 0.0
  %1203 = vmatpush1.msra.mxu0 0.0
  %1204 = vmatprep.subr.mxu0 0.0
  %1205 = vmatpush1.msra.mxu0 0.0
  %1206 = vmatprep.subr.mxu0 0.0
  %1207 = vmatpush1.msra.mxu0 0.0
  %1208 = vmatprep.subr.mxu0 0.0
  %1209 = vmatpush1.msra.mxu0 0.0
  %1210 = vmatprep.subr.mxu0 0.0
  %1211 = vmatpush1.msra.mxu0 0.0
  %1212 = vmatprep.subr.mxu0 0.0
  %1213 = vmatpush1.msra.mxu0 0.0
  %1214 = vmatprep.subr.mxu0 0.0
  %1215 = vmatpush1.msra.mxu0 0.0
  %1216 = vmatprep.subr.mxu0 0.0
  %1217 = vmatpush1.msra.mxu0 0.0
  %1218 = vmatprep.subr.mxu0 0.0
  %1219 = vmatpush1.msra.mxu0 0.0
  %1220 = vmatprep.subr.mxu0 0.0
  %1221 = vmatpush1.msra.mxu0 0.0
  %1222 = vmatprep.subr.mxu0 0.0
  %1223 = vmatpush1.msra.mxu0 0.0
  %1224 = vmatprep.subr.mxu0 0.0
  %1225 = vmatpush1.msra.mxu0 0.0
  %1226 = vmatprep.subr.mxu0 0.0
  %1227 = vmatpush1.msra.mxu0 0.0
  %1228 = vmatprep.subr.mxu0 0.0
  %1229 = vmatpush1.msra.mxu0 0.0
  %1230 = vmatprep.subr.mxu0 0.0
  %1231 = vmatpush1.msra.mxu0 0.0
  %1232 = vmatprep.subr.mxu0 0.0
  %1233 = vmatpush1.msra.mxu0 0.0
  %1234 = vmatprep.subr.mxu0 0.0
  %1235 = vmatpush1.msra.mxu0 0.0
  %1236 = vmatprep.subr.mxu0 0.0
  %1237 = vmatpush1.msra.mxu0 0.0
  %1238 = vmatprep.subr.mxu0 0.0
  %1239 = vmatpush1.msra.mxu0 0.0
  %1240 = vmatprep.subr.mxu0 0.0
  %1241 = vmatpush1.msra.mxu0 0.0
  %1242 = vmatprep.subr.mxu0 0.0
  %1243 = vmatpush1.msra.mxu0 0.0
  %1244 = vmatprep.subr.mxu0 0.0
  %1245 = vmatpush1.msra.mxu0 0.0
  %1246 = vmatprep.subr.mxu0 0.0
  %1247 = vmatpush1.msra.mxu0 0.0
  %1248 = vmatprep.subr.mxu0 0.0
  %1249 = vmatpush1.msra.mxu0 0.0
  %1250 = vmatprep.subr.mxu0 0.0
  %1251 = vmatpush1.msra.mxu0 0.0
  %1252 = vmatprep.subr.mxu0 0.0
  %1253 = vmatpush1.msra.mxu0 0.0
  %1254 = vmatprep.subr.mxu0 0.0
  %1255 = vmatpush1.msra.mxu0 0.0
  %1256 = vmatprep.subr.mxu0 0.0
  %1257 = vmatpush1.msra.mxu0 0.0
  %1258 = vmatprep.subr.mxu0 0.0
  %1259 = vmatpush1.msra.mxu0 0.0
  %1260 = vmatprep.subr.mxu0 0.0
  %1261 = vmatpush1.msra.mxu0 0.0
  %1262 = vmatprep.mubr.f32.mxu0 0.0
  %1263 = vmatmul.mubr.f32.gmra.mrb[0].mxu0 %v91
  %v1264 = vpop.f32.mrb[0].mxu0
  %v1265 = vadd.f32 0.0, %v1264
  %v1266 = vpop.f32.mrb[0].mxu0
  %1267 = vmatprep.mubr.f32.mxu0 0.0
  %1268 = vmatmul.mubr.f32.gmra.mrb[0].mxu0 %v94
  %v1269 = vpop.f32.mrb[0].mxu0
  %v1270 = vadd.f32 0.0, %v1269
  %v1271 = vpop.f32.mrb[0].mxu0
  %1272 = vdwg.mxu0
  %1273 = vmatprep.subr.mxu0 0.0
  %1274 = vmatpush1.msra.mxu0 %v1196
  %1275 = vmatprep.subr.mxu0 0.0
  %1276 = vmatpush1.msra.mxu0 %v1197
  %1277 = vmatprep.subr.mxu0 0.0
  %1278 = vmatpush1.msra.mxu0 0.0
  %1279 = vmatprep.subr.mxu0 0.0
  %1280 = vmatpush1.msra.mxu0 0.0
  %1281 = vmatprep.subr.mxu0 0.0
  %1282 = vmatpush1.msra.mxu0 0.0
  %1283 = vmatprep.subr.mxu0 0.0
  %1284 = vmatpush1.msra.mxu0 0.0
  %1285 = vmatprep.subr.mxu0 0.0
  %1286 = vmatpush1.msra.mxu0 0.0
  %1287 = vmatprep.subr.mxu0 0.0
  %1288 = vmatpush1.msra.mxu0 0.0
  %1289 = vmatprep.subr.mxu0 0.0
  %1290 = vmatpush1.msra.mxu0 0.0
  %1291 = vmatprep.subr.mxu0 0.0
  %1292 = vmatpush1.msra.mxu0 0.0
  %1293 = vmatprep.subr.mxu0 0.0
  %1294 = vmatpush1.msra.mxu0 0.0
  %1295 = vmatprep.subr.mxu0 0.0
  %1296 = vmatpush1.msra.mxu0 0.0
  %1297 = vmatprep.subr.mxu0 0.0
  %1298 = vmatpush1.msra.mxu0 0.0
  %1299 = vmatprep.subr.mxu0 0.0
  %1300 = vmatpush1.msra.mxu0 0.0
  %1301 = vmatprep.subr.mxu0 0.0
  %1302 = vmatpush1.msra.mxu0 0.0
  %1303 = vmatprep.subr.mxu0 0.0
  %1304 = vmatpush1.msra.mxu0 0.0
  %1305 = vmatprep.subr.mxu0 0.0
  %1306 = vmatpush1.msra.mxu0 0.0
  %1307 = vmatprep.subr.mxu0 0.0
  %1308 = vmatpush1.msra.mxu0 0.0
  %1309 = vmatprep.subr.mxu0 0.0
  %1310 = vmatpush1.msra.mxu0 0.0
  %1311 = vmatprep.subr.mxu0 0.0
  %1312 = vmatpush1.msra.mxu0 0.0
  %1313 = vmatprep.subr.mxu0 0.0
  %1314 = vmatpush1.msra.mxu0 0.0
  %1315 = vmatprep.subr.mxu0 0.0
  %1316 = vmatpush1.msra.mxu0 0.0
  %1317 = vmatprep.subr.mxu0 0.0
  %1318 = vmatpush1.msra.mxu0 0.0
  %1319 = vmatprep.subr.mxu0 0.0
  %1320 = vmatpush1.msra.mxu0 0.0
  %1321 = vmatprep.subr.mxu0 0.0
  %1322 = vmatpush1.msra.mxu0 0.0
  %1323 = vmatprep.subr.mxu0 0.0
  %1324 = vmatpush1.msra.mxu0 0.0
  %1325 = vmatprep.subr.mxu0 0.0
  %1326 = vmatpush1.msra.mxu0 0.0
  %1327 = vmatprep.subr.mxu0 0.0
  %1328 = vmatpush1.msra.mxu0 0.0
  %1329 = vmatprep.subr.mxu0 0.0
  %1330 = vmatpush1.msra.mxu0 0.0
  %1331 = vmatprep.subr.mxu0 0.0
  %1332 = vmatpush1.msra.mxu0 0.0
  %1333 = vmatprep.subr.mxu0 0.0
  %1334 = vmatpush1.msra.mxu0 0.0
  %1335 = vmatprep.subr.mxu0 0.0
  %1336 = vmatpush1.msra.mxu0 0.0
  %1337 = vmatprep.mubr.f32.mxu0 0.0
  %1338 = vmatmul.mubr.f32.gmra.mrb[0].mxu0 %v172
  %v1339 = vpop.f32.mrb[0].mxu0
  %v1340 = vadd.f32 0.0, %v1339
  %v1341 = vpop.f32.mrb[0].mxu0
  %1342 = vmatprep.mubr.f32.mxu0 0.0
  %1343 = vmatmul.mubr.f32.gmra.mrb[0].mxu0 %v175
  %v1344 = vpop.f32.mrb[0].mxu0
  %v1345 = vadd.f32 0.0, %v1344
  %v1346 = vpop.f32.mrb[0].mxu0
  %1347 = vdwg.mxu0
  %v1349 = vlaneseq
  %v1350 = vshrl.u32 %v1349, 7
  %v1351 = vsub.s32 0, %v1350
  %v1352 = vrot.slane %v87, %v1351
  %v1355 = vsel %vm89, %v1265, 0
  %v1358 = vsel %vm89, %v1270, 0
  %v1361 = vsel %vm89, %v1340, 0
  %v1364 = vsel %vm89, %v1345, 0
  %1366 = vmatprep.subr.mxu0 0.0
  %1367 = vmatpush1.msra.mxu0 %v82
  %1368 = vmatprep.subr.mxu0 0.0
  %1369 = vmatpush1.msra.mxu0 %v83
  %1370 = vmatprep.subr.mxu0 0.0
  %1371 = vmatpush1.msra.mxu0 0.0
  %1372 = vmatprep.subr.mxu0 0.0
  %1373 = vmatpush1.msra.mxu0 0.0
  %1374 = vmatprep.subr.mxu0 0.0
  %1375 = vmatpush1.msra.mxu0 0.0
  %1376 = vmatprep.subr.mxu0 0.0
  %1377 = vmatpush1.msra.mxu0 0.0
  %1378 = vmatprep.subr.mxu0 0.0
  %1379 = vmatpush1.msra.mxu0 0.0
  %1380 = vmatprep.subr.mxu0 0.0
  %1381 = vmatpush1.msra.mxu0 0.0
  %1382 = vmatprep.subr.mxu0 0.0
  %1383 = vmatpush1.msra.mxu0 0.0
  %1384 = vmatprep.subr.mxu0 0.0
  %1385 = vmatpush1.msra.mxu0 0.0
  %1386 = vmatprep.subr.mxu0 0.0
  %1387 = vmatpush1.msra.mxu0 0.0
  %1388 = vmatprep.subr.mxu0 0.0
  %1389 = vmatpush1.msra.mxu0 0.0
  %1390 = vmatprep.subr.mxu0 0.0
  %1391 = vmatpush1.msra.mxu0 0.0
  %1392 = vmatprep.subr.mxu0 0.0
  %1393 = vmatpush1.msra.mxu0 0.0
  %1394 = vmatprep.subr.mxu0 0.0
  %1395 = vmatpush1.msra.mxu0 0.0
  %1396 = vmatprep.subr.mxu0 0.0
  %1397 = vmatpush1.msra.mxu0 0.0
  %1398 = vmatprep.subr.mxu0 0.0
  %1399 = vmatpush1.msra.mxu0 0.0
  %1400 = vmatprep.subr.mxu0 0.0
  %1401 = vmatpush1.msra.mxu0 0.0
  %1402 = vmatprep.subr.mxu0 0.0
  %1403 = vmatpush1.msra.mxu0 0.0
  %1404 = vmatprep.subr.mxu0 0.0
  %1405 = vmatpush1.msra.mxu0 0.0
  %1406 = vmatprep.subr.mxu0 0.0
  %1407 = vmatpush1.msra.mxu0 0.0
  %1408 = vmatprep.subr.mxu0 0.0
  %1409 = vmatpush1.msra.mxu0 0.0
  %1410 = vmatprep.subr.mxu0 0.0
  %1411 = vmatpush1.msra.mxu0 0.0
  %1412 = vmatprep.subr.mxu0 0.0
  %1413 = vmatpush1.msra.mxu0 0.0
  %1414 = vmatprep.subr.mxu0 0.0
  %1415 = vmatpush1.msra.mxu0 0.0
  %1416 = vmatprep.subr.mxu0 0.0
  %1417 = vmatpush1.msra.mxu0 0.0
  %1418 = vmatprep.subr.mxu0 0.0
  %1419 = vmatpush1.msra.mxu0 0.0
  %1420 = vmatprep.subr.mxu0 0.0
  %1421 = vmatpush1.msra.mxu0 0.0
  %1422 = vmatprep.subr.mxu0 0.0
  %1423 = vmatpush1.msra.mxu0 0.0
  %1424 = vmatprep.subr.mxu0 0.0
  %1425 = vmatpush1.msra.mxu0 0.0
  %1426 = vmatprep.subr.mxu0 0.0
  %1427 = vmatpush1.msra.mxu0 0.0
  %1428 = vmatprep.subr.mxu0 0.0
  %1429 = vmatpush1.msra.mxu0 0.0
  %1430 = vmatprep.mubr.f32.mxu0 0.0
  %1431 = vmatmul.mubr.f32.gmra.mrb[0].mxu0 %v1355
  %v1432 = vpop.f32.mrb[0].mxu0
  %v1433 = vadd.f32 %v1352, %v1432
  %v1434 = vpop.f32.mrb[0].mxu0
  %1435 = vmatprep.mubr.f32.mxu0 0.0
  %1436 = vmatmul.mubr.f32.gmra.mrb[0].mxu0 %v1358
  %v1437 = vpop.f32.mrb[0].mxu0
  %v1438 = vadd.f32 %v1352, %v1437
  %v1439 = vpop.f32.mrb[0].mxu0
  %1440 = vmatprep.mubr.f32.mxu0 0.0
  %1441 = vmatmul.mubr.f32.gmra.mrb[0].mxu0 %v1361
  %v1442 = vpop.f32.mrb[0].mxu0
  %v1443 = vadd.f32 %v1352, %v1442
  %v1444 = vpop.f32.mrb[0].mxu0
  %1445 = vmatprep.mubr.f32.mxu0 0.0
  %1446 = vmatmul.mubr.f32.gmra.mrb[0].mxu0 %v1364
  %v1447 = vpop.f32.mrb[0].mxu0
  %v1448 = vadd.f32 %v1352, %v1447
  %v1449 = vpop.f32.mrb[0].mxu0
  %1450 = vdwg.mxu0
  %v1451 = vmul.f32 %v1433, %v1433
  %v1452 = vmul.f32 %v1438, %v1438
  %v1453 = vmul.f32 %v1443, %v1443
  %v1454 = vmul.f32 %v1448, %v1448
  %v1455 = vsel %vm89, %v1451, 0.0
  %1456 = vadd.xlane.f32.xlu0 %v1455
  %v1457 = vpop.xlane.xlu0 %1456
  %v1458 = vsel %vm89, %v1452, 0.0
  %1459 = vadd.xlane.f32.xlu0 %v1458
  %v1460 = vpop.xlane.xlu0 %1459
  %v1461 = vsel %vm89, %v1453, 0.0
  %1462 = vadd.xlane.f32.xlu0 %v1461
  %v1463 = vpop.xlane.xlu0 %1462
  %v1464 = vsel %vm89, %v1454, 0.0
  %1465 = vadd.xlane.f32.xlu0 %v1464
  %v1466 = vpop.xlane.xlu0 %1465
  %v1467 = vrsqrt.pop %v1457
  %v1468 = vrsqrt.pop %v1460
  %v1469 = vrsqrt.pop %v1463
  %v1470 = vrsqrt.pop %v1466
  %v1471 = vmin.f32 %v1467, 1e+12
  %v1472 = vmin.f32 %v1468, 1e+12
  %v1473 = vmin.f32 %v1469, 1e+12
  %v1474 = vmin.f32 %v1470, 1e+12
  %v1475 = vmul.f32 %v1433, %v1471
  %v1476 = vmul.f32 %v1438, %v1472
  %v1477 = vmul.f32 %v1443, %v1473
  %v1478 = vmul.f32 %v1448, %v1474
  %v1479 = vmax.f32 %v1475, 0.0
  %v1480 = vmax.f32 %v1476, 0.0
  %v1481 = vmax.f32 %v1477, 0.0
  %v1482 = vmax.f32 %v1478, 0.0
  %v1483 = vsel %vm89, %v1479, 0.0
  %v1484 = vsel %vm89, %v1481, 0.0
  %v1485 = vadd.f32 %v1483, %v1484
  %1486 = vadd.xlane.f32.xlu0 %v1485
  %v1487 = vpop.xlane.xlu0 %1486
  %v1488 = vsel %vm89, %v1480, 0.0
  %v1489 = vsel %vm89, %v1482, 0.0
  %v1490 = vadd.f32 %v1488, %v1489
  %1491 = vadd.xlane.f32.xlu0 %v1490
  %v1492 = vpop.xlane.xlu0 %1491
  %v1493 = vmul.f32 %v1487, %v398
  %v1494 = vmul.f32 %v1492, %v398
  %v1495 = vsub.f32 %v1479, %v1493
  %v1496 = vsub.f32 %v1480, %v1494
  %v1497 = vsub.f32 %v1481, %v1493
  %v1498 = vsub.f32 %v1482, %v1494
  %v1499 = vmul.f32 %v1495, %v1495
  %v1500 = vmul.f32 %v1496, %v1496
  %v1501 = vmul.f32 %v1497, %v1497
  %v1502 = vmul.f32 %v1498, %v1498
  %v1503 = vsel %vm89, %v1499, 0.0
  %v1504 = vsel %vm89, %v1501, 0.0
  %v1505 = vadd.f32 %v1503, %v1504
  %1506 = vadd.xlane.f32.xlu0 %v1505
  %v1507 = vpop.xlane.xlu0 %1506
  %v1508 = vsel %vm89, %v1500, 0.0
  %v1509 = vsel %vm89, %v1502, 0.0
  %v1510 = vadd.f32 %v1508, %v1509
  %1511 = vadd.xlane.f32.xlu0 %v1510
  %v1512 = vpop.xlane.xlu0 %1511
  %v1513 = vmul.f32 %v1507, %v398
  %v1514 = vmul.f32 %v1512, %v398
  %v1515 = vadd.f32 %v1513, 1e-05
  %v1516 = vadd.f32 %v1514, 1e-05
  %v1517 = vrsqrt.pop %v1515
  %v1518 = vrsqrt.pop %v1516
  %v1519 = vmul.f32 %v1495, %v1517
  %v1520 = vmul.f32 %v1496, %v1518
  %v1521 = vmul.f32 %v1497, %v1517
  %v1522 = vmul.f32 %v1498, %v1518
  %1523 = vmatprep.subr.mxu0 0.0
  %1524 = vmatpush1.msra.mxu0 %v1519
  %1525 = vmatprep.subr.mxu0 0.0
  %1526 = vmatpush1.msra.mxu0 %v1520
  %1527 = vmatprep.subr.mxu0 0.0
  %1528 = vmatpush1.msra.mxu0 0.0
  %1529 = vmatprep.subr.mxu0 0.0
  %1530 = vmatpush1.msra.mxu0 0.0
  %1531 = vmatprep.subr.mxu0 0.0
  %1532 = vmatpush1.msra.mxu0 0.0
  %1533 = vmatprep.subr.mxu0 0.0
  %1534 = vmatpush1.msra.mxu0 0.0
  %1535 = vmatprep.subr.mxu0 0.0
  %1536 = vmatpush1.msra.mxu0 0.0
  %1537 = vmatprep.subr.mxu0 0.0
  %1538 = vmatpush1.msra.mxu0 0.0
  %1539 = vmatprep.subr.mxu0 0.0
  %1540 = vmatpush1.msra.mxu0 0.0
  %1541 = vmatprep.subr.mxu0 0.0
  %1542 = vmatpush1.msra.mxu0 0.0
  %1543 = vmatprep.subr.mxu0 0.0
  %1544 = vmatpush1.msra.mxu0 0.0
  %1545 = vmatprep.subr.mxu0 0.0
  %1546 = vmatpush1.msra.mxu0 0.0
  %1547 = vmatprep.subr.mxu0 0.0
  %1548 = vmatpush1.msra.mxu0 0.0
  %1549 = vmatprep.subr.mxu0 0.0
  %1550 = vmatpush1.msra.mxu0 0.0
  %1551 = vmatprep.subr.mxu0 0.0
  %1552 = vmatpush1.msra.mxu0 0.0
  %1553 = vmatprep.subr.mxu0 0.0
  %1554 = vmatpush1.msra.mxu0 0.0
  %1555 = vmatprep.subr.mxu0 0.0
  %1556 = vmatpush1.msra.mxu0 0.0
  %1557 = vmatprep.subr.mxu0 0.0
  %1558 = vmatpush1.msra.mxu0 0.0
  %1559 = vmatprep.subr.mxu0 0.0
  %1560 = vmatpush1.msra.mxu0 0.0
  %1561 = vmatprep.subr.mxu0 0.0
  %1562 = vmatpush1.msra.mxu0 0.0
  %1563 = vmatprep.subr.mxu0 0.0
  %1564 = vmatpush1.msra.mxu0 0.0
  %1565 = vmatprep.subr.mxu0 0.0
  %1566 = vmatpush1.msra.mxu0 0.0
  %1567 = vmatprep.subr.mxu0 0.0
  %1568 = vmatpush1.msra.mxu0 0.0
  %1569 = vmatprep.subr.mxu0 0.0
  %1570 = vmatpush1.msra.mxu0 0.0
  %1571 = vmatprep.subr.mxu0 0.0
  %1572 = vmatpush1.msra.mxu0 0.0
  %1573 = vmatprep.subr.mxu0 0.0
  %1574 = vmatpush1.msra.mxu0 0.0
  %1575 = vmatprep.subr.mxu0 0.0
  %1576 = vmatpush1.msra.mxu0 0.0
  %1577 = vmatprep.subr.mxu0 0.0
  %1578 = vmatpush1.msra.mxu0 0.0
  %1579 = vmatprep.subr.mxu0 0.0
  %1580 = vmatpush1.msra.mxu0 0.0
  %1581 = vmatprep.subr.mxu0 0.0
  %1582 = vmatpush1.msra.mxu0 0.0
  %1583 = vmatprep.subr.mxu0 0.0
  %1584 = vmatpush1.msra.mxu0 0.0
  %1585 = vmatprep.subr.mxu0 0.0
  %1586 = vmatpush1.msra.mxu0 0.0
  %1587 = vmatprep.mubr.f32.mxu0 0.0
  %1588 = vmatmul.mubr.f32.gmra.mrb[0].mxu0 %v91
  %v1589 = vpop.f32.mrb[0].mxu0
  %v1590 = vadd.f32 0.0, %v1589
  %v1591 = vpop.f32.mrb[0].mxu0
  %1592 = vmatprep.mubr.f32.mxu0 0.0
  %1593 = vmatmul.mubr.f32.gmra.mrb[0].mxu0 %v94
  %v1594 = vpop.f32.mrb[0].mxu0
  %v1595 = vadd.f32 0.0, %v1594
  %v1596 = vpop.f32.mrb[0].mxu0
  %1597 = vdwg.mxu0
  %1598 = vmatprep.subr.mxu0 0.0
  %1599 = vmatpush1.msra.mxu0 %v1521
  %1600 = vmatprep.subr.mxu0 0.0
  %1601 = vmatpush1.msra.mxu0 %v1522
  %1602 = vmatprep.subr.mxu0 0.0
  %1603 = vmatpush1.msra.mxu0 0.0
  %1604 = vmatprep.subr.mxu0 0.0
  %1605 = vmatpush1.msra.mxu0 0.0
  %1606 = vmatprep.subr.mxu0 0.0
  %1607 = vmatpush1.msra.mxu0 0.0
  %1608 = vmatprep.subr.mxu0 0.0
  %1609 = vmatpush1.msra.mxu0 0.0
  %1610 = vmatprep.subr.mxu0 0.0
  %1611 = vmatpush1.msra.mxu0 0.0
  %1612 = vmatprep.subr.mxu0 0.0
  %1613 = vmatpush1.msra.mxu0 0.0
  %1614 = vmatprep.subr.mxu0 0.0
  %1615 = vmatpush1.msra.mxu0 0.0
  %1616 = vmatprep.subr.mxu0 0.0
  %1617 = vmatpush1.msra.mxu0 0.0
  %1618 = vmatprep.subr.mxu0 0.0
  %1619 = vmatpush1.msra.mxu0 0.0
  %1620 = vmatprep.subr.mxu0 0.0
  %1621 = vmatpush1.msra.mxu0 0.0
  %1622 = vmatprep.subr.mxu0 0.0
  %1623 = vmatpush1.msra.mxu0 0.0
  %1624 = vmatprep.subr.mxu0 0.0
  %1625 = vmatpush1.msra.mxu0 0.0
  %1626 = vmatprep.subr.mxu0 0.0
  %1627 = vmatpush1.msra.mxu0 0.0
  %1628 = vmatprep.subr.mxu0 0.0
  %1629 = vmatpush1.msra.mxu0 0.0
  %1630 = vmatprep.subr.mxu0 0.0
  %1631 = vmatpush1.msra.mxu0 0.0
  %1632 = vmatprep.subr.mxu0 0.0
  %1633 = vmatpush1.msra.mxu0 0.0
  %1634 = vmatprep.subr.mxu0 0.0
  %1635 = vmatpush1.msra.mxu0 0.0
  %1636 = vmatprep.subr.mxu0 0.0
  %1637 = vmatpush1.msra.mxu0 0.0
  %1638 = vmatprep.subr.mxu0 0.0
  %1639 = vmatpush1.msra.mxu0 0.0
  %1640 = vmatprep.subr.mxu0 0.0
  %1641 = vmatpush1.msra.mxu0 0.0
  %1642 = vmatprep.subr.mxu0 0.0
  %1643 = vmatpush1.msra.mxu0 0.0
  %1644 = vmatprep.subr.mxu0 0.0
  %1645 = vmatpush1.msra.mxu0 0.0
  %1646 = vmatprep.subr.mxu0 0.0
  %1647 = vmatpush1.msra.mxu0 0.0
  %1648 = vmatprep.subr.mxu0 0.0
  %1649 = vmatpush1.msra.mxu0 0.0
  %1650 = vmatprep.subr.mxu0 0.0
  %1651 = vmatpush1.msra.mxu0 0.0
  %1652 = vmatprep.subr.mxu0 0.0
  %1653 = vmatpush1.msra.mxu0 0.0
  %1654 = vmatprep.subr.mxu0 0.0
  %1655 = vmatpush1.msra.mxu0 0.0
  %1656 = vmatprep.subr.mxu0 0.0
  %1657 = vmatpush1.msra.mxu0 0.0
  %1658 = vmatprep.subr.mxu0 0.0
  %1659 = vmatpush1.msra.mxu0 0.0
  %1660 = vmatprep.subr.mxu0 0.0
  %1661 = vmatpush1.msra.mxu0 0.0
  %1662 = vmatprep.mubr.f32.mxu0 0.0
  %1663 = vmatmul.mubr.f32.gmra.mrb[0].mxu0 %v172
  %v1664 = vpop.f32.mrb[0].mxu0
  %v1665 = vadd.f32 0.0, %v1664
  %v1666 = vpop.f32.mrb[0].mxu0
  %1667 = vmatprep.mubr.f32.mxu0 0.0
  %1668 = vmatmul.mubr.f32.gmra.mrb[0].mxu0 %v175
  %v1669 = vpop.f32.mrb[0].mxu0
  %v1670 = vadd.f32 0.0, %v1669
  %v1671 = vpop.f32.mrb[0].mxu0
  %1672 = vdwg.mxu0
  %v1674 = vlaneseq
  %v1675 = vshrl.u32 %v1674, 7
  %v1676 = vsub.s32 0, %v1675
  %v1677 = vrot.slane %v88, %v1676
  %v1680 = vsel %vm89, %v1590, 0
  %v1683 = vsel %vm89, %v1595, 0
  %v1686 = vsel %vm89, %v1665, 0
  %v1689 = vsel %vm89, %v1670, 0
  %1691 = vmatprep.subr.mxu0 0.0
  %1692 = vmatpush1.msra.mxu0 %v84
  %1693 = vmatprep.subr.mxu0 0.0
  %1694 = vmatpush1.msra.mxu0 %v85
  %1695 = vmatprep.subr.mxu0 0.0
  %1696 = vmatpush1.msra.mxu0 0.0
  %1697 = vmatprep.subr.mxu0 0.0
  %1698 = vmatpush1.msra.mxu0 0.0
  %1699 = vmatprep.subr.mxu0 0.0
  %1700 = vmatpush1.msra.mxu0 0.0
  %1701 = vmatprep.subr.mxu0 0.0
  %1702 = vmatpush1.msra.mxu0 0.0
  %1703 = vmatprep.subr.mxu0 0.0
  %1704 = vmatpush1.msra.mxu0 0.0
  %1705 = vmatprep.subr.mxu0 0.0
  %1706 = vmatpush1.msra.mxu0 0.0
  %1707 = vmatprep.subr.mxu0 0.0
  %1708 = vmatpush1.msra.mxu0 0.0
  %1709 = vmatprep.subr.mxu0 0.0
  %1710 = vmatpush1.msra.mxu0 0.0
  %1711 = vmatprep.subr.mxu0 0.0
  %1712 = vmatpush1.msra.mxu0 0.0
  %1713 = vmatprep.subr.mxu0 0.0
  %1714 = vmatpush1.msra.mxu0 0.0
  %1715 = vmatprep.subr.mxu0 0.0
  %1716 = vmatpush1.msra.mxu0 0.0
  %1717 = vmatprep.subr.mxu0 0.0
  %1718 = vmatpush1.msra.mxu0 0.0
  %1719 = vmatprep.subr.mxu0 0.0
  %1720 = vmatpush1.msra.mxu0 0.0
  %1721 = vmatprep.subr.mxu0 0.0
  %1722 = vmatpush1.msra.mxu0 0.0
  %1723 = vmatprep.subr.mxu0 0.0
  %1724 = vmatpush1.msra.mxu0 0.0
  %1725 = vmatprep.subr.mxu0 0.0
  %1726 = vmatpush1.msra.mxu0 0.0
  %1727 = vmatprep.subr.mxu0 0.0
  %1728 = vmatpush1.msra.mxu0 0.0
  %1729 = vmatprep.subr.mxu0 0.0
  %1730 = vmatpush1.msra.mxu0 0.0
  %1731 = vmatprep.subr.mxu0 0.0
  %1732 = vmatpush1.msra.mxu0 0.0
  %1733 = vmatprep.subr.mxu0 0.0
  %1734 = vmatpush1.msra.mxu0 0.0
  %1735 = vmatprep.subr.mxu0 0.0
  %1736 = vmatpush1.msra.mxu0 0.0
  %1737 = vmatprep.subr.mxu0 0.0
  %1738 = vmatpush1.msra.mxu0 0.0
  %1739 = vmatprep.subr.mxu0 0.0
  %1740 = vmatpush1.msra.mxu0 0.0
  %1741 = vmatprep.subr.mxu0 0.0
  %1742 = vmatpush1.msra.mxu0 0.0
  %1743 = vmatprep.subr.mxu0 0.0
  %1744 = vmatpush1.msra.mxu0 0.0
  %1745 = vmatprep.subr.mxu0 0.0
  %1746 = vmatpush1.msra.mxu0 0.0
  %1747 = vmatprep.subr.mxu0 0.0
  %1748 = vmatpush1.msra.mxu0 0.0
  %1749 = vmatprep.subr.mxu0 0.0
  %1750 = vmatpush1.msra.mxu0 0.0
  %1751 = vmatprep.subr.mxu0 0.0
  %1752 = vmatpush1.msra.mxu0 0.0
  %1753 = vmatprep.subr.mxu0 0.0
  %1754 = vmatpush1.msra.mxu0 0.0
  %1755 = vmatprep.mubr.f32.mxu0 0.0
  %1756 = vmatmul.mubr.f32.gmra.mrb[0].mxu0 %v1680
  %v1757 = vpop.f32.mrb[0].mxu0
  %v1758 = vadd.f32 %v1677, %v1757
  %v1759 = vpop.f32.mrb[0].mxu0
  %1760 = vmatprep.mubr.f32.mxu0 0.0
  %1761 = vmatmul.mubr.f32.gmra.mrb[0].mxu0 %v1683
  %v1762 = vpop.f32.mrb[0].mxu0
  %v1763 = vadd.f32 %v1677, %v1762
  %v1764 = vpop.f32.mrb[0].mxu0
  %1765 = vmatprep.mubr.f32.mxu0 0.0
  %1766 = vmatmul.mubr.f32.gmra.mrb[0].mxu0 %v1686
  %v1767 = vpop.f32.mrb[0].mxu0
  %v1768 = vadd.f32 %v1677, %v1767
  %v1769 = vpop.f32.mrb[0].mxu0
  %1770 = vmatprep.mubr.f32.mxu0 0.0
  %1771 = vmatmul.mubr.f32.gmra.mrb[0].mxu0 %v1689
  %v1772 = vpop.f32.mrb[0].mxu0
  %v1773 = vadd.f32 %v1677, %v1772
  %v1774 = vpop.f32.mrb[0].mxu0
  %1775 = vdwg.mxu0
  %v1776 = vmul.f32 %v1758, %v1758
  %v1777 = vmul.f32 %v1763, %v1763
  %v1778 = vmul.f32 %v1768, %v1768
  %v1779 = vmul.f32 %v1773, %v1773
  %v1780 = vsel %vm258, %v1776, 0.0
  %1781 = vadd.xlane.f32.xlu0 %v1780
  %v1782 = vpop.xlane.xlu0 %1781
  %v1783 = vsel %vm258, %v1777, 0.0
  %1784 = vadd.xlane.f32.xlu0 %v1783
  %v1785 = vpop.xlane.xlu0 %1784
  %v1786 = vsel %vm258, %v1778, 0.0
  %1787 = vadd.xlane.f32.xlu0 %v1786
  %v1788 = vpop.xlane.xlu0 %1787
  %v1789 = vsel %vm258, %v1779, 0.0
  %1790 = vadd.xlane.f32.xlu0 %v1789
  %v1791 = vpop.xlane.xlu0 %1790
  %v1792 = vrsqrt.pop %v1782
  %v1793 = vrsqrt.pop %v1785
  %v1794 = vrsqrt.pop %v1788
  %v1795 = vrsqrt.pop %v1791
  %v1796 = vmin.f32 %v1792, 1e+12
  %v1797 = vmin.f32 %v1793, 1e+12
  %v1798 = vmin.f32 %v1794, 1e+12
  %v1799 = vmin.f32 %v1795, 1e+12
  %v1800 = vmul.f32 %v1758, %v1796
  %v1801 = vmul.f32 %v1763, %v1797
  %v1802 = vmul.f32 %v1768, %v1798
  %v1803 = vmul.f32 %v1773, %v1799
  %v1804 = vsel %vm258, %v1031, -inf
  %1805 = vmax.xlane.f32.xlu0 %v1804
  %v1806 = vpop.xlane.xlu0 %1805
  %v1807 = vsel %vm258, %v1032, -inf
  %1808 = vmax.xlane.f32.xlu0 %v1807
  %v1809 = vpop.xlane.xlu0 %1808
  %v1810 = vsel %vm258, %v1033, -inf
  %1811 = vmax.xlane.f32.xlu0 %v1810
  %v1812 = vpop.xlane.xlu0 %1811
  %v1813 = vsel %vm258, %v1034, -inf
  %1814 = vmax.xlane.f32.xlu0 %v1813
  %v1815 = vpop.xlane.xlu0 %1814
  %v1816 = vsub.f32 %v1031, %v1806
  %v1817 = vsub.f32 %v1032, %v1809
  %v1818 = vsub.f32 %v1033, %v1812
  %v1819 = vsub.f32 %v1034, %v1815
  %v1820 = vmul.f32 %v1816, 1.442695
  %v1821 = vpow.pop %v1820
  %v1822 = vmul.f32 %v1817, 1.442695
  %v1823 = vpow.pop %v1822
  %v1824 = vmul.f32 %v1818, 1.442695
  %v1825 = vpow.pop %v1824
  %v1826 = vmul.f32 %v1819, 1.442695
  %v1827 = vpow.pop %v1826
  %v1828 = vsel %vm258, %v1821, 0.0
  %1829 = vadd.xlane.f32.xlu0 %v1828
  %v1830 = vpop.xlane.xlu0 %1829
  %v1831 = vsel %vm258, %v1823, 0.0
  %1832 = vadd.xlane.f32.xlu0 %v1831
  %v1833 = vpop.xlane.xlu0 %1832
  %v1834 = vsel %vm258, %v1825, 0.0
  %1835 = vadd.xlane.f32.xlu0 %v1834
  %v1836 = vpop.xlane.xlu0 %1835
  %v1837 = vsel %vm258, %v1827, 0.0
  %1838 = vadd.xlane.f32.xlu0 %v1837
  %v1839 = vpop.xlane.xlu0 %1838
  %v1840 = vrcp.pop %v1830
  %v1841 = vmul.f32 %v1821, %v1840
  %v1842 = vrcp.pop %v1833
  %v1843 = vmul.f32 %v1823, %v1842
  %v1844 = vrcp.pop %v1836
  %v1845 = vmul.f32 %v1825, %v1844
  %v1846 = vrcp.pop %v1839
  %v1847 = vmul.f32 %v1827, %v1846
  %1848 = vxpose.xlu0.b32.start [1/16] %v1841, 128
  %1849 = vxpose.xlu0.b32.cont [2/16] %v1843, 128
  %1850 = vxpose.xlu0.b32.cont [3/16] 0.0, 128
  %1851 = vxpose.xlu0.b32.cont [4/16] 0.0, 128
  %1852 = vxpose.xlu0.b32.cont [5/16] 0.0, 128
  %1853 = vxpose.xlu0.b32.cont [6/16] 0.0, 128
  %1854 = vxpose.xlu0.b32.cont [7/16] 0.0, 128
  %1855 = vxpose.xlu0.b32.cont [8/16] 0.0, 128
  %1856 = vxpose.xlu0.b32.cont [9/16] 0.0, 128
  %1857 = vxpose.xlu0.b32.cont [10/16] 0.0, 128
  %1858 = vxpose.xlu0.b32.cont [11/16] 0.0, 128
  %1859 = vxpose.xlu0.b32.cont [12/16] 0.0, 128
  %1860 = vxpose.xlu0.b32.cont [13/16] 0.0, 128
  %1861 = vxpose.xlu0.b32.cont [14/16] 0.0, 128
  %1862 = vxpose.xlu0.b32.cont [15/16] 0.0, 128
  %1863 = vxpose.xlu0.b32.end [16/16] 0.0, 128
  %v1864 = vpop.trf.xlu0
  %v1865 = vpop.trf.xlu0
  %v1866 = vpop.trf.xlu0
  %v1867 = vpop.trf.xlu0
  %v1868 = vpop.trf.xlu0
  %v1869 = vpop.trf.xlu0
  %v1870 = vpop.trf.xlu0
  %v1871 = vpop.trf.xlu0
  %v1872 = vpop.trf.xlu0
  %v1873 = vpop.trf.xlu0
  %v1874 = vpop.trf.xlu0
  %v1875 = vpop.trf.xlu0
  %v1876 = vpop.trf.xlu0
  %v1877 = vpop.trf.xlu0
  %v1878 = vpop.trf.xlu0
  %v1879 = vpop.trf.xlu0
  %v1881 = vsel %vm89, %v1864, 0
  %1883 = vmatprep.subr.mxu0 0.0
  %1884 = vmatpush1.msra.mxu0 %v1800
  %1885 = vmatprep.subr.mxu0 0.0
  %1886 = vmatpush1.msra.mxu0 %v1801
  %1887 = vmatprep.subr.mxu0 0.0
  %1888 = vmatpush1.msra.mxu0 0.0
  %1889 = vmatprep.subr.mxu0 0.0
  %1890 = vmatpush1.msra.mxu0 0.0
  %1891 = vmatprep.subr.mxu0 0.0
  %1892 = vmatpush1.msra.mxu0 0.0
  %1893 = vmatprep.subr.mxu0 0.0
  %1894 = vmatpush1.msra.mxu0 0.0
  %1895 = vmatprep.subr.mxu0 0.0
  %1896 = vmatpush1.msra.mxu0 0.0
  %1897 = vmatprep.subr.mxu0 0.0
  %1898 = vmatpush1.msra.mxu0 0.0
  %1899 = vmatprep.subr.mxu0 0.0
  %1900 = vmatpush1.msra.mxu0 0.0
  %1901 = vmatprep.subr.mxu0 0.0
  %1902 = vmatpush1.msra.mxu0 0.0
  %1903 = vmatprep.subr.mxu0 0.0
  %1904 = vmatpush1.msra.mxu0 0.0
  %1905 = vmatprep.subr.mxu0 0.0
  %1906 = vmatpush1.msra.mxu0 0.0
  %1907 = vmatprep.subr.mxu0 0.0
  %1908 = vmatpush1.msra.mxu0 0.0
  %1909 = vmatprep.subr.mxu0 0.0
  %1910 = vmatpush1.msra.mxu0 0.0
  %1911 = vmatprep.subr.mxu0 0.0
  %1912 = vmatpush1.msra.mxu0 0.0
  %1913 = vmatprep.subr.mxu0 0.0
  %1914 = vmatpush1.msra.mxu0 0.0
  %1915 = vmatprep.subr.mxu0 0.0
  %1916 = vmatpush1.msra.mxu0 0.0
  %1917 = vmatprep.subr.mxu0 0.0
  %1918 = vmatpush1.msra.mxu0 0.0
  %1919 = vmatprep.subr.mxu0 0.0
  %1920 = vmatpush1.msra.mxu0 0.0
  %1921 = vmatprep.subr.mxu0 0.0
  %1922 = vmatpush1.msra.mxu0 0.0
  %1923 = vmatprep.subr.mxu0 0.0
  %1924 = vmatpush1.msra.mxu0 0.0
  %1925 = vmatprep.subr.mxu0 0.0
  %1926 = vmatpush1.msra.mxu0 0.0
  %1927 = vmatprep.subr.mxu0 0.0
  %1928 = vmatpush1.msra.mxu0 0.0
  %1929 = vmatprep.subr.mxu0 0.0
  %1930 = vmatpush1.msra.mxu0 0.0
  %1931 = vmatprep.subr.mxu0 0.0
  %1932 = vmatpush1.msra.mxu0 0.0
  %1933 = vmatprep.subr.mxu0 0.0
  %1934 = vmatpush1.msra.mxu0 0.0
  %1935 = vmatprep.subr.mxu0 0.0
  %1936 = vmatpush1.msra.mxu0 0.0
  %1937 = vmatprep.subr.mxu0 0.0
  %1938 = vmatpush1.msra.mxu0 0.0
  %1939 = vmatprep.subr.mxu0 0.0
  %1940 = vmatpush1.msra.mxu0 0.0
  %1941 = vmatprep.subr.mxu0 0.0
  %1942 = vmatpush1.msra.mxu0 0.0
  %1943 = vmatprep.subr.mxu0 0.0
  %1944 = vmatpush1.msra.mxu0 0.0
  %1945 = vmatprep.subr.mxu0 0.0
  %1946 = vmatpush1.msra.mxu0 0.0
  %1947 = vmatprep.mubr.f32.mxu0 0.0
  %1948 = vmatmul.mubr.f32.gmra.mrb[0].mxu0 %v1881
  %v1949 = vpop.f32.mrb[0].mxu0
  %v1950 = vadd.f32 0.0, %v1949
  %v1951 = vpop.f32.mrb[0].mxu0
  %1952 = vdwg.mxu0
  %1953 = vxpose.xlu0.b32.start [1/16] %v1845, 128
  %1954 = vxpose.xlu0.b32.cont [2/16] %v1847, 128
  %1955 = vxpose.xlu0.b32.cont [3/16] 0.0, 128
  %1956 = vxpose.xlu0.b32.cont [4/16] 0.0, 128
  %1957 = vxpose.xlu0.b32.cont [5/16] 0.0, 128
  %1958 = vxpose.xlu0.b32.cont [6/16] 0.0, 128
  %1959 = vxpose.xlu0.b32.cont [7/16] 0.0, 128
  %1960 = vxpose.xlu0.b32.cont [8/16] 0.0, 128
  %1961 = vxpose.xlu0.b32.cont [9/16] 0.0, 128
  %1962 = vxpose.xlu0.b32.cont [10/16] 0.0, 128
  %1963 = vxpose.xlu0.b32.cont [11/16] 0.0, 128
  %1964 = vxpose.xlu0.b32.cont [12/16] 0.0, 128
  %1965 = vxpose.xlu0.b32.cont [13/16] 0.0, 128
  %1966 = vxpose.xlu0.b32.cont [14/16] 0.0, 128
  %1967 = vxpose.xlu0.b32.cont [15/16] 0.0, 128
  %1968 = vxpose.xlu0.b32.end [16/16] 0.0, 128
  %v1969 = vpop.trf.xlu0
  %v1970 = vpop.trf.xlu0
  %v1971 = vpop.trf.xlu0
  %v1972 = vpop.trf.xlu0
  %v1973 = vpop.trf.xlu0
  %v1974 = vpop.trf.xlu0
  %v1975 = vpop.trf.xlu0
  %v1976 = vpop.trf.xlu0
  %v1977 = vpop.trf.xlu0
  %v1978 = vpop.trf.xlu0
  %v1979 = vpop.trf.xlu0
  %v1980 = vpop.trf.xlu0
  %v1981 = vpop.trf.xlu0
  %v1982 = vpop.trf.xlu0
  %v1983 = vpop.trf.xlu0
  %v1984 = vpop.trf.xlu0
  %v1986 = vsel %vm89, %v1969, 0
  %1988 = vmatprep.subr.mxu0 0.0
  %1989 = vmatpush1.msra.mxu0 %v1802
  %1990 = vmatprep.subr.mxu0 0.0
  %1991 = vmatpush1.msra.mxu0 %v1803
  %1992 = vmatprep.subr.mxu0 0.0
  %1993 = vmatpush1.msra.mxu0 0.0
  %1994 = vmatprep.subr.mxu0 0.0
  %1995 = vmatpush1.msra.mxu0 0.0
  %1996 = vmatprep.subr.mxu0 0.0
  %1997 = vmatpush1.msra.mxu0 0.0
  %1998 = vmatprep.subr.mxu0 0.0
  %1999 = vmatpush1.msra.mxu0 0.0
  %2000 = vmatprep.subr.mxu0 0.0
  %2001 = vmatpush1.msra.mxu0 0.0
  %2002 = vmatprep.subr.mxu0 0.0
  %2003 = vmatpush1.msra.mxu0 0.0
  %2004 = vmatprep.subr.mxu0 0.0
  %2005 = vmatpush1.msra.mxu0 0.0
  %2006 = vmatprep.subr.mxu0 0.0
  %2007 = vmatpush1.msra.mxu0 0.0
  %2008 = vmatprep.subr.mxu0 0.0
  %2009 = vmatpush1.msra.mxu0 0.0
  %2010 = vmatprep.subr.mxu0 0.0
  %2011 = vmatpush1.msra.mxu0 0.0
  %2012 = vmatprep.subr.mxu0 0.0
  %2013 = vmatpush1.msra.mxu0 0.0
  %2014 = vmatprep.subr.mxu0 0.0
  %2015 = vmatpush1.msra.mxu0 0.0
  %2016 = vmatprep.subr.mxu0 0.0
  %2017 = vmatpush1.msra.mxu0 0.0
  %2018 = vmatprep.subr.mxu0 0.0
  %2019 = vmatpush1.msra.mxu0 0.0
  %2020 = vmatprep.subr.mxu0 0.0
  %2021 = vmatpush1.msra.mxu0 0.0
  %2022 = vmatprep.subr.mxu0 0.0
  %2023 = vmatpush1.msra.mxu0 0.0
  %2024 = vmatprep.subr.mxu0 0.0
  %2025 = vmatpush1.msra.mxu0 0.0
  %2026 = vmatprep.subr.mxu0 0.0
  %2027 = vmatpush1.msra.mxu0 0.0
  %2028 = vmatprep.subr.mxu0 0.0
  %2029 = vmatpush1.msra.mxu0 0.0
  %2030 = vmatprep.subr.mxu0 0.0
  %2031 = vmatpush1.msra.mxu0 0.0
  %2032 = vmatprep.subr.mxu0 0.0
  %2033 = vmatpush1.msra.mxu0 0.0
  %2034 = vmatprep.subr.mxu0 0.0
  %2035 = vmatpush1.msra.mxu0 0.0
  %2036 = vmatprep.subr.mxu0 0.0
  %2037 = vmatpush1.msra.mxu0 0.0
  %2038 = vmatprep.subr.mxu0 0.0
  %2039 = vmatpush1.msra.mxu0 0.0
  %2040 = vmatprep.subr.mxu0 0.0
  %2041 = vmatpush1.msra.mxu0 0.0
  %2042 = vmatprep.subr.mxu0 0.0
  %2043 = vmatpush1.msra.mxu0 0.0
  %2044 = vmatprep.subr.mxu0 0.0
  %2045 = vmatpush1.msra.mxu0 0.0
  %2046 = vmatprep.subr.mxu0 0.0
  %2047 = vmatpush1.msra.mxu0 0.0
  %2048 = vmatprep.subr.mxu0 0.0
  %2049 = vmatpush1.msra.mxu0 0.0
  %2050 = vmatprep.subr.mxu0 0.0
  %2051 = vmatpush1.msra.mxu0 0.0
  %2052 = vmatprep.mubr.f32.mxu0 0.0
  %2053 = vmatmul.mubr.f32.gmra.mrb[0].mxu0 %v1986
  %v2054 = vpop.f32.mrb[0].mxu0
  %v2055 = vadd.f32 0.0, %v2054
  %v2056 = vpop.f32.mrb[0].mxu0
  %2057 = vdwg.mxu0
  %2058 = vst.msk [vmem:[%s14] sm:$0xff] %vm258, %v1950
  %2059 = vst.msk [vmem:[%s14 + $0x8] sm:$0xff] %vm258, %v2055
  %v2061 = vsel %vm89, %v54, 0
  %v2064 = vsel %vm89, %v55, 0
  %2066 = vmatprep.subr.mxu0 0.0
  %2067 = vmatpush1.msra.mxu0 %v1841
  %2068 = vmatprep.subr.mxu0 0.0
  %2069 = vmatpush1.msra.mxu0 %v1843
  %2070 = vmatprep.subr.mxu0 0.0
  %2071 = vmatpush1.msra.mxu0 0.0
  %2072 = vmatprep.subr.mxu0 0.0
  %2073 = vmatpush1.msra.mxu0 0.0
  %2074 = vmatprep.subr.mxu0 0.0
  %2075 = vmatpush1.msra.mxu0 0.0
  %2076 = vmatprep.subr.mxu0 0.0
  %2077 = vmatpush1.msra.mxu0 0.0
  %2078 = vmatprep.subr.mxu0 0.0
  %2079 = vmatpush1.msra.mxu0 0.0
  %2080 = vmatprep.subr.mxu0 0.0
  %2081 = vmatpush1.msra.mxu0 0.0
  %2082 = vmatprep.subr.mxu0 0.0
  %2083 = vmatpush1.msra.mxu0 0.0
  %2084 = vmatprep.subr.mxu0 0.0
  %2085 = vmatpush1.msra.mxu0 0.0
  %2086 = vmatprep.subr.mxu0 0.0
  %2087 = vmatpush1.msra.mxu0 0.0
  %2088 = vmatprep.subr.mxu0 0.0
  %2089 = vmatpush1.msra.mxu0 0.0
  %2090 = vmatprep.subr.mxu0 0.0
  %2091 = vmatpush1.msra.mxu0 0.0
  %2092 = vmatprep.subr.mxu0 0.0
  %2093 = vmatpush1.msra.mxu0 0.0
  %2094 = vmatprep.subr.mxu0 0.0
  %2095 = vmatpush1.msra.mxu0 0.0
  %2096 = vmatprep.subr.mxu0 0.0
  %2097 = vmatpush1.msra.mxu0 0.0
  %2098 = vmatprep.subr.mxu0 0.0
  %2099 = vmatpush1.msra.mxu0 0.0
  %2100 = vmatprep.subr.mxu0 0.0
  %2101 = vmatpush1.msra.mxu0 0.0
  %2102 = vmatprep.subr.mxu0 0.0
  %2103 = vmatpush1.msra.mxu0 0.0
  %2104 = vmatprep.subr.mxu0 0.0
  %2105 = vmatpush1.msra.mxu0 0.0
  %2106 = vmatprep.subr.mxu0 0.0
  %2107 = vmatpush1.msra.mxu0 0.0
  %2108 = vmatprep.subr.mxu0 0.0
  %2109 = vmatpush1.msra.mxu0 0.0
  %2110 = vmatprep.subr.mxu0 0.0
  %2111 = vmatpush1.msra.mxu0 0.0
  %2112 = vmatprep.subr.mxu0 0.0
  %2113 = vmatpush1.msra.mxu0 0.0
  %2114 = vmatprep.subr.mxu0 0.0
  %2115 = vmatpush1.msra.mxu0 0.0
  %2116 = vmatprep.subr.mxu0 0.0
  %2117 = vmatpush1.msra.mxu0 0.0
  %2118 = vmatprep.subr.mxu0 0.0
  %2119 = vmatpush1.msra.mxu0 0.0
  %2120 = vmatprep.subr.mxu0 0.0
  %2121 = vmatpush1.msra.mxu0 0.0
  %2122 = vmatprep.subr.mxu0 0.0
  %2123 = vmatpush1.msra.mxu0 0.0
  %2124 = vmatprep.subr.mxu0 0.0
  %2125 = vmatpush1.msra.mxu0 0.0
  %2126 = vmatprep.subr.mxu0 0.0
  %2127 = vmatpush1.msra.mxu0 0.0
  %2128 = vmatprep.subr.mxu0 0.0
  %2129 = vmatpush1.msra.mxu0 0.0
  %2130 = vmatprep.mubr.f32.mxu0 0.0
  %2131 = vmatmul.mubr.f32.gmra.mrb[0].mxu0 %v2061
  %v2132 = vpop.f32.mrb[0].mxu0
  %v2133 = vadd.f32 0.0, %v2132
  %v2134 = vpop.f32.mrb[0].mxu0
  %2135 = vmatprep.mubr.f32.mxu0 0.0
  %2136 = vmatmul.mubr.f32.gmra.mrb[0].mxu0 %v2064
  %v2137 = vpop.f32.mrb[0].mxu0
  %v2138 = vadd.f32 0.0, %v2137
  %v2139 = vpop.f32.mrb[0].mxu0
  %2140 = vdwg.mxu0
  %v2142 = vsel %vm89, %v56, 0
  %v2145 = vsel %vm89, %v57, 0
  %2147 = vmatprep.subr.mxu0 0.0
  %2148 = vmatpush1.msra.mxu0 %v1845
  %2149 = vmatprep.subr.mxu0 0.0
  %2150 = vmatpush1.msra.mxu0 %v1847
  %2151 = vmatprep.subr.mxu0 0.0
  %2152 = vmatpush1.msra.mxu0 0.0
  %2153 = vmatprep.subr.mxu0 0.0
  %2154 = vmatpush1.msra.mxu0 0.0
  %2155 = vmatprep.subr.mxu0 0.0
  %2156 = vmatpush1.msra.mxu0 0.0
  %2157 = vmatprep.subr.mxu0 0.0
  %2158 = vmatpush1.msra.mxu0 0.0
  %2159 = vmatprep.subr.mxu0 0.0
  %2160 = vmatpush1.msra.mxu0 0.0
  %2161 = vmatprep.subr.mxu0 0.0
  %2162 = vmatpush1.msra.mxu0 0.0
  %2163 = vmatprep.subr.mxu0 0.0
  %2164 = vmatpush1.msra.mxu0 0.0
  %2165 = vmatprep.subr.mxu0 0.0
  %2166 = vmatpush1.msra.mxu0 0.0
  %2167 = vmatprep.subr.mxu0 0.0
  %2168 = vmatpush1.msra.mxu0 0.0
  %2169 = vmatprep.subr.mxu0 0.0
  %2170 = vmatpush1.msra.mxu0 0.0
  %2171 = vmatprep.subr.mxu0 0.0
  %2172 = vmatpush1.msra.mxu0 0.0
  %2173 = vmatprep.subr.mxu0 0.0
  %2174 = vmatpush1.msra.mxu0 0.0
  %2175 = vmatprep.subr.mxu0 0.0
  %2176 = vmatpush1.msra.mxu0 0.0
  %2177 = vmatprep.subr.mxu0 0.0
  %2178 = vmatpush1.msra.mxu0 0.0
  %2179 = vmatprep.subr.mxu0 0.0
  %2180 = vmatpush1.msra.mxu0 0.0
  %2181 = vmatprep.subr.mxu0 0.0
  %2182 = vmatpush1.msra.mxu0 0.0
  %2183 = vmatprep.subr.mxu0 0.0
  %2184 = vmatpush1.msra.mxu0 0.0
  %2185 = vmatprep.subr.mxu0 0.0
  %2186 = vmatpush1.msra.mxu0 0.0
  %2187 = vmatprep.subr.mxu0 0.0
  %2188 = vmatpush1.msra.mxu0 0.0
  %2189 = vmatprep.subr.mxu0 0.0
  %2190 = vmatpush1.msra.mxu0 0.0
  %2191 = vmatprep.subr.mxu0 0.0
  %2192 = vmatpush1.msra.mxu0 0.0
  %2193 = vmatprep.subr.mxu0 0.0
  %2194 = vmatpush1.msra.mxu0 0.0
  %2195 = vmatprep.subr.mxu0 0.0
  %2196 = vmatpush1.msra.mxu0 0.0
  %2197 = vmatprep.subr.mxu0 0.0
  %2198 = vmatpush1.msra.mxu0 0.0
  %2199 = vmatprep.subr.mxu0 0.0
  %2200 = vmatpush1.msra.mxu0 0.0
  %2201 = vmatprep.subr.mxu0 0.0
  %2202 = vmatpush1.msra.mxu0 0.0
  %2203 = vmatprep.subr.mxu0 0.0
  %2204 = vmatpush1.msra.mxu0 0.0
  %2205 = vmatprep.subr.mxu0 0.0
  %2206 = vmatpush1.msra.mxu0 0.0
  %2207 = vmatprep.subr.mxu0 0.0
  %2208 = vmatpush1.msra.mxu0 0.0
  %2209 = vmatprep.subr.mxu0 0.0
  %2210 = vmatpush1.msra.mxu0 0.0
  %2211 = vmatprep.mubr.f32.mxu0 0.0
  %2212 = vmatmul.mubr.f32.gmra.mrb[0].mxu0 %v2142
  %v2213 = vpop.f32.mrb[0].mxu0
  %v2214 = vadd.f32 0.0, %v2213
  %v2215 = vpop.f32.mrb[0].mxu0
  %2216 = vmatprep.mubr.f32.mxu0 0.0
  %2217 = vmatmul.mubr.f32.gmra.mrb[0].mxu0 %v2145
  %v2218 = vpop.f32.mrb[0].mxu0
  %v2219 = vadd.f32 0.0, %v2218
  %v2220 = vpop.f32.mrb[0].mxu0
  %2221 = vdwg.mxu0
  %2222 = vmatprep.subr.mxu0 0.0
  %2223 = vmatpush1.msra.mxu0 %v2133
  %2224 = vmatprep.subr.mxu0 0.0
  %2225 = vmatpush1.msra.mxu0 %v2138
  %2226 = vmatprep.subr.mxu0 0.0
  %2227 = vmatpush1.msra.mxu0 0.0
  %2228 = vmatprep.subr.mxu0 0.0
  %2229 = vmatpush1.msra.mxu0 0.0
  %2230 = vmatprep.subr.mxu0 0.0
  %2231 = vmatpush1.msra.mxu0 0.0
  %2232 = vmatprep.subr.mxu0 0.0
  %2233 = vmatpush1.msra.mxu0 0.0
  %2234 = vmatprep.subr.mxu0 0.0
  %2235 = vmatpush1.msra.mxu0 0.0
  %2236 = vmatprep.subr.mxu0 0.0
  %2237 = vmatpush1.msra.mxu0 0.0
  %2238 = vmatprep.subr.mxu0 0.0
  %2239 = vmatpush1.msra.mxu0 0.0
  %2240 = vmatprep.subr.mxu0 0.0
  %2241 = vmatpush1.msra.mxu0 0.0
  %2242 = vmatprep.subr.mxu0 0.0
  %2243 = vmatpush1.msra.mxu0 0.0
  %2244 = vmatprep.subr.mxu0 0.0
  %2245 = vmatpush1.msra.mxu0 0.0
  %2246 = vmatprep.subr.mxu0 0.0
  %2247 = vmatpush1.msra.mxu0 0.0
  %2248 = vmatprep.subr.mxu0 0.0
  %2249 = vmatpush1.msra.mxu0 0.0
  %2250 = vmatprep.subr.mxu0 0.0
  %2251 = vmatpush1.msra.mxu0 0.0
  %2252 = vmatprep.subr.mxu0 0.0
  %2253 = vmatpush1.msra.mxu0 0.0
  %2254 = vmatprep.subr.mxu0 0.0
  %2255 = vmatpush1.msra.mxu0 0.0
  %2256 = vmatprep.subr.mxu0 0.0
  %2257 = vmatpush1.msra.mxu0 0.0
  %2258 = vmatprep.subr.mxu0 0.0
  %2259 = vmatpush1.msra.mxu0 0.0
  %2260 = vmatprep.subr.mxu0 0.0
  %2261 = vmatpush1.msra.mxu0 0.0
  %2262 = vmatprep.subr.mxu0 0.0
  %2263 = vmatpush1.msra.mxu0 0.0
  %2264 = vmatprep.subr.mxu0 0.0
  %2265 = vmatpush1.msra.mxu0 0.0
  %2266 = vmatprep.subr.mxu0 0.0
  %2267 = vmatpush1.msra.mxu0 0.0
  %2268 = vmatprep.subr.mxu0 0.0
  %2269 = vmatpush1.msra.mxu0 0.0
  %2270 = vmatprep.subr.mxu0 0.0
  %2271 = vmatpush1.msra.mxu0 0.0
  %2272 = vmatprep.subr.mxu0 0.0
  %2273 = vmatpush1.msra.mxu0 0.0
  %2274 = vmatprep.subr.mxu0 0.0
  %2275 = vmatpush1.msra.mxu0 0.0
  %2276 = vmatprep.subr.mxu0 0.0
  %2277 = vmatpush1.msra.mxu0 0.0
  %2278 = vmatprep.subr.mxu0 0.0
  %2279 = vmatpush1.msra.mxu0 0.0
  %2280 = vmatprep.subr.mxu0 0.0
  %2281 = vmatpush1.msra.mxu0 0.0
  %2282 = vmatprep.subr.mxu0 0.0
  %2283 = vmatpush1.msra.mxu0 0.0
  %2284 = vmatprep.subr.mxu0 0.0
  %2285 = vmatpush1.msra.mxu0 0.0
  %2286 = vmatprep.mubr.f32.mxu0 0.0
  %2287 = vmatmul.mubr.f32.gmra.mrb[0].mxu0 %v1881
  %v2288 = vpop.f32.mrb[0].mxu0
  %v2289 = vadd.f32 0.0, %v2288
  %v2290 = vpop.f32.mrb[0].mxu0
  %2291 = vdwg.mxu0
  %2292 = vmatprep.subr.mxu0 0.0
  %2293 = vmatpush1.msra.mxu0 %v2214
  %2294 = vmatprep.subr.mxu0 0.0
  %2295 = vmatpush1.msra.mxu0 %v2219
  %2296 = vmatprep.subr.mxu0 0.0
  %2297 = vmatpush1.msra.mxu0 0.0
  %2298 = vmatprep.subr.mxu0 0.0
  %2299 = vmatpush1.msra.mxu0 0.0
  %2300 = vmatprep.subr.mxu0 0.0
  %2301 = vmatpush1.msra.mxu0 0.0
  %2302 = vmatprep.subr.mxu0 0.0
  %2303 = vmatpush1.msra.mxu0 0.0
  %2304 = vmatprep.subr.mxu0 0.0
  %2305 = vmatpush1.msra.mxu0 0.0
  %2306 = vmatprep.subr.mxu0 0.0
  %2307 = vmatpush1.msra.mxu0 0.0
  %2308 = vmatprep.subr.mxu0 0.0
  %2309 = vmatpush1.msra.mxu0 0.0
  %2310 = vmatprep.subr.mxu0 0.0
  %2311 = vmatpush1.msra.mxu0 0.0
  %2312 = vmatprep.subr.mxu0 0.0
  %2313 = vmatpush1.msra.mxu0 0.0
  %2314 = vmatprep.subr.mxu0 0.0
  %2315 = vmatpush1.msra.mxu0 0.0
  %2316 = vmatprep.subr.mxu0 0.0
  %2317 = vmatpush1.msra.mxu0 0.0
  %2318 = vmatprep.subr.mxu0 0.0
  %2319 = vmatpush1.msra.mxu0 0.0
  %2320 = vmatprep.subr.mxu0 0.0
  %2321 = vmatpush1.msra.mxu0 0.0
  %2322 = vmatprep.subr.mxu0 0.0
  %2323 = vmatpush1.msra.mxu0 0.0
  %2324 = vmatprep.subr.mxu0 0.0
  %2325 = vmatpush1.msra.mxu0 0.0
  %2326 = vmatprep.subr.mxu0 0.0
  %2327 = vmatpush1.msra.mxu0 0.0
  %2328 = vmatprep.subr.mxu0 0.0
  %2329 = vmatpush1.msra.mxu0 0.0
  %2330 = vmatprep.subr.mxu0 0.0
  %2331 = vmatpush1.msra.mxu0 0.0
  %2332 = vmatprep.subr.mxu0 0.0
  %2333 = vmatpush1.msra.mxu0 0.0
  %2334 = vmatprep.subr.mxu0 0.0
  %2335 = vmatpush1.msra.mxu0 0.0
  %2336 = vmatprep.subr.mxu0 0.0
  %2337 = vmatpush1.msra.mxu0 0.0
  %2338 = vmatprep.subr.mxu0 0.0
  %2339 = vmatpush1.msra.mxu0 0.0
  %2340 = vmatprep.subr.mxu0 0.0
  %2341 = vmatpush1.msra.mxu0 0.0
  %2342 = vmatprep.subr.mxu0 0.0
  %2343 = vmatpush1.msra.mxu0 0.0
  %2344 = vmatprep.subr.mxu0 0.0
  %2345 = vmatpush1.msra.mxu0 0.0
  %2346 = vmatprep.subr.mxu0 0.0
  %2347 = vmatpush1.msra.mxu0 0.0
  %2348 = vmatprep.subr.mxu0 0.0
  %2349 = vmatpush1.msra.mxu0 0.0
  %2350 = vmatprep.subr.mxu0 0.0
  %2351 = vmatpush1.msra.mxu0 0.0
  %2352 = vmatprep.subr.mxu0 0.0
  %2353 = vmatpush1.msra.mxu0 0.0
  %2354 = vmatprep.subr.mxu0 0.0
  %2355 = vmatpush1.msra.mxu0 0.0
  %2356 = vmatprep.mubr.f32.mxu0 0.0
  %2357 = vmatmul.mubr.f32.gmra.mrb[0].mxu0 %v1986
  %v2358 = vpop.f32.mrb[0].mxu0
  %v2359 = vadd.f32 0.0, %v2358
  %v2360 = vpop.f32.mrb[0].mxu0
  %2361 = vdwg.mxu0
  %2362 = vst.msk [vmem:[%s15] sm:$0xff] %vm258, %v2289
  %2363 = vst.msk [vmem:[%s15 + $0x8] sm:$0xff] %vm258, %v2359
  %v2365 = vsel %vm258, %v1841, 0
  %v2368 = vsel %vm258, %v1843, 0
  %2370 = vmatprep.subr.mxu0 0.0
  %2371 = vmatpush1.xpose.msra.mxu0 %v2365
  %2372 = vmatprep.subr.mxu0 0.0
  %2373 = vmatpush1.xpose.msra.mxu0 %v2368
  %2374 = vmatprep.subr.mxu0 0.0
  %2375 = vmatpush1.xpose.msra.mxu0 0.0
  %2376 = vmatprep.subr.mxu0 0.0
  %2377 = vmatpush1.xpose.msra.mxu0 0.0
  %2378 = vmatprep.subr.mxu0 0.0
  %2379 = vmatpush1.xpose.msra.mxu0 0.0
  %2380 = vmatprep.subr.mxu0 0.0
  %2381 = vmatpush1.xpose.msra.mxu0 0.0
  %2382 = vmatprep.subr.mxu0 0.0
  %2383 = vmatpush1.xpose.msra.mxu0 0.0
  %2384 = vmatprep.subr.mxu0 0.0
  %2385 = vmatpush1.xpose.msra.mxu0 0.0
  %2386 = vmatprep.subr.mxu0 0.0
  %2387 = vmatpush1.xpose.msra.mxu0 0.0
  %2388 = vmatprep.subr.mxu0 0.0
  %2389 = vmatpush1.xpose.msra.mxu0 0.0
  %2390 = vmatprep.subr.mxu0 0.0
  %2391 = vmatpush1.xpose.msra.mxu0 0.0
  %2392 = vmatprep.subr.mxu0 0.0
  %2393 = vmatpush1.xpose.msra.mxu0 0.0
  %2394 = vmatprep.subr.mxu0 0.0
  %2395 = vmatpush1.xpose.msra.mxu0 0.0
  %2396 = vmatprep.subr.mxu0 0.0
  %2397 = vmatpush1.xpose.msra.mxu0 0.0
  %2398 = vmatprep.subr.mxu0 0.0
  %2399 = vmatpush1.xpose.msra.mxu0 0.0
  %2400 = vmatprep.subr.mxu0 0.0
  %2401 = vmatpush1.xpose.msra.mxu0 0.0
  %2402 = vmatprep.subr.mxu0 0.0
  %2403 = vmatpush1.xpose.msra.mxu0 0.0
  %2404 = vmatprep.subr.mxu0 0.0
  %2405 = vmatpush1.xpose.msra.mxu0 0.0
  %2406 = vmatprep.subr.mxu0 0.0
  %2407 = vmatpush1.xpose.msra.mxu0 0.0
  %2408 = vmatprep.subr.mxu0 0.0
  %2409 = vmatpush1.xpose.msra.mxu0 0.0
  %2410 = vmatprep.subr.mxu0 0.0
  %2411 = vmatpush1.xpose.msra.mxu0 0.0
  %2412 = vmatprep.subr.mxu0 0.0
  %2413 = vmatpush1.xpose.msra.mxu0 0.0
  %2414 = vmatprep.subr.mxu0 0.0
  %2415 = vmatpush1.xpose.msra.mxu0 0.0
  %2416 = vmatprep.subr.mxu0 0.0
  %2417 = vmatpush1.xpose.msra.mxu0 0.0
  %2418 = vmatprep.subr.mxu0 0.0
  %2419 = vmatpush1.xpose.msra.mxu0 0.0
  %2420 = vmatprep.subr.mxu0 0.0
  %2421 = vmatpush1.xpose.msra.mxu0 0.0
  %2422 = vmatprep.subr.mxu0 0.0
  %2423 = vmatpush1.xpose.msra.mxu0 0.0
  %2424 = vmatprep.subr.mxu0 0.0
  %2425 = vmatpush1.xpose.msra.mxu0 0.0
  %2426 = vmatprep.subr.mxu0 0.0
  %2427 = vmatpush1.xpose.msra.mxu0 0.0
  %2428 = vmatprep.subr.mxu0 0.0
  %2429 = vmatpush1.xpose.msra.mxu0 0.0
  %2430 = vmatprep.subr.mxu0 0.0
  %2431 = vmatpush1.xpose.msra.mxu0 0.0
  %2432 = vmatprep.subr.mxu0 0.0
  %2433 = vmatpush1.xpose.msra.mxu0 0.0
  %2434 = vmatprep.mubr.f32.mxu0 0.0
  %2435 = vmatmul.mubr.f32.gmra.mrb[0].mxu0 %v2365
  %v2436 = vpop.f32.mrb[0].mxu0
  %v2437 = vadd.f32 0.0, %v2436
  %v2438 = vpop.f32.mrb[0].mxu0
  %2439 = vmatprep.mubr.f32.mxu0 0.0
  %2440 = vmatmul.mubr.f32.gmra.mrb[0].mxu0 %v2368
  %v2441 = vpop.f32.mrb[0].mxu0
  %v2442 = vadd.f32 0.0, %v2441
  %v2443 = vpop.f32.mrb[0].mxu0
  %2444 = vdwg.mxu0
  %v2446 = vsel %vm258, %v1845, 0
  %v2449 = vsel %vm258, %v1847, 0
  %2451 = vmatprep.subr.mxu0 0.0
  %2452 = vmatpush1.xpose.msra.mxu0 %v2446
  %2453 = vmatprep.subr.mxu0 0.0
  %2454 = vmatpush1.xpose.msra.mxu0 %v2449
  %2455 = vmatprep.subr.mxu0 0.0
  %2456 = vmatpush1.xpose.msra.mxu0 0.0
  %2457 = vmatprep.subr.mxu0 0.0
  %2458 = vmatpush1.xpose.msra.mxu0 0.0
  %2459 = vmatprep.subr.mxu0 0.0
  %2460 = vmatpush1.xpose.msra.mxu0 0.0
  %2461 = vmatprep.subr.mxu0 0.0
  %2462 = vmatpush1.xpose.msra.mxu0 0.0
  %2463 = vmatprep.subr.mxu0 0.0
  %2464 = vmatpush1.xpose.msra.mxu0 0.0
  %2465 = vmatprep.subr.mxu0 0.0
  %2466 = vmatpush1.xpose.msra.mxu0 0.0
  %2467 = vmatprep.subr.mxu0 0.0
  %2468 = vmatpush1.xpose.msra.mxu0 0.0
  %2469 = vmatprep.subr.mxu0 0.0
  %2470 = vmatpush1.xpose.msra.mxu0 0.0
  %2471 = vmatprep.subr.mxu0 0.0
  %2472 = vmatpush1.xpose.msra.mxu0 0.0
  %2473 = vmatprep.subr.mxu0 0.0
  %2474 = vmatpush1.xpose.msra.mxu0 0.0
  %2475 = vmatprep.subr.mxu0 0.0
  %2476 = vmatpush1.xpose.msra.mxu0 0.0
  %2477 = vmatprep.subr.mxu0 0.0
  %2478 = vmatpush1.xpose.msra.mxu0 0.0
  %2479 = vmatprep.subr.mxu0 0.0
  %2480 = vmatpush1.xpose.msra.mxu0 0.0
  %2481 = vmatprep.subr.mxu0 0.0
  %2482 = vmatpush1.xpose.msra.mxu0 0.0
  %2483 = vmatprep.subr.mxu0 0.0
  %2484 = vmatpush1.xpose.msra.mxu0 0.0
  %2485 = vmatprep.subr.mxu0 0.0
  %2486 = vmatpush1.xpose.msra.mxu0 0.0
  %2487 = vmatprep.subr.mxu0 0.0
  %2488 = vmatpush1.xpose.msra.mxu0 0.0
  %2489 = vmatprep.subr.mxu0 0.0
  %2490 = vmatpush1.xpose.msra.mxu0 0.0
  %2491 = vmatprep.subr.mxu0 0.0
  %2492 = vmatpush1.xpose.msra.mxu0 0.0
  %2493 = vmatprep.subr.mxu0 0.0
  %2494 = vmatpush1.xpose.msra.mxu0 0.0
  %2495 = vmatprep.subr.mxu0 0.0
  %2496 = vmatpush1.xpose.msra.mxu0 0.0
  %2497 = vmatprep.subr.mxu0 0.0
  %2498 = vmatpush1.xpose.msra.mxu0 0.0
  %2499 = vmatprep.subr.mxu0 0.0
  %2500 = vmatpush1.xpose.msra.mxu0 0.0
  %2501 = vmatprep.subr.mxu0 0.0
  %2502 = vmatpush1.xpose.msra.mxu0 0.0
  %2503 = vmatprep.subr.mxu0 0.0
  %2504 = vmatpush1.xpose.msra.mxu0 0.0
  %2505 = vmatprep.subr.mxu0 0.0
  %2506 = vmatpush1.xpose.msra.mxu0 0.0
  %2507 = vmatprep.subr.mxu0 0.0
  %2508 = vmatpush1.xpose.msra.mxu0 0.0
  %2509 = vmatprep.subr.mxu0 0.0
  %2510 = vmatpush1.xpose.msra.mxu0 0.0
  %2511 = vmatprep.subr.mxu0 0.0
  %2512 = vmatpush1.xpose.msra.mxu0 0.0
  %2513 = vmatprep.subr.mxu0 0.0
  %2514 = vmatpush1.xpose.msra.mxu0 0.0
  %2515 = vmatprep.mubr.f32.mxu0 0.0
  %2516 = vmatmul.mubr.f32.gmra.mrb[0].mxu0 %v2446
  %v2517 = vpop.f32.mrb[0].mxu0
  %v2518 = vadd.f32 0.0, %v2517
  %v2519 = vpop.f32.mrb[0].mxu0
  %2520 = vmatprep.mubr.f32.mxu0 0.0
  %2521 = vmatmul.mubr.f32.gmra.mrb[0].mxu0 %v2449
  %v2522 = vpop.f32.mrb[0].mxu0
  %v2523 = vadd.f32 0.0, %v2522
  %v2524 = vpop.f32.mrb[0].mxu0
  %2525 = vdwg.mxu0
  %v2526 = vsub.f32 %v54, %v2437
  %v2527 = vsub.f32 %v55, %v2442
  %v2528 = vsub.f32 %v56, %v2518
  %v2529 = vsub.f32 %v57, %v2523
  %v2530 = vmul.f32 %v2526, %v2526
  %v2531 = vmul.f32 %v2527, %v2527
  %v2532 = vmul.f32 %v2528, %v2528
  %v2533 = vmul.f32 %v2529, %v2529
  %v2534 = vsel %vm89, %v2530, 0.0
  %2535 = vadd.xlane.f32.xlu0 %v2534
  %v2536 = vpop.xlane.xlu0 %2535
  %v2537 = vsel %vm89, %v2531, 0.0
  %2538 = vadd.xlane.f32.xlu0 %v2537
  %v2539 = vpop.xlane.xlu0 %2538
  %v2540 = vsel %vm89, %v2532, 0.0
  %2541 = vadd.xlane.f32.xlu0 %v2540
  %v2542 = vpop.xlane.xlu0 %2541
  %v2543 = vsel %vm89, %v2533, 0.0
  %2544 = vadd.xlane.f32.xlu0 %v2543
  %v2545 = vpop.xlane.xlu0 %2544
  %v2550 = vlaneseq
  %v2551 = vshrl.u32 %v2550, 7
  %v2552 = vsub.s32 %v62, %v2551
  %v2553 = vrot.slane %v2536, %v2552
  %v2554 = vadd.s32 %v62, 4294967288
  %v2555 = vlaneseq
  %v2556 = vshrl.u32 %v2555, 7
  %v2557 = vsub.s32 %v2554, %v2556
  %v2558 = vrot.slane %v2539, %v2557
  %vm2559 = vcmask 130112
  %v2560 = vsel %vm2559, %v2558, %v2553
  %v2561 = vlaneseq
  %v2562 = vshrl.u32 %v2561, 7
  %v2563 = vsub.s32 %v62, %v2562
  %v2564 = vrot.slane %v2542, %v2563
  %v2565 = vlaneseq
  %v2566 = vshrl.u32 %v2565, 7
  %v2567 = vsub.s32 %v2554, %v2566
  %v2568 = vrot.slane %v2545, %v2567
  %v2569 = vsel %vm2559, %v2568, %v2564
  %vm2570 = vcmask 1041409
  %v2571 = vsel %vm2570, %v2569, %v2560
  %vm2573 = vcmask 123904
  %v2574 = vsel %vm2573, %v2571, 0.0
  %2575 = vadd.xlane.f32.xlu0 %v2574
  %v2576 = vpop.xlane.xlu0 %2575
  %v2577 = vsub.f32 0.0, %v1841
  %v2578 = vsub.f32 0.0, %v1843
  %v2579 = vsub.f32 0.0, %v1845
  %v2580 = vsub.f32 0.0, %v1847
  %v2581 = vadd.f32 %v1841, 1e-15
  %v2582 = vadd.f32 %v1843, 1e-15
  %v2583 = vadd.f32 %v1845, 1e-15
  %v2584 = vadd.f32 %v1847, 1e-15
  %v2585 = vlog2.pop %v2581
  %v2586 = vmul.f32 %v2585, 0.6931472
  %v2587 = vlog2.pop %v2582
  %v2588 = vmul.f32 %v2587, 0.6931472
  %v2589 = vlog2.pop %v2583
  %v2590 = vmul.f32 %v2589, 0.6931472
  %v2591 = vlog2.pop %v2584
  %v2592 = vmul.f32 %v2591, 0.6931472
  %v2593 = vmul.f32 %v2577, %v2586
  %v2594 = vmul.f32 %v2578, %v2588
  %v2595 = vmul.f32 %v2579, %v2590
  %v2596 = vmul.f32 %v2580, %v2592
  %v2597 = vsel %vm258, %v2593, 0.0
  %2598 = vadd.xlane.f32.xlu0 %v2597
  %v2599 = vpop.xlane.xlu0 %2598
  %v2600 = vsel %vm258, %v2594, 0.0
  %2601 = vadd.xlane.f32.xlu0 %v2600
  %v2602 = vpop.xlane.xlu0 %2601
  %v2603 = vsel %vm258, %v2595, 0.0
  %2604 = vadd.xlane.f32.xlu0 %v2603
  %v2605 = vpop.xlane.xlu0 %2604
  %v2606 = vsel %vm258, %v2596, 0.0
  %2607 = vadd.xlane.f32.xlu0 %v2606
  %v2608 = vpop.xlane.xlu0 %2607
  %v2613 = vlaneseq
  %v2614 = vshrl.u32 %v2613, 7
  %v2615 = vsub.s32 %v62, %v2614
  %v2616 = vrot.slane %v2599, %v2615
  %v2617 = vlaneseq
  %v2618 = vshrl.u32 %v2617, 7
  %v2619 = vsub.s32 %v2554, %v2618
  %v2620 = vrot.slane %v2602, %v2619
  %v2621 = vsel %vm2559, %v2620, %v2616
  %v2622 = vlaneseq
  %v2623 = vshrl.u32 %v2622, 7
  %v2624 = vsub.s32 %v62, %v2623
  %v2625 = vrot.slane %v2605, %v2624
  %v2626 = vlaneseq
  %v2627 = vshrl.u32 %v2626, 7
  %v2628 = vsub.s32 %v2554, %v2627
  %v2629 = vrot.slane %v2608, %v2628
  %v2630 = vsel %vm2559, %v2629, %v2625
  %v2631 = vsel %vm2570, %v2630, %v2621
  %v2633 = vsel %vm2573, %v2631, 0.0
  %2634 = vadd.xlane.f32.xlu0 %v2633
  %v2635 = vpop.xlane.xlu0 %2634
  %vm2636 = vcmp.eq.s32.totalorder %v62, 0
  %v2637 = vsel %vm2636, %v2576, %v2635
  %vm2638 = vcmask 9216
  %2639 = vst.msk [vmem:[%s16] sm:$0x3] %vm2638, %v2637
  // Predicated region
  $region58: #{diffpool_forward.2} parent=0 // pred_check
    _
  $region59: #{diffpool_forward.2} parent=0 // pred_check_branch
    %2641 = sbr.rel (0) target = $region61
  $region60: #{diffpool_forward.2} parent=0 // pred_region
    _
  $region61: #{diffpool_forward.2} parent=0 // pred_fallthru
    _
  // Predicated region
  $region62: #{diffpool_forward.2} parent=0 // pred_check
    _
  $region63: #{diffpool_forward.2} parent=0 // pred_check_branch
    %2643 = sbr.rel (0) target = $region65
  $region64: #{diffpool_forward.2} parent=0 // pred_region
    _
  $region65: #{diffpool_forward.2} parent=0 // pred_fallthru
    _
  // Predicated region
  $region66: #{diffpool_forward.2} parent=0 // pred_check
    _
  $region67: #{diffpool_forward.2} parent=0 // pred_check_branch
    %2645 = sbr.rel (0) target = $region69
  $region68: #{diffpool_forward.2} parent=0 // pred_region
    _
  $region69: #{diffpool_forward.2} parent=0 // pred_fallthru
    _
  // Predicated region
  $region70: #{diffpool_forward.2} parent=0 // pred_check
    _
  $region71: #{diffpool_forward.2} parent=0 // pred_check_branch
    %2647 = sbr.rel (0) target = $region73
  $region72: #{diffpool_forward.2} parent=0 // pred_region
    _
  $region73: #{diffpool_forward.2} parent=0 // pred_fallthru
    _
  // Predicated region
  $region74: #{diffpool_forward.2} parent=0 // pred_check
    _
  $region75: #{diffpool_forward.2} parent=0 // pred_check_branch
    %2649 = sbr.rel (0) target = $region77
  $region76: #{diffpool_forward.2} parent=0 // pred_region
    _
  $region77: #{diffpool_forward.2} parent=0 // pred_fallthru
    _
  // Predicated region
  $region78: #{diffpool_forward.2} parent=0 // pred_check
    _
  $region79: #{diffpool_forward.2} parent=0 // pred_check_branch
    %2651 = sbr.rel (0) target = $region81
  $region80: #{diffpool_forward.2} parent=0 // pred_region
    _
  $region81: #{diffpool_forward.2} parent=0 // pred_fallthru
    _

</llo_original>
